<compile_context>
chip_gen: v7x
topology: tpu7x:2x2x1
jax: 0.10.0
libtpu: 0.0.40
codegen_flags: <defaults>
</compile_context>

<pallas_src>
import functools

import jax
import jax.numpy as jnp
from jax.experimental import pallas as pl
from jax.experimental.pallas import tpu as pltpu

EPS = 1e-5
# Flip to jnp.bfloat16 on v6e/v7x to halve HBM traffic / VMEM of the conv
# operands (MXU still accumulates f32; BN/ReLU/mask math stays f32).  Kept f32
# here so results bit-match the f32 reference within 1e-3.
COMPUTE_DTYPE = jnp.float32


def _round_up(x, m):
    return (x + m - 1) // m * m


# ----------------------------------------------------------------------------
# Fused Pallas kernel: stacked octave convs + cross-freq adds + BN + ReLU
# ----------------------------------------------------------------------------

def _decode_fused_kernel(h_ref, lup_ref, hp_ref, l_ref,
                         wh_ref, wl_ref,
                         gh_ref, bh_ref, gl_ref, bl_ref,
                         mh_ref, ml_ref,
                         oh_ref, ol_ref,
                         xh_slab, xl_slab,
                         *, wph, wpl, count_h, count_l):
    """Whole-batch fused octave conv + BN + ReLU (batch folded into lanes).

    h_ref   : (Ci_h, Sin_h)  bilinear-up'd high input, batch-stacked, pad 2, flat
    lup_ref : (Ci_l, Sin_h)  nearest-x2 of low input,  batch-stacked, pad 2, flat
    hp_ref  : (Ci_h, Sin_l)  avg-pooled high input,    batch-stacked, pad 1, flat
    l_ref   : (Ci_l, Sin_l)  low input,                batch-stacked, pad 1, flat
    wh/wl   : (Cout, 9*(Ci_h+Ci_l)) stacked 3x3 taps (h-branch taps then l-branch)
    g*/b*   : (Cout, 1)      BN affine parameters
    m*_ref  : (1, S_store)   1.0 on valid output positions, 0.0 on junk
    oh_ref  : (Cout_h, S_store_h)  relu(BN(h2h + up2(l2h)))   (lane-dense, 128-mult)
    ol_ref  : (Cout_l, S_store_l)  relu(BN(h2l + l2l))        (lane-dense, 128-mult)
    x*_slab : (9*(Ci_h+Ci_l), S_store_*) VMEM im2col scratch slabs
    """
    ci_h = h_ref.shape[0]
    ci_l = l_ref.shape[0]
    sh = oh_ref.shape[1]
    sl = ol_ref.shape[1]
    base = 9 * ci_h

    # ---- im2col slabs: 18 static lane-shifted views stacked on the sublane axis.
    # High branch: dil-1 taps of h (pad 2) then dil-2 taps of nearest-up2(l)
    # (pad 2) -- the dilation-2 conv of up2(l) equals up2(conv3x3(l)), so the l->h
    # path shares the same high-res span / matmul as h->h.
    k = 0
    for dy in range(3):
        for dx in range(3):
            off_hh = (dy + 1) * wph + (dx + 1)
            off_lh = (2 * dy) * wph + (2 * dx)
            xh_slab[k * ci_h:(k + 1) * ci_h, :] = h_ref[:, off_hh:off_hh + sh]
            xh_slab[base + k * ci_l:base + (k + 1) * ci_l, :] = lup_ref[:, off_lh:off_lh + sh]
            k += 1

    # Low branch: dil-1 taps of avg-pooled h (pad 1) then dil-1 taps of l (pad 1).
    k = 0
    for dy in range(3):
        for dx in range(3):
            off = dy * wpl + dx
            xl_slab[k * ci_h:(k + 1) * ci_h, :] = hp_ref[:, off:off + sl]
            xl_slab[base + k * ci_l:base + (k + 1) * ci_l, :] = l_ref[:, off:off + sl]
            k += 1

    # ---- one MXU matmul per branch (K = 72, f32 accumulate), whole batch at once.
    s_h = jnp.dot(wh_ref[...], xh_slab[...], preferred_element_type=jnp.float32)
    s_l = jnp.dot(wl_ref[...], xl_slab[...], preferred_element_type=jnp.float32)

    # ---- training-mode BatchNorm: two-pass masked batch stats (mean, then
    # centered variance -> no E[x^2]-E[x]^2 cancellation) + affine + ReLU.
    def bn_relu(s, mask, count, gamma, beta, o_ref):
        mean = jnp.sum(s * mask, axis=1, keepdims=True) / count
        d = (s - mean) * mask
        var = jnp.sum(d * d, axis=1, keepdims=True) / count
        scale = gamma * jax.lax.rsqrt(var + EPS)
        bias = beta - mean * scale
        o_ref[...] = jnp.maximum(s * scale + bias, 0.0)   # junk cols masked out in wrapper

    bn_relu(s_h, mh_ref[...], count_h, gh_ref[...], bh_ref[...], oh_ref)
    bn_relu(s_l, ml_ref[...], count_l, gl_ref[...], bl_ref[...], ol_ref)


# ----------------------------------------------------------------------------
# Plain-JAX data prep (gather-free, tiny tensors)
# ----------------------------------------------------------------------------

def _bilinear_x2_matrix(n_in):
    """Static interpolation matrix of nn.UpsamplingBilinear2d(scale_factor=2)
    (align_corners=True): out = M @ in along one spatial axis, M: (2*n_in, n_in)."""
    n_out = 2 * n_in
    if n_in == 1:
        return jnp.ones((n_out, 1), jnp.float32)
    src = jnp.arange(n_out, dtype=jnp.float32) * (n_in - 1) / (n_out - 1)
    i0 = jnp.clip(jnp.floor(src), 0.0, n_in - 2).astype(jnp.int32)
    frac = src - i0.astype(jnp.float32)
    return ((1.0 - frac)[:, None] * jax.nn.one_hot(i0, n_in, dtype=jnp.float32)
            + frac[:, None] * jax.nn.one_hot(i0 + 1, n_in, dtype=jnp.float32))


def upsample_bilinear_x2_nchw(x):
    """Gather-free bilinear x2 (align_corners=True) as two static-weight matmuls."""
    _, _, h, w = x.shape
    ah = _bilinear_x2_matrix(h)
    aw = _bilinear_x2_matrix(w)
    return jnp.einsum("ih,nchw,jw->ncij", ah, x, aw)


def avg_pool_2x2_nchw(x):
    n, c, h, w = x.shape
    return x.reshape(n, c, h // 2, 2, w // 2, 2).mean(axis=(3, 5))


def upsample_nearest_x2_nchw(x):
    return jnp.repeat(jnp.repeat(x, 2, axis=2), 2, axis=3)


def _geometry(n, h, w, pad):
    """Layout constants for the batch-folded padded canvas of one branch."""
    wp = w + 2 * pad                      # padded width (lane stride per row)
    blk = h + pad                         # output-row stride between images
    v_out = (n - 1) * blk + h             # last valid output row + 1
    s_store = _round_up(v_out * wp, 128)  # lane-dense stored span (128-multiple)
    max_off = 2 * pad * wp + 2 * pad      # largest flat tap offset
    rows_in = -(-(s_store + max_off) // wp)
    return wp, blk, v_out, s_store, rows_in


def _stack_pad_flatten(x, pad, rows_in):
    """(N,C,H,W) -> (C, rows_in*Wp): images stacked vertically with `pad` zero
    separator rows (and `pad` zero rows on top / zero tail rows), `pad` zero cols
    each side, then (rows, Wp) flattened to one lane axis (batch folded into lanes)."""
    n, c, h, w = x.shape
    wp = w + 2 * pad
    xp = jnp.pad(x, ((0, 0), (0, 0), (0, pad), (pad, pad)))          # pad rows below each image
    canvas = jnp.transpose(xp, (1, 0, 2, 3)).reshape(c, n * (h + pad), wp)
    extra = rows_in - pad - n * (h + pad)                            # always >= 0
    canvas = jnp.pad(canvas, ((0, 0), (pad, extra), (0, 0)))
    return canvas.reshape(c, rows_in * wp)


def _valid_mask(s_store, wp, w, h, blk, v_out):
    """1.0 on valid output positions of the flattened batch-folded span, else 0.0."""
    p = jnp.arange(s_store, dtype=jnp.int32)
    v, col = p // wp, p % wp
    valid = (col < w) & (v % blk < h) & (v < v_out)
    return valid.astype(jnp.float32)[None, :]


def _stack_weights(w_a, w_b):
    """Two HWIO (3,3,Ci,Co) kernels -> (Co, 9*Ci_a + 9*Ci_b), tap-major /
    channel-minor, matching the im2col slab row order (w_a's operand taps first)."""
    def flat(w):
        return jnp.transpose(w, (3, 0, 1, 2)).reshape(w.shape[3], -1)
    return jnp.concatenate([flat(w_a), flat(w_b)], axis=1).astype(COMPUTE_DTYPE)


# ----------------------------------------------------------------------------
# decode.forward
# ----------------------------------------------------------------------------

def decode_forward(en_h, en_l, de_h, de_l, params):
    """decode.forward; all tensors NCHW (PyTorch convention)."""
    h = jnp.concatenate([en_h, de_h], axis=1).astype(jnp.float32)
    l = jnp.concatenate([en_l, de_l], axis=1).astype(jnp.float32)
    h = upsample_bilinear_x2_nchw(h)     # (N, Ci_h, H2, W2)
    l = upsample_bilinear_x2_nchw(l)     # (N, Ci_l, H,  W), H2 = 2H

    n, ci_h, h_hi, w_hi = h.shape
    _, ci_l, h_lo, w_lo = l.shape
    co_h = params["w_h2h"].shape[-1]
    co_l = params["w_l2l"].shape[-1]

    wph, blk_h, vout_h, s_store_h, rows_h = _geometry(n, h_hi, w_hi, 2)
    wpl, blk_l, vout_l, s_store_l, rows_l = _geometry(n, h_lo, w_lo, 1)

    # Kernel operands: batch-folded, padded, lane-flattened images.
    h_flat = _stack_pad_flatten(h, 2, rows_h).astype(COMPUTE_DTYPE)
    # TODO(synk): at large image sizes, move the nearest-x2 of l into the kernel
    # (duplicate the low-res l2h result) to cut the l->h HBM traffic / FLOPs 4x;
    # at these sizes keeping it as a dilated conv lets it share the K=72 matmul.
    lup_flat = _stack_pad_flatten(upsample_nearest_x2_nchw(l), 2, rows_h).astype(COMPUTE_DTYPE)
    hp_flat = _stack_pad_flatten(avg_pool_2x2_nchw(h), 1, rows_l).astype(COMPUTE_DTYPE)
    l_flat = _stack_pad_flatten(l, 1, rows_l).astype(COMPUTE_DTYPE)

    mask_h = _valid_mask(s_store_h, wph, w_hi, h_hi, blk_h, vout_h)
    mask_l = _valid_mask(s_store_l, wpl, w_lo, h_lo, blk_l, vout_l)

    wh_stack = _stack_weights(params["w_h2h"], params["w_l2h"])   # (co_h, 9*(ci_h+ci_l))
    wl_stack = _stack_weights(params["w_h2l"], params["w_l2l"])   # (co_l, 9*(ci_h+ci_l))
    k_stack = 9 * (ci_h + ci_l)

    kernel = functools.partial(_decode_fused_kernel, wph=wph, wpl=wpl,
                               count_h=float(n * h_hi * w_hi),
                               count_l=float(n * h_lo * w_lo))
    vmem = pl.BlockSpec(memory_space=pltpu.MemorySpace.VMEM)
    # TODO(synk): for real image sizes, tile output rows with a "parallel" grid
    # axis (v7x: 2 TensorCores, 64 MiB VMEM) and a cross-tile two-pass BN; at
    # these shapes a single resident block avoids all per-step pipeline overhead.
    oh_flat, ol_flat = pl.pallas_call(
        kernel,
        out_shape=(jax.ShapeDtypeStruct((co_h, s_store_h), jnp.float32),
                   jax.ShapeDtypeStruct((co_l, s_store_l), jnp.float32)),
        in_specs=[vmem] * 12,
        out_specs=(vmem, vmem),
        scratch_shapes=[pltpu.VMEM((k_stack, s_store_h), COMPUTE_DTYPE),
                        pltpu.VMEM((k_stack, s_store_l), COMPUTE_DTYPE)],
        compiler_params=pltpu.CompilerParams(vmem_limit_bytes=32 * 1024 * 1024),
    )(h_flat, lup_flat, hp_flat, l_flat, wh_stack, wl_stack,
      params["gamma_h"].reshape(-1, 1).astype(jnp.float32),
      params["beta_h"].reshape(-1, 1).astype(jnp.float32),
      params["gamma_l"].reshape(-1, 1).astype(jnp.float32),
      params["beta_l"].reshape(-1, 1).astype(jnp.float32),
      mask_h, mask_l)

    # Un-fold the batch: each image is a contiguous row block; drop junk columns.
    def unfold(flat, blk, hh, wp, ww, co):
        return jnp.stack(
            [flat[:, i * blk * wp: i * blk * wp + hh * wp].reshape(co, hh, wp)[:, :, :ww]
             for i in range(n)], axis=0)

    out_h = unfold(oh_flat, blk_h, h_hi, wph, w_hi, co_h)
    out_l = unfold(ol_flat, blk_l, h_lo, wpl, w_lo, co_l)
    return out_h, out_l


# ----------------------------------------------------------------------------
# Pure-JAX reference (correctness check only)
# ----------------------------------------------------------------------------

def _conv3x3_ref_nchw(x, w_hwio):
    return jax.lax.conv_general_dilated(
        x, w_hwio, window_strides=(1, 1), padding=((1, 1), (1, 1)),
        dimension_numbers=("NCHW", "HWIO", "NCHW"))


def _bn_relu_ref(s, gamma, beta):
    mean = s.mean(axis=(0, 2, 3), keepdims=True)
    var = s.var(axis=(0, 2, 3), keepdims=True)
    y = (s - mean) * jax.lax.rsqrt(var + EPS)
    y = y * gamma.reshape(1, -1, 1, 1) + beta.reshape(1, -1, 1, 1)
    return jnp.maximum(y, 0.0)


def decode_forward_ref(en_h, en_l, de_h, de_l, params):
    h = jnp.concatenate([en_h, de_h], axis=1).astype(jnp.float32)
    l = jnp.concatenate([en_l, de_l], axis=1).astype(jnp.float32)
    h = upsample_bilinear_x2_nchw(h)
    l = upsample_bilinear_x2_nchw(l)
    h2h = _conv3x3_ref_nchw(h, params["w_h2h"])
    h2l = _conv3x3_ref_nchw(avg_pool_2x2_nchw(h), params["w_h2l"])
    l2h = upsample_nearest_x2_nchw(_conv3x3_ref_nchw(l, params["w_l2h"]))
    l2l = _conv3x3_ref_nchw(l, params["w_l2l"])
    out_h = _bn_relu_ref(h2h + l2h, params["gamma_h"], params["beta_h"])
    out_l = _bn_relu_ref(h2l + l2l, params["gamma_l"], params["beta_l"])
    return out_h, out_l


# ----------------------------------------------------------------------------

if __name__ == "__main__":
    key = jax.random.PRNGKey(0)
    ks = jax.random.split(key, 12)

    # High-freq features at 16x16, low-freq at 8x8 (NCHW).
    N, Ch, Cl, H, W = 2, 2, 2, 16, 16
    in_h, in_l = 2 * Ch, 2 * Cl                 # channels after torch.cat -> 4, 4
    out_channels = 8
    out_ch_h = out_ch_l = out_channels // 2     # alpha = 0.5

    en_h = jax.random.normal(ks[0], (N, Ch, H, W), jnp.float32)
    de_h = jax.random.normal(ks[1], (N, Ch, H, W), jnp.float32)
    en_l = jax.random.normal(ks[2], (N, Cl, H // 2, W // 2), jnp.float32)
    de_l = jax.random.normal(ks[3], (N, Cl, H // 2, W // 2), jnp.float32)

    # Deterministic synthetic weights, built directly in HWIO layout.
    params = {
        "w_h2h": 0.1 * jax.random.normal(ks[4], (3, 3, in_h, out_ch_h), jnp.float32),
        "w_h2l": 0.1 * jax.random.normal(ks[5], (3, 3, in_h, out_ch_l), jnp.float32),
        "w_l2h": 0.1 * jax.random.normal(ks[6], (3, 3, in_l, out_ch_h), jnp.float32),
        "w_l2l": 0.1 * jax.random.normal(ks[7], (3, 3, in_l, out_ch_l), jnp.float32),
        "gamma_h": 1.0 + 0.1 * jax.random.normal(ks[8], (out_ch_h,), jnp.float32),
        "beta_h": 0.1 * jax.random.normal(ks[9], (out_ch_h,), jnp.float32),
        "gamma_l": 1.0 + 0.1 * jax.random.normal(ks[10], (out_ch_l,), jnp.float32),
        "beta_l": 0.1 * jax.random.normal(ks[11], (out_ch_l,), jnp.float32),
    }

    out_h, out_l = jax.jit(decode_forward)(en_h, en_l, de_h, de_l, params)
    jax.block_until_ready((out_h, out_l))

    ref_h, ref_l = decode_forward_ref(en_h, en_l, de_h, de_l, params)
    assert out_h.shape == (N, out_ch_h, 2 * H, 2 * W), out_h.shape
    assert out_l.shape == (N, out_ch_l, H, W), out_l.shape
    assert jnp.allclose(out_h, ref_h, rtol=1e-3, atol=1e-3)
    assert jnp.allclose(out_l, ref_l, rtol=1e-3, atol=1e-3)

    print("KERNEL_OK")
</pallas_src>

<mosaic_0001>
module attributes {stable_mosaic.version = 11 : i64} {
  func.func @_decode_fused_kernel(%arg0: memref<4x2592xf32, #tpu.memory_space<vmem>>, %arg1: memref<4x2592xf32, #tpu.memory_space<vmem>>, %arg2: memref<4x684xf32, #tpu.memory_space<vmem>>, %arg3: memref<4x684xf32, #tpu.memory_space<vmem>>, %arg4: memref<4x72xf32, #tpu.memory_space<vmem>>, %arg5: memref<4x72xf32, #tpu.memory_space<vmem>>, %arg6: memref<4x1xf32, #tpu.memory_space<vmem>>, %arg7: memref<4x1xf32, #tpu.memory_space<vmem>>, %arg8: memref<4x1xf32, #tpu.memory_space<vmem>>, %arg9: memref<4x1xf32, #tpu.memory_space<vmem>>, %arg10: memref<1x2432xf32, #tpu.memory_space<vmem>>, %arg11: memref<1x640xf32, #tpu.memory_space<vmem>>, %arg12: memref<4x2432xf32, #tpu.memory_space<vmem>>, %arg13: memref<4x640xf32, #tpu.memory_space<vmem>>, %arg14: memref<72x2432xf32, #tpu.memory_space<vmem>>, %arg15: memref<72x640xf32, #tpu.memory_space<vmem>>) attributes {dimension_semantics = [], scalar_prefetch = 0 : i64, scratch_operands = 2 : i64, tpu.core_type = #tpu.core_type<tc>} {
    %c0 = arith.constant 0 : index
    %c37 = arith.constant 37 : index
    %0 = vector.load %arg0[%c0, %c37] : memref<4x2592xf32, #tpu.memory_space<vmem>>, vector<4x2432xf32>
    %c0_0 = arith.constant 0 : index
    %c0_1 = arith.constant 0 : index
    %1 = vector.load %arg14[%c0_0, %c0_1] : memref<72x2432xf32, #tpu.memory_space<vmem>>, vector<4x2432xf32>
    tpu.vector_store %arg14[%c0_0, %c0_1], %0 {strides = array<i32>} : memref<72x2432xf32, #tpu.memory_space<vmem>>, vector<4x2432xf32>,
    %c0_2 = arith.constant 0 : index
    %c0_3 = arith.constant 0 : index
    %2 = vector.load %arg1[%c0_2, %c0_3] : memref<4x2592xf32, #tpu.memory_space<vmem>>, vector<4x2432xf32>
    %c36 = arith.constant 36 : index
    %c0_4 = arith.constant 0 : index
    %3 = vector.load %arg14[%c36, %c0_4] : memref<72x2432xf32, #tpu.memory_space<vmem>>, vector<4x2432xf32>
    tpu.vector_store %arg14[%c36, %c0_4], %2 {strides = array<i32>} : memref<72x2432xf32, #tpu.memory_space<vmem>>, vector<4x2432xf32>,
    %c0_5 = arith.constant 0 : index
    %c38 = arith.constant 38 : index
    %4 = vector.load %arg0[%c0_5, %c38] : memref<4x2592xf32, #tpu.memory_space<vmem>>, vector<4x2432xf32>
    %c4 = arith.constant 4 : index
    %c0_6 = arith.constant 0 : index
    %5 = vector.load %arg14[%c4, %c0_6] : memref<72x2432xf32, #tpu.memory_space<vmem>>, vector<4x2432xf32>
    tpu.vector_store %arg14[%c4, %c0_6], %4 {strides = array<i32>} : memref<72x2432xf32, #tpu.memory_space<vmem>>, vector<4x2432xf32>,
    %c0_7 = arith.constant 0 : index
    %c2 = arith.constant 2 : index
    %6 = vector.load %arg1[%c0_7, %c2] : memref<4x2592xf32, #tpu.memory_space<vmem>>, vector<4x2432xf32>
    %c40 = arith.constant 40 : index
    %c0_8 = arith.constant 0 : index
    %7 = vector.load %arg14[%c40, %c0_8] : memref<72x2432xf32, #tpu.memory_space<vmem>>, vector<4x2432xf32>
    tpu.vector_store %arg14[%c40, %c0_8], %6 {strides = array<i32>} : memref<72x2432xf32, #tpu.memory_space<vmem>>, vector<4x2432xf32>,
    %c0_9 = arith.constant 0 : index
    %c39 = arith.constant 39 : index
    %8 = vector.load %arg0[%c0_9, %c39] : memref<4x2592xf32, #tpu.memory_space<vmem>>, vector<4x2432xf32>
    %c8 = arith.constant 8 : index
    %c0_10 = arith.constant 0 : index
    %9 = vector.load %arg14[%c8, %c0_10] : memref<72x2432xf32, #tpu.memory_space<vmem>>, vector<4x2432xf32>
    tpu.vector_store %arg14[%c8, %c0_10], %8 {strides = array<i32>} : memref<72x2432xf32, #tpu.memory_space<vmem>>, vector<4x2432xf32>,
    %c0_11 = arith.constant 0 : index
    %c4_12 = arith.constant 4 : index
    %10 = vector.load %arg1[%c0_11, %c4_12] : memref<4x2592xf32, #tpu.memory_space<vmem>>, vector<4x2432xf32>
    %c44 = arith.constant 44 : index
    %c0_13 = arith.constant 0 : index
    %11 = vector.load %arg14[%c44, %c0_13] : memref<72x2432xf32, #tpu.memory_space<vmem>>, vector<4x2432xf32>
    tpu.vector_store %arg14[%c44, %c0_13], %10 {strides = array<i32>} : memref<72x2432xf32, #tpu.memory_space<vmem>>, vector<4x2432xf32>,
    %c0_14 = arith.constant 0 : index
    %c73 = arith.constant 73 : index
    %12 = vector.load %arg0[%c0_14, %c73] : memref<4x2592xf32, #tpu.memory_space<vmem>>, vector<4x2432xf32>
    %c12 = arith.constant 12 : index
    %c0_15 = arith.constant 0 : index
    %13 = vector.load %arg14[%c12, %c0_15] : memref<72x2432xf32, #tpu.memory_space<vmem>>, vector<4x2432xf32>
    tpu.vector_store %arg14[%c12, %c0_15], %12 {strides = array<i32>} : memref<72x2432xf32, #tpu.memory_space<vmem>>, vector<4x2432xf32>,
    %c0_16 = arith.constant 0 : index
    %c72 = arith.constant 72 : index
    %14 = vector.load %arg1[%c0_16, %c72] : memref<4x2592xf32, #tpu.memory_space<vmem>>, vector<4x2432xf32>
    %c48 = arith.constant 48 : index
    %c0_17 = arith.constant 0 : index
    %15 = vector.load %arg14[%c48, %c0_17] : memref<72x2432xf32, #tpu.memory_space<vmem>>, vector<4x2432xf32>
    tpu.vector_store %arg14[%c48, %c0_17], %14 {strides = array<i32>} : memref<72x2432xf32, #tpu.memory_space<vmem>>, vector<4x2432xf32>,
    %c0_18 = arith.constant 0 : index
    %c74 = arith.constant 74 : index
    %16 = vector.load %arg0[%c0_18, %c74] : memref<4x2592xf32, #tpu.memory_space<vmem>>, vector<4x2432xf32>
    %c16 = arith.constant 16 : index
    %c0_19 = arith.constant 0 : index
    %17 = vector.load %arg14[%c16, %c0_19] : memref<72x2432xf32, #tpu.memory_space<vmem>>, vector<4x2432xf32>
    tpu.vector_store %arg14[%c16, %c0_19], %16 {strides = array<i32>} : memref<72x2432xf32, #tpu.memory_space<vmem>>, vector<4x2432xf32>,
    %c0_20 = arith.constant 0 : index
    %c74_21 = arith.constant 74 : index
    %18 = vector.load %arg1[%c0_20, %c74_21] : memref<4x2592xf32, #tpu.memory_space<vmem>>, vector<4x2432xf32>
    %c52 = arith.constant 52 : index
    %c0_22 = arith.constant 0 : index
    %19 = vector.load %arg14[%c52, %c0_22] : memref<72x2432xf32, #tpu.memory_space<vmem>>, vector<4x2432xf32>
    tpu.vector_store %arg14[%c52, %c0_22], %18 {strides = array<i32>} : memref<72x2432xf32, #tpu.memory_space<vmem>>, vector<4x2432xf32>,
    %c0_23 = arith.constant 0 : index
    %c75 = arith.constant 75 : index
    %20 = vector.load %arg0[%c0_23, %c75] : memref<4x2592xf32, #tpu.memory_space<vmem>>, vector<4x2432xf32>
    %c20 = arith.constant 20 : index
    %c0_24 = arith.constant 0 : index
    %21 = vector.load %arg14[%c20, %c0_24] : memref<72x2432xf32, #tpu.memory_space<vmem>>, vector<4x2432xf32>
    tpu.vector_store %arg14[%c20, %c0_24], %20 {strides = array<i32>} : memref<72x2432xf32, #tpu.memory_space<vmem>>, vector<4x2432xf32>,
    %c0_25 = arith.constant 0 : index
    %c76 = arith.constant 76 : index
    %22 = vector.load %arg1[%c0_25, %c76] : memref<4x2592xf32, #tpu.memory_space<vmem>>, vector<4x2432xf32>
    %c56 = arith.constant 56 : index
    %c0_26 = arith.constant 0 : index
    %23 = vector.load %arg14[%c56, %c0_26] : memref<72x2432xf32, #tpu.memory_space<vmem>>, vector<4x2432xf32>
    tpu.vector_store %arg14[%c56, %c0_26], %22 {strides = array<i32>} : memref<72x2432xf32, #tpu.memory_space<vmem>>, vector<4x2432xf32>,
    %c0_27 = arith.constant 0 : index
    %c109 = arith.constant 109 : index
    %24 = vector.load %arg0[%c0_27, %c109] : memref<4x2592xf32, #tpu.memory_space<vmem>>, vector<4x2432xf32>
    %c24 = arith.constant 24 : index
    %c0_28 = arith.constant 0 : index
    %25 = vector.load %arg14[%c24, %c0_28] : memref<72x2432xf32, #tpu.memory_space<vmem>>, vector<4x2432xf32>
    tpu.vector_store %arg14[%c24, %c0_28], %24 {strides = array<i32>} : memref<72x2432xf32, #tpu.memory_space<vmem>>, vector<4x2432xf32>,
    %c0_29 = arith.constant 0 : index
    %c144 = arith.constant 144 : index
    %26 = vector.load %arg1[%c0_29, %c144] : memref<4x2592xf32, #tpu.memory_space<vmem>>, vector<4x2432xf32>
    %c60 = arith.constant 60 : index
    %c0_30 = arith.constant 0 : index
    %27 = vector.load %arg14[%c60, %c0_30] : memref<72x2432xf32, #tpu.memory_space<vmem>>, vector<4x2432xf32>
    tpu.vector_store %arg14[%c60, %c0_30], %26 {strides = array<i32>} : memref<72x2432xf32, #tpu.memory_space<vmem>>, vector<4x2432xf32>,
    %c0_31 = arith.constant 0 : index
    %c110 = arith.constant 110 : index
    %28 = vector.load %arg0[%c0_31, %c110] : memref<4x2592xf32, #tpu.memory_space<vmem>>, vector<4x2432xf32>
    %c28 = arith.constant 28 : index
    %c0_32 = arith.constant 0 : index
    %29 = vector.load %arg14[%c28, %c0_32] : memref<72x2432xf32, #tpu.memory_space<vmem>>, vector<4x2432xf32>
    tpu.vector_store %arg14[%c28, %c0_32], %28 {strides = array<i32>} : memref<72x2432xf32, #tpu.memory_space<vmem>>, vector<4x2432xf32>,
    %c0_33 = arith.constant 0 : index
    %c146 = arith.constant 146 : index
    %30 = vector.load %arg1[%c0_33, %c146] : memref<4x2592xf32, #tpu.memory_space<vmem>>, vector<4x2432xf32>
    %c64 = arith.constant 64 : index
    %c0_34 = arith.constant 0 : index
    %31 = vector.load %arg14[%c64, %c0_34] : memref<72x2432xf32, #tpu.memory_space<vmem>>, vector<4x2432xf32>
    tpu.vector_store %arg14[%c64, %c0_34], %30 {strides = array<i32>} : memref<72x2432xf32, #tpu.memory_space<vmem>>, vector<4x2432xf32>,
    %c0_35 = arith.constant 0 : index
    %c111 = arith.constant 111 : index
    %32 = vector.load %arg0[%c0_35, %c111] : memref<4x2592xf32, #tpu.memory_space<vmem>>, vector<4x2432xf32>
    %c32 = arith.constant 32 : index
    %c0_36 = arith.constant 0 : index
    %33 = vector.load %arg14[%c32, %c0_36] : memref<72x2432xf32, #tpu.memory_space<vmem>>, vector<4x2432xf32>
    tpu.vector_store %arg14[%c32, %c0_36], %32 {strides = array<i32>} : memref<72x2432xf32, #tpu.memory_space<vmem>>, vector<4x2432xf32>,
    %c0_37 = arith.constant 0 : index
    %c148 = arith.constant 148 : index
    %34 = vector.load %arg1[%c0_37, %c148] : memref<4x2592xf32, #tpu.memory_space<vmem>>, vector<4x2432xf32>
    %c68 = arith.constant 68 : index
    %c0_38 = arith.constant 0 : index
    %35 = vector.load %arg14[%c68, %c0_38] : memref<72x2432xf32, #tpu.memory_space<vmem>>, vector<4x2432xf32>
    tpu.vector_store %arg14[%c68, %c0_38], %34 {strides = array<i32>} : memref<72x2432xf32, #tpu.memory_space<vmem>>, vector<4x2432xf32>,
    %c0_39 = arith.constant 0 : index
    %c0_40 = arith.constant 0 : index
    %36 = vector.load %arg2[%c0_39, %c0_40] : memref<4x684xf32, #tpu.memory_space<vmem>>, vector<4x640xf32>
    %c0_41 = arith.constant 0 : index
    %c0_42 = arith.constant 0 : index
    %37 = vector.load %arg15[%c0_41, %c0_42] : memref<72x640xf32, #tpu.memory_space<vmem>>, vector<4x640xf32>
    tpu.vector_store %arg15[%c0_41, %c0_42], %36 {strides = array<i32>} : memref<72x640xf32, #tpu.memory_space<vmem>>, vector<4x640xf32>,
    %c0_43 = arith.constant 0 : index
    %c0_44 = arith.constant 0 : index
    %38 = vector.load %arg3[%c0_43, %c0_44] : memref<4x684xf32, #tpu.memory_space<vmem>>, vector<4x640xf32>
    %c36_45 = arith.constant 36 : index
    %c0_46 = arith.constant 0 : index
    %39 = vector.load %arg15[%c36_45, %c0_46] : memref<72x640xf32, #tpu.memory_space<vmem>>, vector<4x640xf32>
    tpu.vector_store %arg15[%c36_45, %c0_46], %38 {strides = array<i32>} : memref<72x640xf32, #tpu.memory_space<vmem>>, vector<4x640xf32>,
    %c0_47 = arith.constant 0 : index
    %c1 = arith.constant 1 : index
    %40 = vector.load %arg2[%c0_47, %c1] : memref<4x684xf32, #tpu.memory_space<vmem>>, vector<4x640xf32>
    %c4_48 = arith.constant 4 : index
    %c0_49 = arith.constant 0 : index
    %41 = vector.load %arg15[%c4_48, %c0_49] : memref<72x640xf32, #tpu.memory_space<vmem>>, vector<4x640xf32>
    tpu.vector_store %arg15[%c4_48, %c0_49], %40 {strides = array<i32>} : memref<72x640xf32, #tpu.memory_space<vmem>>, vector<4x640xf32>,
    %c0_50 = arith.constant 0 : index
    %c1_51 = arith.constant 1 : index
    %42 = vector.load %arg3[%c0_50, %c1_51] : memref<4x684xf32, #tpu.memory_space<vmem>>, vector<4x640xf32>
    %c40_52 = arith.constant 40 : index
    %c0_53 = arith.constant 0 : index
    %43 = vector.load %arg15[%c40_52, %c0_53] : memref<72x640xf32, #tpu.memory_space<vmem>>, vector<4x640xf32>
    tpu.vector_store %arg15[%c40_52, %c0_53], %42 {strides = array<i32>} : memref<72x640xf32, #tpu.memory_space<vmem>>, vector<4x640xf32>,
    %c0_54 = arith.constant 0 : index
    %c2_55 = arith.constant 2 : index
    %44 = vector.load %arg2[%c0_54, %c2_55] : memref<4x684xf32, #tpu.memory_space<vmem>>, vector<4x640xf32>
    %c8_56 = arith.constant 8 : index
    %c0_57 = arith.constant 0 : index
    %45 = vector.load %arg15[%c8_56, %c0_57] : memref<72x640xf32, #tpu.memory_space<vmem>>, vector<4x640xf32>
    tpu.vector_store %arg15[%c8_56, %c0_57], %44 {strides = array<i32>} : memref<72x640xf32, #tpu.memory_space<vmem>>, vector<4x640xf32>,
    %c0_58 = arith.constant 0 : index
    %c2_59 = arith.constant 2 : index
    %46 = vector.load %arg3[%c0_58, %c2_59] : memref<4x684xf32, #tpu.memory_space<vmem>>, vector<4x640xf32>
    %c44_60 = arith.constant 44 : index
    %c0_61 = arith.constant 0 : index
    %47 = vector.load %arg15[%c44_60, %c0_61] : memref<72x640xf32, #tpu.memory_space<vmem>>, vector<4x640xf32>
    tpu.vector_store %arg15[%c44_60, %c0_61], %46 {strides = array<i32>} : memref<72x640xf32, #tpu.memory_space<vmem>>, vector<4x640xf32>,
    %c0_62 = arith.constant 0 : index
    %c18 = arith.constant 18 : index
    %48 = vector.load %arg2[%c0_62, %c18] : memref<4x684xf32, #tpu.memory_space<vmem>>, vector<4x640xf32>
    %c12_63 = arith.constant 12 : index
    %c0_64 = arith.constant 0 : index
    %49 = vector.load %arg15[%c12_63, %c0_64] : memref<72x640xf32, #tpu.memory_space<vmem>>, vector<4x640xf32>
    tpu.vector_store %arg15[%c12_63, %c0_64], %48 {strides = array<i32>} : memref<72x640xf32, #tpu.memory_space<vmem>>, vector<4x640xf32>,
    %c0_65 = arith.constant 0 : index
    %c18_66 = arith.constant 18 : index
    %50 = vector.load %arg3[%c0_65, %c18_66] : memref<4x684xf32, #tpu.memory_space<vmem>>, vector<4x640xf32>
    %c48_67 = arith.constant 48 : index
    %c0_68 = arith.constant 0 : index
    %51 = vector.load %arg15[%c48_67, %c0_68] : memref<72x640xf32, #tpu.memory_space<vmem>>, vector<4x640xf32>
    tpu.vector_store %arg15[%c48_67, %c0_68], %50 {strides = array<i32>} : memref<72x640xf32, #tpu.memory_space<vmem>>, vector<4x640xf32>,
    %c0_69 = arith.constant 0 : index
    %c19 = arith.constant 19 : index
    %52 = vector.load %arg2[%c0_69, %c19] : memref<4x684xf32, #tpu.memory_space<vmem>>, vector<4x640xf32>
    %c16_70 = arith.constant 16 : index
    %c0_71 = arith.constant 0 : index
    %53 = vector.load %arg15[%c16_70, %c0_71] : memref<72x640xf32, #tpu.memory_space<vmem>>, vector<4x640xf32>
    tpu.vector_store %arg15[%c16_70, %c0_71], %52 {strides = array<i32>} : memref<72x640xf32, #tpu.memory_space<vmem>>, vector<4x640xf32>,
    %c0_72 = arith.constant 0 : index
    %c19_73 = arith.constant 19 : index
    %54 = vector.load %arg3[%c0_72, %c19_73] : memref<4x684xf32, #tpu.memory_space<vmem>>, vector<4x640xf32>
    %c52_74 = arith.constant 52 : index
    %c0_75 = arith.constant 0 : index
    %55 = vector.load %arg15[%c52_74, %c0_75] : memref<72x640xf32, #tpu.memory_space<vmem>>, vector<4x640xf32>
    tpu.vector_store %arg15[%c52_74, %c0_75], %54 {strides = array<i32>} : memref<72x640xf32, #tpu.memory_space<vmem>>, vector<4x640xf32>,
    %c0_76 = arith.constant 0 : index
    %c20_77 = arith.constant 20 : index
    %56 = vector.load %arg2[%c0_76, %c20_77] : memref<4x684xf32, #tpu.memory_space<vmem>>, vector<4x640xf32>
    %c20_78 = arith.constant 20 : index
    %c0_79 = arith.constant 0 : index
    %57 = vector.load %arg15[%c20_78, %c0_79] : memref<72x640xf32, #tpu.memory_space<vmem>>, vector<4x640xf32>
    tpu.vector_store %arg15[%c20_78, %c0_79], %56 {strides = array<i32>} : memref<72x640xf32, #tpu.memory_space<vmem>>, vector<4x640xf32>,
    %c0_80 = arith.constant 0 : index
    %c20_81 = arith.constant 20 : index
    %58 = vector.load %arg3[%c0_80, %c20_81] : memref<4x684xf32, #tpu.memory_space<vmem>>, vector<4x640xf32>
    %c56_82 = arith.constant 56 : index
    %c0_83 = arith.constant 0 : index
    %59 = vector.load %arg15[%c56_82, %c0_83] : memref<72x640xf32, #tpu.memory_space<vmem>>, vector<4x640xf32>
    tpu.vector_store %arg15[%c56_82, %c0_83], %58 {strides = array<i32>} : memref<72x640xf32, #tpu.memory_space<vmem>>, vector<4x640xf32>,
    %c0_84 = arith.constant 0 : index
    %c36_85 = arith.constant 36 : index
    %60 = vector.load %arg2[%c0_84, %c36_85] : memref<4x684xf32, #tpu.memory_space<vmem>>, vector<4x640xf32>
    %c24_86 = arith.constant 24 : index
    %c0_87 = arith.constant 0 : index
    %61 = vector.load %arg15[%c24_86, %c0_87] : memref<72x640xf32, #tpu.memory_space<vmem>>, vector<4x640xf32>
    tpu.vector_store %arg15[%c24_86, %c0_87], %60 {strides = array<i32>} : memref<72x640xf32, #tpu.memory_space<vmem>>, vector<4x640xf32>,
    %c0_88 = arith.constant 0 : index
    %c36_89 = arith.constant 36 : index
    %62 = vector.load %arg3[%c0_88, %c36_89] : memref<4x684xf32, #tpu.memory_space<vmem>>, vector<4x640xf32>
    %c60_90 = arith.constant 60 : index
    %c0_91 = arith.constant 0 : index
    %63 = vector.load %arg15[%c60_90, %c0_91] : memref<72x640xf32, #tpu.memory_space<vmem>>, vector<4x640xf32>
    tpu.vector_store %arg15[%c60_90, %c0_91], %62 {strides = array<i32>} : memref<72x640xf32, #tpu.memory_space<vmem>>, vector<4x640xf32>,
    %c0_92 = arith.constant 0 : index
    %c37_93 = arith.constant 37 : index
    %64 = vector.load %arg2[%c0_92, %c37_93] : memref<4x684xf32, #tpu.memory_space<vmem>>, vector<4x640xf32>
    %c28_94 = arith.constant 28 : index
    %c0_95 = arith.constant 0 : index
    %65 = vector.load %arg15[%c28_94, %c0_95] : memref<72x640xf32, #tpu.memory_space<vmem>>, vector<4x640xf32>
    tpu.vector_store %arg15[%c28_94, %c0_95], %64 {strides = array<i32>} : memref<72x640xf32, #tpu.memory_space<vmem>>, vector<4x640xf32>,
    %c0_96 = arith.constant 0 : index
    %c37_97 = arith.constant 37 : index
    %66 = vector.load %arg3[%c0_96, %c37_97] : memref<4x684xf32, #tpu.memory_space<vmem>>, vector<4x640xf32>
    %c64_98 = arith.constant 64 : index
    %c0_99 = arith.constant 0 : index
    %67 = vector.load %arg15[%c64_98, %c0_99] : memref<72x640xf32, #tpu.memory_space<vmem>>, vector<4x640xf32>
    tpu.vector_store %arg15[%c64_98, %c0_99], %66 {strides = array<i32>} : memref<72x640xf32, #tpu.memory_space<vmem>>, vector<4x640xf32>,
    %c0_100 = arith.constant 0 : index
    %c38_101 = arith.constant 38 : index
    %68 = vector.load %arg2[%c0_100, %c38_101] : memref<4x684xf32, #tpu.memory_space<vmem>>, vector<4x640xf32>
    %c32_102 = arith.constant 32 : index
    %c0_103 = arith.constant 0 : index
    %69 = vector.load %arg15[%c32_102, %c0_103] : memref<72x640xf32, #tpu.memory_space<vmem>>, vector<4x640xf32>
    tpu.vector_store %arg15[%c32_102, %c0_103], %68 {strides = array<i32>} : memref<72x640xf32, #tpu.memory_space<vmem>>, vector<4x640xf32>,
    %c0_104 = arith.constant 0 : index
    %c38_105 = arith.constant 38 : index
    %70 = vector.load %arg3[%c0_104, %c38_105] : memref<4x684xf32, #tpu.memory_space<vmem>>, vector<4x640xf32>
    %c68_106 = arith.constant 68 : index
    %c0_107 = arith.constant 0 : index
    %71 = vector.load %arg15[%c68_106, %c0_107] : memref<72x640xf32, #tpu.memory_space<vmem>>, vector<4x640xf32>
    tpu.vector_store %arg15[%c68_106, %c0_107], %70 {strides = array<i32>} : memref<72x640xf32, #tpu.memory_space<vmem>>, vector<4x640xf32>,
    %c0_108 = arith.constant 0 : index
    %c0_109 = arith.constant 0 : index
    %72 = vector.load %arg4[%c0_108, %c0_109] : memref<4x72xf32, #tpu.memory_space<vmem>>, vector<4x72xf32>
    %c0_110 = arith.constant 0 : index
    %c0_111 = arith.constant 0 : index
    %73 = vector.load %arg14[%c0_110, %c0_111] : memref<72x2432xf32, #tpu.memory_space<vmem>>, vector<72x2432xf32>
    %cst = arith.constant dense<0.000000e+00> : vector<4x2432xf32>
    %74 = tpu.matmul %72, %73, %cst {dimension_numbers = #tpu.dot_dimension_numbers<[1], [0], [0], [1], [0, 0, 1, 1], [], []>} : vector<4x72xf32>, vector<72x2432xf32>, vector<4x2432xf32> -> vector<4x2432xf32>
    %c0_112 = arith.constant 0 : index
    %c0_113 = arith.constant 0 : index
    %75 = vector.load %arg5[%c0_112, %c0_113] : memref<4x72xf32, #tpu.memory_space<vmem>>, vector<4x72xf32>
    %c0_114 = arith.constant 0 : index
    %c0_115 = arith.constant 0 : index
    %76 = vector.load %arg15[%c0_114, %c0_115] : memref<72x640xf32, #tpu.memory_space<vmem>>, vector<72x640xf32>
    %cst_116 = arith.constant dense<0.000000e+00> : vector<4x640xf32>
    %77 = tpu.matmul %75, %76, %cst_116 {dimension_numbers = #tpu.dot_dimension_numbers<[1], [0], [0], [1], [0, 0, 1, 1], [], []>} : vector<4x72xf32>, vector<72x640xf32>, vector<4x640xf32> -> vector<4x640xf32>
    %c0_117 = arith.constant 0 : index
    %c0_118 = arith.constant 0 : index
    %78 = vector.load %arg10[%c0_117, %c0_118] : memref<1x2432xf32, #tpu.memory_space<vmem>>, vector<1x2432xf32>
    %c0_119 = arith.constant 0 : index
    %c0_120 = arith.constant 0 : index
    %79 = vector.load %arg6[%c0_119, %c0_120] : memref<4x1xf32, #tpu.memory_space<vmem>>, vector<4x1xf32>
    %c0_121 = arith.constant 0 : index
    %c0_122 = arith.constant 0 : index
    %80 = vector.load %arg7[%c0_121, %c0_122] : memref<4x1xf32, #tpu.memory_space<vmem>>, vector<4x1xf32>
    %81 = vector.broadcast %78 : vector<1x2432xf32> to vector<4x2432xf32>
    %82 = arith.mulf %74, %81 : vector<4x2432xf32>
    %cst_123 = arith.constant dense<0.000000e+00> : vector<4xf32>
    %83 = vector.multi_reduction <add>, %82, %cst_123 [1] : vector<4x2432xf32> to vector<4xf32>
    %84 = vector.shape_cast %83 : vector<4xf32> to vector<4x1xf32>
    %cst_124 = arith.constant 2.048000e+03 : f32
    %85 = vector.broadcast %cst_124 : f32 to vector<4x1xf32>
    %86 = arith.divf %84, %85 : vector<4x1xf32>
    %87 = vector.broadcast %86 : vector<4x1xf32> to vector<4x2432xf32>
    %88 = arith.subf %74, %87 : vector<4x2432xf32>
    %89 = vector.broadcast %78 : vector<1x2432xf32> to vector<4x2432xf32>
    %90 = arith.mulf %88, %89 : vector<4x2432xf32>
    %91 = arith.mulf %90, %90 : vector<4x2432xf32>
    %cst_125 = arith.constant dense<0.000000e+00> : vector<4xf32>
    %92 = vector.multi_reduction <add>, %91, %cst_125 [1] : vector<4x2432xf32> to vector<4xf32>
    %93 = vector.shape_cast %92 : vector<4xf32> to vector<4x1xf32>
    %cst_126 = arith.constant 2.048000e+03 : f32
    %94 = vector.broadcast %cst_126 : f32 to vector<4x1xf32>
    %95 = arith.divf %93, %94 : vector<4x1xf32>
    %cst_127 = arith.constant 9.99999974E-6 : f32
    %96 = vector.broadcast %cst_127 : f32 to vector<4x1xf32>
    %97 = arith.addf %95, %96 : vector<4x1xf32>
    %98 = math.rsqrt %97 : vector<4x1xf32>
    %99 = arith.mulf %79, %98 : vector<4x1xf32>
    %100 = arith.mulf %86, %99 : vector<4x1xf32>
    %101 = arith.subf %80, %100 : vector<4x1xf32>
    %102 = vector.broadcast %99 : vector<4x1xf32> to vector<4x2432xf32>
    %103 = arith.mulf %74, %102 : vector<4x2432xf32>
    %104 = vector.broadcast %101 : vector<4x1xf32> to vector<4x2432xf32>
    %105 = arith.addf %103, %104 : vector<4x2432xf32>
    %cst_128 = arith.constant 0.000000e+00 : f32
    %106 = vector.broadcast %cst_128 : f32 to vector<4x2432xf32>
    %107 = arith.maximumf %105, %106 : vector<4x2432xf32>
    %c0_129 = arith.constant 0 : index
    %c0_130 = arith.constant 0 : index
    %108 = vector.load %arg12[%c0_129, %c0_130] : memref<4x2432xf32, #tpu.memory_space<vmem>>, vector<4x2432xf32>
    tpu.vector_store %arg12[%c0_129, %c0_130], %107 {strides = array<i32>} : memref<4x2432xf32, #tpu.memory_space<vmem>>, vector<4x2432xf32>,
    %c0_131 = arith.constant 0 : index
    %c0_132 = arith.constant 0 : index
    %109 = vector.load %arg11[%c0_131, %c0_132] : memref<1x640xf32, #tpu.memory_space<vmem>>, vector<1x640xf32>
    %c0_133 = arith.constant 0 : index
    %c0_134 = arith.constant 0 : index
    %110 = vector.load %arg8[%c0_133, %c0_134] : memref<4x1xf32, #tpu.memory_space<vmem>>, vector<4x1xf32>
    %c0_135 = arith.constant 0 : index
    %c0_136 = arith.constant 0 : index
    %111 = vector.load %arg9[%c0_135, %c0_136] : memref<4x1xf32, #tpu.memory_space<vmem>>, vector<4x1xf32>
    %112 = vector.broadcast %109 : vector<1x640xf32> to vector<4x640xf32>
    %113 = arith.mulf %77, %112 : vector<4x640xf32>
    %cst_137 = arith.constant dense<0.000000e+00> : vector<4xf32>
    %114 = vector.multi_reduction <add>, %113, %cst_137 [1] : vector<4x640xf32> to vector<4xf32>
    %115 = vector.shape_cast %114 : vector<4xf32> to vector<4x1xf32>
    %cst_138 = arith.constant 5.120000e+02 : f32
    %116 = vector.broadcast %cst_138 : f32 to vector<4x1xf32>
    %117 = arith.divf %115, %116 : vector<4x1xf32>
    %118 = vector.broadcast %117 : vector<4x1xf32> to vector<4x640xf32>
    %119 = arith.subf %77, %118 : vector<4x640xf32>
    %120 = vector.broadcast %109 : vector<1x640xf32> to vector<4x640xf32>
    %121 = arith.mulf %119, %120 : vector<4x640xf32>
    %122 = arith.mulf %121, %121 : vector<4x640xf32>
    %cst_139 = arith.constant dense<0.000000e+00> : vector<4xf32>
    %123 = vector.multi_reduction <add>, %122, %cst_139 [1] : vector<4x640xf32> to vector<4xf32>
    %124 = vector.shape_cast %123 : vector<4xf32> to vector<4x1xf32>
    %cst_140 = arith.constant 5.120000e+02 : f32
    %125 = vector.broadcast %cst_140 : f32 to vector<4x1xf32>
    %126 = arith.divf %124, %125 : vector<4x1xf32>
    %cst_141 = arith.constant 9.99999974E-6 : f32
    %127 = vector.broadcast %cst_141 : f32 to vector<4x1xf32>
    %128 = arith.addf %126, %127 : vector<4x1xf32>
    %129 = math.rsqrt %128 : vector<4x1xf32>
    %130 = arith.mulf %110, %129 : vector<4x1xf32>
    %131 = arith.mulf %117, %130 : vector<4x1xf32>
    %132 = arith.subf %111, %131 : vector<4x1xf32>
    %133 = vector.broadcast %130 : vector<4x1xf32> to vector<4x640xf32>
    %134 = arith.mulf %77, %133 : vector<4x640xf32>
    %135 = vector.broadcast %132 : vector<4x1xf32> to vector<4x640xf32>
    %136 = arith.addf %134, %135 : vector<4x640xf32>
    %cst_142 = arith.constant 0.000000e+00 : f32
    %137 = vector.broadcast %cst_142 : f32 to vector<4x640xf32>
    %138 = arith.maximumf %136, %137 : vector<4x640xf32>
    %c0_143 = arith.constant 0 : index
    %c0_144 = arith.constant 0 : index
    %139 = vector.load %arg13[%c0_143, %c0_144] : memref<4x640xf32, #tpu.memory_space<vmem>>, vector<4x640xf32>
    tpu.vector_store %arg13[%c0_143, %c0_144], %138 {strides = array<i32>} : memref<4x640xf32, #tpu.memory_space<vmem>>, vector<4x640xf32>,
    return
  }
}

</mosaic_0001>

<llo_original>
// kernel: decode_forward.1
$region0: #{decode_forward.1}
  #allocation0 [shape = 'u32[]', space=smem, size = 0x4, offset = 0x4, fixed_abs, tag = 'smem constant byte address 0x4 - core index']
  #allocation1 [shape = 'u32[144,128]{1,0:T(1,128)}', space=vmem, size = 0x12000, scoped, tag = 'internal scratch']
  #allocation2 [shape = 'f32[72,2432]{1,0:T(8,128)}', space=vmem, size = 0xab000, scoped, tag = 'scratch operand']
  #allocation3 [shape = 'f32[72,640]{1,0:T(8,128)}', space=vmem, size = 0x2d000, scoped, tag = 'scratch operand']
  %s0 = inlined_call_operand.vmem [shape: f32[4,2592], index: 0, kind: input, shape index: {}]
  %s1 = inlined_call_operand.vmem [shape: f32[4,2592], index: 1, kind: input, shape index: {}]
  %s2 = inlined_call_operand.vmem [shape: f32[4,684], index: 2, kind: input, shape index: {}]
  %s3 = inlined_call_operand.vmem [shape: f32[4,684], index: 3, kind: input, shape index: {}]
  %s4 = inlined_call_operand.vmem [shape: f32[4,72], index: 4, kind: input, shape index: {}]
  %s5 = inlined_call_operand.vmem [shape: f32[4,72], index: 5, kind: input, shape index: {}]
  %s6 = inlined_call_operand.vmem [shape: f32[4,1], index: 6, kind: input, shape index: {}]
  %s7 = inlined_call_operand.vmem [shape: f32[4,1], index: 7, kind: input, shape index: {}]
  %s8 = inlined_call_operand.vmem [shape: f32[4,1], index: 8, kind: input, shape index: {}]
  %s9 = inlined_call_operand.vmem [shape: f32[4,1], index: 9, kind: input, shape index: {}]
  %s10 = inlined_call_operand.vmem [shape: f32[1,2432], index: 10, kind: input, shape index: {}]
  %s11 = inlined_call_operand.vmem [shape: f32[1,640], index: 11, kind: input, shape index: {}]
  %s12 = inlined_call_operand.vmem [shape: f32[4,2432], index: 12, kind: output, shape index: {0}]
  %s13 = inlined_call_operand.vmem [shape: f32[4,640], index: 13, kind: output, shape index: {1}]
  %14 = xla_tuple %s12, %s13
  %s15 = sld [smem:[#allocation0]]
  $region66: #{decode_forward.1} parent=0
    _
  %s17 = ssub.s32 1, %s15
  %s18 = scalar_select 0, %s17, %s15
  // Predicated region
  $region2: #{decode_forward.1} parent=0 // pred_check
    _
  $region3: #{decode_forward.1} parent=0 // pred_check_branch
    %20 = sbr.rel (0) target = $region5
  $region4: #{decode_forward.1} parent=0 // pred_region
    _
  $region5: #{decode_forward.1} parent=0 // pred_fallthru
    _
  // Predicated region
  $region6: #{decode_forward.1} parent=0 // pred_check
    _
  $region7: #{decode_forward.1} parent=0 // pred_check_branch
    %22 = sbr.rel (0) target = $region9
  $region8: #{decode_forward.1} parent=0 // pred_region
    _
  $region9: #{decode_forward.1} parent=0 // pred_fallthru
    _
  // Predicated region
  $region10: #{decode_forward.1} parent=0 // pred_check
    _
  $region11: #{decode_forward.1} parent=0 // pred_check_branch
    %24 = sbr.rel (0) target = $region13
  $region12: #{decode_forward.1} parent=0 // pred_region
    _
  $region13: #{decode_forward.1} parent=0 // pred_fallthru
    _
  // Predicated region
  $region14: #{decode_forward.1} parent=0 // pred_check
    _
  $region15: #{decode_forward.1} parent=0 // pred_check_branch
    %26 = sbr.rel (0) target = $region17
  $region16: #{decode_forward.1} parent=0 // pred_region
    _
  $region17: #{decode_forward.1} parent=0 // pred_fallthru
    _
  // Predicated region
  $region18: #{decode_forward.1} parent=0 // pred_check
    _
  $region19: #{decode_forward.1} parent=0 // pred_check_branch
    %28 = sbr.rel (0) target = $region21
  $region20: #{decode_forward.1} parent=0 // pred_region
    _
  $region21: #{decode_forward.1} parent=0 // pred_fallthru
    _
  // Predicated region
  $region22: #{decode_forward.1} parent=0 // pred_check
    _
  $region23: #{decode_forward.1} parent=0 // pred_check_branch
    %30 = sbr.rel (0) target = $region25
  $region24: #{decode_forward.1} parent=0 // pred_region
    _
  $region25: #{decode_forward.1} parent=0 // pred_fallthru
    _
  // Predicated region
  $region26: #{decode_forward.1} parent=0 // pred_check
    _
  $region27: #{decode_forward.1} parent=0 // pred_check_branch
    %32 = sbr.rel (0) target = $region29
  $region28: #{decode_forward.1} parent=0 // pred_region
    _
  $region29: #{decode_forward.1} parent=0 // pred_fallthru
    _
  // Predicated region
  $region30: #{decode_forward.1} parent=0 // pred_check
    _
  $region31: #{decode_forward.1} parent=0 // pred_check_branch
    %34 = sbr.rel (0) target = $region33
  $region32: #{decode_forward.1} parent=0 // pred_region
    _
  $region33: #{decode_forward.1} parent=0 // pred_fallthru
    _
  // Predicated region
  $region34: #{decode_forward.1} parent=0 // pred_check
    _
  $region35: #{decode_forward.1} parent=0 // pred_check_branch
    %36 = sbr.rel (0) target = $region37
  $region36: #{decode_forward.1} parent=0 // pred_region
    _
  $region37: #{decode_forward.1} parent=0 // pred_fallthru
    _
  // Predicated region
  $region38: #{decode_forward.1} parent=0 // pred_check
    _
  $region39: #{decode_forward.1} parent=0 // pred_check_branch
    %38 = sbr.rel (0) target = $region41
  $region40: #{decode_forward.1} parent=0 // pred_region
    _
  $region41: #{decode_forward.1} parent=0 // pred_fallthru
    _
  // Predicated region
  $region42: #{decode_forward.1} parent=0 // pred_check
    _
  $region43: #{decode_forward.1} parent=0 // pred_check_branch
    %40 = sbr.rel (0) target = $region45
  $region44: #{decode_forward.1} parent=0 // pred_region
    _
  $region45: #{decode_forward.1} parent=0 // pred_fallthru
    _
  // Predicated region
  $region46: #{decode_forward.1} parent=0 // pred_check
    _
  $region47: #{decode_forward.1} parent=0 // pred_check_branch
    %42 = sbr.rel (0) target = $region49
  $region48: #{decode_forward.1} parent=0 // pred_region
    _
  $region49: #{decode_forward.1} parent=0 // pred_fallthru
    _
  %v43 = vld [vmem:[%s0] sm:$0xff]
  %v44 = vld [vmem:[%s0 + $0x8] sm:$0xff]
  %v45 = vld [vmem:[%s0 + $0x10] sm:$0xff]
  %v46 = vld [vmem:[%s0 + $0x18] sm:$0xff]
  %v47 = vld [vmem:[%s0 + $0x20] sm:$0xff]
  %v48 = vld [vmem:[%s0 + $0x28] sm:$0xff]
  %v49 = vld [vmem:[%s0 + $0x30] sm:$0xff]
  %v50 = vld [vmem:[%s0 + $0x38] sm:$0xff]
  %v51 = vld [vmem:[%s0 + $0x40] sm:$0xff]
  %v52 = vld [vmem:[%s0 + $0x48] sm:$0xff]
  %v63 = vcombine.high %v43, %v43
  %v64 = vcombine.high %v44, %v44
  %v65 = vcombine.high %v45, %v45
  %v66 = vcombine.high %v46, %v46
  %v67 = vcombine.high %v47, %v47
  %v68 = vcombine.high %v48, %v48
  %v69 = vcombine.high %v49, %v49
  %v70 = vcombine.high %v50, %v50
  %v71 = vcombine.high %v51, %v51
  %v72 = vcombine.high %v52, %v52
  %73 = vrot.lane.b32.xlu0 %v43, 91
  %v74 = vpop.permute.xlu0 %73
  %75 = vrot.lane.b32.xlu0 %v63, 91
  %v76 = vpop.permute.xlu0 %75
  %77 = vrot.lane.b32.xlu0 %v44, 91
  %v78 = vpop.permute.xlu0 %77
  %79 = vrot.lane.b32.xlu0 %v64, 91
  %v80 = vpop.permute.xlu0 %79
  %81 = vrot.lane.b32.xlu0 %v45, 91
  %v82 = vpop.permute.xlu0 %81
  %83 = vrot.lane.b32.xlu0 %v65, 91
  %v84 = vpop.permute.xlu0 %83
  %85 = vrot.lane.b32.xlu0 %v46, 91
  %v86 = vpop.permute.xlu0 %85
  %87 = vrot.lane.b32.xlu0 %v66, 91
  %v88 = vpop.permute.xlu0 %87
  %89 = vrot.lane.b32.xlu0 %v47, 91
  %v90 = vpop.permute.xlu0 %89
  %91 = vrot.lane.b32.xlu0 %v67, 91
  %v92 = vpop.permute.xlu0 %91
  %93 = vrot.lane.b32.xlu0 %v48, 91
  %v94 = vpop.permute.xlu0 %93
  %95 = vrot.lane.b32.xlu0 %v68, 91
  %v96 = vpop.permute.xlu0 %95
  %97 = vrot.lane.b32.xlu0 %v49, 91
  %v98 = vpop.permute.xlu0 %97
  %99 = vrot.lane.b32.xlu0 %v69, 91
  %v100 = vpop.permute.xlu0 %99
  %101 = vrot.lane.b32.xlu0 %v50, 91
  %v102 = vpop.permute.xlu0 %101
  %103 = vrot.lane.b32.xlu0 %v70, 91
  %v104 = vpop.permute.xlu0 %103
  %105 = vrot.lane.b32.xlu0 %v51, 91
  %v106 = vpop.permute.xlu0 %105
  %107 = vrot.lane.b32.xlu0 %v71, 91
  %v108 = vpop.permute.xlu0 %107
  %109 = vrot.lane.b32.xlu0 %v52, 91
  %v110 = vpop.permute.xlu0 %109
  %111 = vrot.lane.b32.xlu0 %v72, 91
  %v112 = vpop.permute.xlu0 %111
  %vm113 = vcmask 744448
  %v114 = vsel %vm113, %v74, %v76
  %v115 = vsel %vm113, %v76, %v78
  %v116 = vsel %vm113, %v78, %v80
  %v117 = vsel %vm113, %v80, %v82
  %v118 = vsel %vm113, %v82, %v84
  %v119 = vsel %vm113, %v84, %v86
  %v120 = vsel %vm113, %v86, %v88
  %v121 = vsel %vm113, %v88, %v90
  %v122 = vsel %vm113, %v90, %v92
  %v123 = vsel %vm113, %v92, %v94
  %v124 = vsel %vm113, %v94, %v96
  %v125 = vsel %vm113, %v96, %v98
  %v126 = vsel %vm113, %v98, %v100
  %v127 = vsel %vm113, %v100, %v102
  %v128 = vsel %vm113, %v102, %v104
  %v129 = vsel %vm113, %v104, %v106
  %v130 = vsel %vm113, %v106, %v108
  %v131 = vsel %vm113, %v108, %v110
  %v132 = vsel %vm113, %v110, %v112
  %152 = vst [vmem:[#allocation2] sm:$0xf] %v114
  %153 = vst [vmem:[#allocation2 + $0x8] sm:$0xf] %v115
  %154 = vst [vmem:[#allocation2 + $0x10] sm:$0xf] %v116
  %155 = vst [vmem:[#allocation2 + $0x18] sm:$0xf] %v117
  %156 = vst [vmem:[#allocation2 + $0x20] sm:$0xf] %v118
  %157 = vst [vmem:[#allocation2 + $0x28] sm:$0xf] %v119
  %158 = vst [vmem:[#allocation2 + $0x30] sm:$0xf] %v120
  %159 = vst [vmem:[#allocation2 + $0x38] sm:$0xf] %v121
  %160 = vst [vmem:[#allocation2 + $0x40] sm:$0xf] %v122
  %161 = vst [vmem:[#allocation2 + $0x48] sm:$0xf] %v123
  %162 = vst [vmem:[#allocation2 + $0x50] sm:$0xf] %v124
  %163 = vst [vmem:[#allocation2 + $0x58] sm:$0xf] %v125
  %164 = vst [vmem:[#allocation2 + $0x60] sm:$0xf] %v126
  %165 = vst [vmem:[#allocation2 + $0x68] sm:$0xf] %v127
  %166 = vst [vmem:[#allocation2 + $0x70] sm:$0xf] %v128
  %167 = vst [vmem:[#allocation2 + $0x78] sm:$0xf] %v129
  %168 = vst [vmem:[#allocation2 + $0x80] sm:$0xf] %v130
  %169 = vst [vmem:[#allocation2 + $0x88] sm:$0xf] %v131
  %170 = vst [vmem:[#allocation2 + $0x90] sm:$0xf] %v132
  %v171 = vld [vmem:[%s1] sm:$0xff]
  %v172 = vld [vmem:[%s1 + $0x8] sm:$0xff]
  %v173 = vld [vmem:[%s1 + $0x10] sm:$0xff]
  %v174 = vld [vmem:[%s1 + $0x18] sm:$0xff]
  %v175 = vld [vmem:[%s1 + $0x20] sm:$0xff]
  %v176 = vld [vmem:[%s1 + $0x28] sm:$0xff]
  %v177 = vld [vmem:[%s1 + $0x30] sm:$0xff]
  %v178 = vld [vmem:[%s1 + $0x38] sm:$0xff]
  %v179 = vld [vmem:[%s1 + $0x40] sm:$0xff]
  %v180 = vld [vmem:[%s1 + $0x48] sm:$0xf]
  %v191 = vcombine.low %v171, %v171
  %v192 = vcombine.low %v172, %v172
  %v193 = vcombine.low %v173, %v173
  %v194 = vcombine.low %v174, %v174
  %v195 = vcombine.low %v175, %v175
  %v196 = vcombine.low %v176, %v176
  %v197 = vcombine.low %v177, %v177
  %v198 = vcombine.low %v178, %v178
  %v199 = vcombine.low %v179, %v179
  %v200 = vcombine.low %v180, %v180
  %211 = vst [vmem:[#allocation2 + $0x260] sm:$0xf0] %v191
  %212 = vst [vmem:[#allocation2 + $0x268] sm:$0xf0] %v171
  %213 = vst [vmem:[#allocation2 + $0x270] sm:$0xf0] %v192
  %214 = vst [vmem:[#allocation2 + $0x278] sm:$0xf0] %v172
  %215 = vst [vmem:[#allocation2 + $0x280] sm:$0xf0] %v193
  %216 = vst [vmem:[#allocation2 + $0x288] sm:$0xf0] %v173
  %217 = vst [vmem:[#allocation2 + $0x290] sm:$0xf0] %v194
  %218 = vst [vmem:[#allocation2 + $0x298] sm:$0xf0] %v174
  %219 = vst [vmem:[#allocation2 + $0x2a0] sm:$0xf0] %v195
  %220 = vst [vmem:[#allocation2 + $0x2a8] sm:$0xf0] %v175
  %221 = vst [vmem:[#allocation2 + $0x2b0] sm:$0xf0] %v196
  %222 = vst [vmem:[#allocation2 + $0x2b8] sm:$0xf0] %v176
  %223 = vst [vmem:[#allocation2 + $0x2c0] sm:$0xf0] %v197
  %224 = vst [vmem:[#allocation2 + $0x2c8] sm:$0xf0] %v177
  %225 = vst [vmem:[#allocation2 + $0x2d0] sm:$0xf0] %v198
  %226 = vst [vmem:[#allocation2 + $0x2d8] sm:$0xf0] %v178
  %227 = vst [vmem:[#allocation2 + $0x2e0] sm:$0xf0] %v199
  %228 = vst [vmem:[#allocation2 + $0x2e8] sm:$0xf0] %v179
  %229 = vst [vmem:[#allocation2 + $0x2f0] sm:$0xf0] %v200
  %v230 = vld [vmem:[%s0] sm:$0xff]
  %v231 = vld [vmem:[%s0 + $0x8] sm:$0xff]
  %v232 = vld [vmem:[%s0 + $0x10] sm:$0xff]
  %v233 = vld [vmem:[%s0 + $0x18] sm:$0xff]
  %v234 = vld [vmem:[%s0 + $0x20] sm:$0xff]
  %v235 = vld [vmem:[%s0 + $0x28] sm:$0xff]
  %v236 = vld [vmem:[%s0 + $0x30] sm:$0xff]
  %v237 = vld [vmem:[%s0 + $0x38] sm:$0xff]
  %v238 = vld [vmem:[%s0 + $0x40] sm:$0xff]
  %v239 = vld [vmem:[%s0 + $0x48] sm:$0xff]
  %v250 = vcombine.low %v230, %v230
  %v251 = vcombine.low %v231, %v231
  %v252 = vcombine.low %v232, %v232
  %v253 = vcombine.low %v233, %v233
  %v254 = vcombine.low %v234, %v234
  %v255 = vcombine.low %v235, %v235
  %v256 = vcombine.low %v236, %v236
  %v257 = vcombine.low %v237, %v237
  %v258 = vcombine.low %v238, %v238
  %v259 = vcombine.low %v239, %v239
  %260 = vrot.lane.b32.xlu0 %v250, 90
  %v261 = vpop.permute.xlu0 %260
  %262 = vrot.lane.b32.xlu0 %v230, 90
  %v263 = vpop.permute.xlu0 %262
  %264 = vrot.lane.b32.xlu0 %v251, 90
  %v265 = vpop.permute.xlu0 %264
  %266 = vrot.lane.b32.xlu0 %v231, 90
  %v267 = vpop.permute.xlu0 %266
  %268 = vrot.lane.b32.xlu0 %v252, 90
  %v269 = vpop.permute.xlu0 %268
  %270 = vrot.lane.b32.xlu0 %v232, 90
  %v271 = vpop.permute.xlu0 %270
  %272 = vrot.lane.b32.xlu0 %v253, 90
  %v273 = vpop.permute.xlu0 %272
  %274 = vrot.lane.b32.xlu0 %v233, 90
  %v275 = vpop.permute.xlu0 %274
  %276 = vrot.lane.b32.xlu0 %v254, 90
  %v277 = vpop.permute.xlu0 %276
  %278 = vrot.lane.b32.xlu0 %v234, 90
  %v279 = vpop.permute.xlu0 %278
  %280 = vrot.lane.b32.xlu0 %v255, 90
  %v281 = vpop.permute.xlu0 %280
  %282 = vrot.lane.b32.xlu0 %v235, 90
  %v283 = vpop.permute.xlu0 %282
  %284 = vrot.lane.b32.xlu0 %v256, 90
  %v285 = vpop.permute.xlu0 %284
  %286 = vrot.lane.b32.xlu0 %v236, 90
  %v287 = vpop.permute.xlu0 %286
  %288 = vrot.lane.b32.xlu0 %v257, 90
  %v289 = vpop.permute.xlu0 %288
  %290 = vrot.lane.b32.xlu0 %v237, 90
  %v291 = vpop.permute.xlu0 %290
  %292 = vrot.lane.b32.xlu0 %v258, 90
  %v293 = vpop.permute.xlu0 %292
  %294 = vrot.lane.b32.xlu0 %v238, 90
  %v295 = vpop.permute.xlu0 %294
  %296 = vrot.lane.b32.xlu0 %v259, 90
  %v297 = vpop.permute.xlu0 %296
  %298 = vrot.lane.b32.xlu0 %v239, 90
  %v299 = vpop.permute.xlu0 %298
  %vm300 = vcmask 736256
  %v301 = vsel %vm300, %v261, %v263
  %v302 = vsel %vm300, %v263, %v265
  %v303 = vsel %vm300, %v265, %v267
  %v304 = vsel %vm300, %v267, %v269
  %v305 = vsel %vm300, %v269, %v271
  %v306 = vsel %vm300, %v271, %v273
  %v307 = vsel %vm300, %v273, %v275
  %v308 = vsel %vm300, %v275, %v277
  %v309 = vsel %vm300, %v277, %v279
  %v310 = vsel %vm300, %v279, %v281
  %v311 = vsel %vm300, %v281, %v283
  %v312 = vsel %vm300, %v283, %v285
  %v313 = vsel %vm300, %v285, %v287
  %v314 = vsel %vm300, %v287, %v289
  %v315 = vsel %vm300, %v289, %v291
  %v316 = vsel %vm300, %v291, %v293
  %v317 = vsel %vm300, %v293, %v295
  %v318 = vsel %vm300, %v295, %v297
  %v319 = vsel %vm300, %v297, %v299
  %339 = vst [vmem:[#allocation2] sm:$0xf0] %v301
  %340 = vst [vmem:[#allocation2 + $0x8] sm:$0xf0] %v302
  %341 = vst [vmem:[#allocation2 + $0x10] sm:$0xf0] %v303
  %342 = vst [vmem:[#allocation2 + $0x18] sm:$0xf0] %v304
  %343 = vst [vmem:[#allocation2 + $0x20] sm:$0xf0] %v305
  %344 = vst [vmem:[#allocation2 + $0x28] sm:$0xf0] %v306
  %345 = vst [vmem:[#allocation2 + $0x30] sm:$0xf0] %v307
  %346 = vst [vmem:[#allocation2 + $0x38] sm:$0xf0] %v308
  %347 = vst [vmem:[#allocation2 + $0x40] sm:$0xf0] %v309
  %348 = vst [vmem:[#allocation2 + $0x48] sm:$0xf0] %v310
  %349 = vst [vmem:[#allocation2 + $0x50] sm:$0xf0] %v311
  %350 = vst [vmem:[#allocation2 + $0x58] sm:$0xf0] %v312
  %351 = vst [vmem:[#allocation2 + $0x60] sm:$0xf0] %v313
  %352 = vst [vmem:[#allocation2 + $0x68] sm:$0xf0] %v314
  %353 = vst [vmem:[#allocation2 + $0x70] sm:$0xf0] %v315
  %354 = vst [vmem:[#allocation2 + $0x78] sm:$0xf0] %v316
  %355 = vst [vmem:[#allocation2 + $0x80] sm:$0xf0] %v317
  %356 = vst [vmem:[#allocation2 + $0x88] sm:$0xf0] %v318
  %357 = vst [vmem:[#allocation2 + $0x90] sm:$0xf0] %v319
  %v358 = vld [vmem:[%s1] sm:$0xff]
  %v359 = vld [vmem:[%s1 + $0x8] sm:$0xff]
  %v360 = vld [vmem:[%s1 + $0x10] sm:$0xff]
  %v361 = vld [vmem:[%s1 + $0x18] sm:$0xff]
  %v362 = vld [vmem:[%s1 + $0x20] sm:$0xff]
  %v363 = vld [vmem:[%s1 + $0x28] sm:$0xff]
  %v364 = vld [vmem:[%s1 + $0x30] sm:$0xff]
  %v365 = vld [vmem:[%s1 + $0x38] sm:$0xff]
  %v366 = vld [vmem:[%s1 + $0x40] sm:$0xff]
  %v367 = vld [vmem:[%s1 + $0x48] sm:$0xff]
  %v378 = vcombine.high %v358, %v358
  %v379 = vcombine.high %v359, %v359
  %v380 = vcombine.high %v360, %v360
  %v381 = vcombine.high %v361, %v361
  %v382 = vcombine.high %v362, %v362
  %v383 = vcombine.high %v363, %v363
  %v384 = vcombine.high %v364, %v364
  %v385 = vcombine.high %v365, %v365
  %v386 = vcombine.high %v366, %v366
  %v387 = vcombine.high %v367, %v367
  %388 = vrot.lane.b32.xlu0 %v358, 126
  %v389 = vpop.permute.xlu0 %388
  %390 = vrot.lane.b32.xlu0 %v378, 126
  %v391 = vpop.permute.xlu0 %390
  %392 = vrot.lane.b32.xlu0 %v359, 126
  %v393 = vpop.permute.xlu0 %392
  %394 = vrot.lane.b32.xlu0 %v379, 126
  %v395 = vpop.permute.xlu0 %394
  %396 = vrot.lane.b32.xlu0 %v360, 126
  %v397 = vpop.permute.xlu0 %396
  %398 = vrot.lane.b32.xlu0 %v380, 126
  %v399 = vpop.permute.xlu0 %398
  %400 = vrot.lane.b32.xlu0 %v361, 126
  %v401 = vpop.permute.xlu0 %400
  %402 = vrot.lane.b32.xlu0 %v381, 126
  %v403 = vpop.permute.xlu0 %402
  %404 = vrot.lane.b32.xlu0 %v362, 126
  %v405 = vpop.permute.xlu0 %404
  %406 = vrot.lane.b32.xlu0 %v382, 126
  %v407 = vpop.permute.xlu0 %406
  %408 = vrot.lane.b32.xlu0 %v363, 126
  %v409 = vpop.permute.xlu0 %408
  %410 = vrot.lane.b32.xlu0 %v383, 126
  %v411 = vpop.permute.xlu0 %410
  %412 = vrot.lane.b32.xlu0 %v364, 126
  %v413 = vpop.permute.xlu0 %412
  %414 = vrot.lane.b32.xlu0 %v384, 126
  %v415 = vpop.permute.xlu0 %414
  %416 = vrot.lane.b32.xlu0 %v365, 126
  %v417 = vpop.permute.xlu0 %416
  %418 = vrot.lane.b32.xlu0 %v385, 126
  %v419 = vpop.permute.xlu0 %418
  %420 = vrot.lane.b32.xlu0 %v366, 126
  %v421 = vpop.permute.xlu0 %420
  %422 = vrot.lane.b32.xlu0 %v386, 126
  %v423 = vpop.permute.xlu0 %422
  %424 = vrot.lane.b32.xlu0 %v367, 126
  %v425 = vpop.permute.xlu0 %424
  %426 = vrot.lane.b32.xlu0 %v387, 126
  %v427 = vpop.permute.xlu0 %426
  %vm428 = vcmask 1031168
  %v429 = vsel %vm428, %v389, %v391
  %v430 = vsel %vm428, %v391, %v393
  %v431 = vsel %vm428, %v393, %v395
  %v432 = vsel %vm428, %v395, %v397
  %v433 = vsel %vm428, %v397, %v399
  %v434 = vsel %vm428, %v399, %v401
  %v435 = vsel %vm428, %v401, %v403
  %v436 = vsel %vm428, %v403, %v405
  %v437 = vsel %vm428, %v405, %v407
  %v438 = vsel %vm428, %v407, %v409
  %v439 = vsel %vm428, %v409, %v411
  %v440 = vsel %vm428, %v411, %v413
  %v441 = vsel %vm428, %v413, %v415
  %v442 = vsel %vm428, %v415, %v417
  %v443 = vsel %vm428, %v417, %v419
  %v444 = vsel %vm428, %v419, %v421
  %v445 = vsel %vm428, %v421, %v423
  %v446 = vsel %vm428, %v423, %v425
  %v447 = vsel %vm428, %v425, %v427
  %467 = vst [vmem:[#allocation2 + $0x2f8] sm:$0xf] %v429
  %468 = vst [vmem:[#allocation2 + $0x300] sm:$0xf] %v430
  %469 = vst [vmem:[#allocation2 + $0x308] sm:$0xf] %v431
  %470 = vst [vmem:[#allocation2 + $0x310] sm:$0xf] %v432
  %471 = vst [vmem:[#allocation2 + $0x318] sm:$0xf] %v433
  %472 = vst [vmem:[#allocation2 + $0x320] sm:$0xf] %v434
  %473 = vst [vmem:[#allocation2 + $0x328] sm:$0xf] %v435
  %474 = vst [vmem:[#allocation2 + $0x330] sm:$0xf] %v436
  %475 = vst [vmem:[#allocation2 + $0x338] sm:$0xf] %v437
  %476 = vst [vmem:[#allocation2 + $0x340] sm:$0xf] %v438
  %477 = vst [vmem:[#allocation2 + $0x348] sm:$0xf] %v439
  %478 = vst [vmem:[#allocation2 + $0x350] sm:$0xf] %v440
  %479 = vst [vmem:[#allocation2 + $0x358] sm:$0xf] %v441
  %480 = vst [vmem:[#allocation2 + $0x360] sm:$0xf] %v442
  %481 = vst [vmem:[#allocation2 + $0x368] sm:$0xf] %v443
  %482 = vst [vmem:[#allocation2 + $0x370] sm:$0xf] %v444
  %483 = vst [vmem:[#allocation2 + $0x378] sm:$0xf] %v445
  %484 = vst [vmem:[#allocation2 + $0x380] sm:$0xf] %v446
  %485 = vst [vmem:[#allocation2 + $0x388] sm:$0xf] %v447
  %v486 = vld [vmem:[%s0] sm:$0xff]
  %v487 = vld [vmem:[%s0 + $0x8] sm:$0xff]
  %v488 = vld [vmem:[%s0 + $0x10] sm:$0xff]
  %v489 = vld [vmem:[%s0 + $0x18] sm:$0xff]
  %v490 = vld [vmem:[%s0 + $0x20] sm:$0xff]
  %v491 = vld [vmem:[%s0 + $0x28] sm:$0xff]
  %v492 = vld [vmem:[%s0 + $0x30] sm:$0xff]
  %v493 = vld [vmem:[%s0 + $0x38] sm:$0xff]
  %v494 = vld [vmem:[%s0 + $0x40] sm:$0xff]
  %v495 = vld [vmem:[%s0 + $0x48] sm:$0xff]
  %v506 = vcombine.high %v486, %v486
  %v507 = vcombine.high %v487, %v487
  %v508 = vcombine.high %v488, %v488
  %v509 = vcombine.high %v489, %v489
  %v510 = vcombine.high %v490, %v490
  %v511 = vcombine.high %v491, %v491
  %v512 = vcombine.high %v492, %v492
  %v513 = vcombine.high %v493, %v493
  %v514 = vcombine.high %v494, %v494
  %v515 = vcombine.high %v495, %v495
  %516 = vrot.lane.b32.xlu0 %v486, 89
  %v517 = vpop.permute.xlu0 %516
  %518 = vrot.lane.b32.xlu0 %v506, 89
  %v519 = vpop.permute.xlu0 %518
  %520 = vrot.lane.b32.xlu0 %v487, 89
  %v521 = vpop.permute.xlu0 %520
  %522 = vrot.lane.b32.xlu0 %v507, 89
  %v523 = vpop.permute.xlu0 %522
  %524 = vrot.lane.b32.xlu0 %v488, 89
  %v525 = vpop.permute.xlu0 %524
  %526 = vrot.lane.b32.xlu0 %v508, 89
  %v527 = vpop.permute.xlu0 %526
  %528 = vrot.lane.b32.xlu0 %v489, 89
  %v529 = vpop.permute.xlu0 %528
  %530 = vrot.lane.b32.xlu0 %v509, 89
  %v531 = vpop.permute.xlu0 %530
  %532 = vrot.lane.b32.xlu0 %v490, 89
  %v533 = vpop.permute.xlu0 %532
  %534 = vrot.lane.b32.xlu0 %v510, 89
  %v535 = vpop.permute.xlu0 %534
  %536 = vrot.lane.b32.xlu0 %v491, 89
  %v537 = vpop.permute.xlu0 %536
  %538 = vrot.lane.b32.xlu0 %v511, 89
  %v539 = vpop.permute.xlu0 %538
  %540 = vrot.lane.b32.xlu0 %v492, 89
  %v541 = vpop.permute.xlu0 %540
  %542 = vrot.lane.b32.xlu0 %v512, 89
  %v543 = vpop.permute.xlu0 %542
  %544 = vrot.lane.b32.xlu0 %v493, 89
  %v545 = vpop.permute.xlu0 %544
  %546 = vrot.lane.b32.xlu0 %v513, 89
  %v547 = vpop.permute.xlu0 %546
  %548 = vrot.lane.b32.xlu0 %v494, 89
  %v549 = vpop.permute.xlu0 %548
  %550 = vrot.lane.b32.xlu0 %v514, 89
  %v551 = vpop.permute.xlu0 %550
  %552 = vrot.lane.b32.xlu0 %v495, 89
  %v553 = vpop.permute.xlu0 %552
  %554 = vrot.lane.b32.xlu0 %v515, 89
  %v555 = vpop.permute.xlu0 %554
  %vm556 = vcmask 728064
  %v557 = vsel %vm556, %v517, %v519
  %v558 = vsel %vm556, %v519, %v521
  %v559 = vsel %vm556, %v521, %v523
  %v560 = vsel %vm556, %v523, %v525
  %v561 = vsel %vm556, %v525, %v527
  %v562 = vsel %vm556, %v527, %v529
  %v563 = vsel %vm556, %v529, %v531
  %v564 = vsel %vm556, %v531, %v533
  %v565 = vsel %vm556, %v533, %v535
  %v566 = vsel %vm556, %v535, %v537
  %v567 = vsel %vm556, %v537, %v539
  %v568 = vsel %vm556, %v539, %v541
  %v569 = vsel %vm556, %v541, %v543
  %v570 = vsel %vm556, %v543, %v545
  %v571 = vsel %vm556, %v545, %v547
  %v572 = vsel %vm556, %v547, %v549
  %v573 = vsel %vm556, %v549, %v551
  %v574 = vsel %vm556, %v551, %v553
  %v575 = vsel %vm556, %v553, %v555
  %595 = vst [vmem:[#allocation2 + $0x98] sm:$0xf] %v557
  %596 = vst [vmem:[#allocation2 + $0xa0] sm:$0xf] %v558
  %597 = vst [vmem:[#allocation2 + $0xa8] sm:$0xf] %v559
  %598 = vst [vmem:[#allocation2 + $0xb0] sm:$0xf] %v560
  %599 = vst [vmem:[#allocation2 + $0xb8] sm:$0xf] %v561
  %600 = vst [vmem:[#allocation2 + $0xc0] sm:$0xf] %v562
  %601 = vst [vmem:[#allocation2 + $0xc8] sm:$0xf] %v563
  %602 = vst [vmem:[#allocation2 + $0xd0] sm:$0xf] %v564
  %603 = vst [vmem:[#allocation2 + $0xd8] sm:$0xf] %v565
  %604 = vst [vmem:[#allocation2 + $0xe0] sm:$0xf] %v566
  %605 = vst [vmem:[#allocation2 + $0xe8] sm:$0xf] %v567
  %606 = vst [vmem:[#allocation2 + $0xf0] sm:$0xf] %v568
  %607 = vst [vmem:[#allocation2 + $0xf8] sm:$0xf] %v569
  %608 = vst [vmem:[#allocation2 + $0x100] sm:$0xf] %v570
  %609 = vst [vmem:[#allocation2 + $0x108] sm:$0xf] %v571
  %610 = vst [vmem:[#allocation2 + $0x110] sm:$0xf] %v572
  %611 = vst [vmem:[#allocation2 + $0x118] sm:$0xf] %v573
  %612 = vst [vmem:[#allocation2 + $0x120] sm:$0xf] %v574
  %613 = vst [vmem:[#allocation2 + $0x128] sm:$0xf] %v575
  %v614 = vld [vmem:[%s1] sm:$0xff]
  %v615 = vld [vmem:[%s1 + $0x8] sm:$0xff]
  %v616 = vld [vmem:[%s1 + $0x10] sm:$0xff]
  %v617 = vld [vmem:[%s1 + $0x18] sm:$0xff]
  %v618 = vld [vmem:[%s1 + $0x20] sm:$0xff]
  %v619 = vld [vmem:[%s1 + $0x28] sm:$0xff]
  %v620 = vld [vmem:[%s1 + $0x30] sm:$0xff]
  %v621 = vld [vmem:[%s1 + $0x38] sm:$0xff]
  %v622 = vld [vmem:[%s1 + $0x40] sm:$0xff]
  %v623 = vld [vmem:[%s1 + $0x48] sm:$0xff]
  %v634 = vcombine.low %v614, %v614
  %v635 = vcombine.low %v615, %v615
  %v636 = vcombine.low %v616, %v616
  %v637 = vcombine.low %v617, %v617
  %v638 = vcombine.low %v618, %v618
  %v639 = vcombine.low %v619, %v619
  %v640 = vcombine.low %v620, %v620
  %v641 = vcombine.low %v621, %v621
  %v642 = vcombine.low %v622, %v622
  %v643 = vcombine.low %v623, %v623
  %644 = vrot.lane.b32.xlu0 %v634, 124
  %v645 = vpop.permute.xlu0 %644
  %646 = vrot.lane.b32.xlu0 %v614, 124
  %v647 = vpop.permute.xlu0 %646
  %648 = vrot.lane.b32.xlu0 %v635, 124
  %v649 = vpop.permute.xlu0 %648
  %650 = vrot.lane.b32.xlu0 %v615, 124
  %v651 = vpop.permute.xlu0 %650
  %652 = vrot.lane.b32.xlu0 %v636, 124
  %v653 = vpop.permute.xlu0 %652
  %654 = vrot.lane.b32.xlu0 %v616, 124
  %v655 = vpop.permute.xlu0 %654
  %656 = vrot.lane.b32.xlu0 %v637, 124
  %v657 = vpop.permute.xlu0 %656
  %658 = vrot.lane.b32.xlu0 %v617, 124
  %v659 = vpop.permute.xlu0 %658
  %660 = vrot.lane.b32.xlu0 %v638, 124
  %v661 = vpop.permute.xlu0 %660
  %662 = vrot.lane.b32.xlu0 %v618, 124
  %v663 = vpop.permute.xlu0 %662
  %664 = vrot.lane.b32.xlu0 %v639, 124
  %v665 = vpop.permute.xlu0 %664
  %666 = vrot.lane.b32.xlu0 %v619, 124
  %v667 = vpop.permute.xlu0 %666
  %668 = vrot.lane.b32.xlu0 %v640, 124
  %v669 = vpop.permute.xlu0 %668
  %670 = vrot.lane.b32.xlu0 %v620, 124
  %v671 = vpop.permute.xlu0 %670
  %672 = vrot.lane.b32.xlu0 %v641, 124
  %v673 = vpop.permute.xlu0 %672
  %674 = vrot.lane.b32.xlu0 %v621, 124
  %v675 = vpop.permute.xlu0 %674
  %676 = vrot.lane.b32.xlu0 %v642, 124
  %v677 = vpop.permute.xlu0 %676
  %678 = vrot.lane.b32.xlu0 %v622, 124
  %v679 = vpop.permute.xlu0 %678
  %680 = vrot.lane.b32.xlu0 %v643, 124
  %v681 = vpop.permute.xlu0 %680
  %682 = vrot.lane.b32.xlu0 %v623, 124
  %v683 = vpop.permute.xlu0 %682
  %vm684 = vcmask 1014784
  %v685 = vsel %vm684, %v645, %v647
  %v686 = vsel %vm684, %v647, %v649
  %v687 = vsel %vm684, %v649, %v651
  %v688 = vsel %vm684, %v651, %v653
  %v689 = vsel %vm684, %v653, %v655
  %v690 = vsel %vm684, %v655, %v657
  %v691 = vsel %vm684, %v657, %v659
  %v692 = vsel %vm684, %v659, %v661
  %v693 = vsel %vm684, %v661, %v663
  %v694 = vsel %vm684, %v663, %v665
  %v695 = vsel %vm684, %v665, %v667
  %v696 = vsel %vm684, %v667, %v669
  %v697 = vsel %vm684, %v669, %v671
  %v698 = vsel %vm684, %v671, %v673
  %v699 = vsel %vm684, %v673, %v675
  %v700 = vsel %vm684, %v675, %v677
  %v701 = vsel %vm684, %v677, %v679
  %v702 = vsel %vm684, %v679, %v681
  %v703 = vsel %vm684, %v681, %v683
  %723 = vst [vmem:[#allocation2 + $0x2f8] sm:$0xf0] %v685
  %724 = vst [vmem:[#allocation2 + $0x300] sm:$0xf0] %v686
  %725 = vst [vmem:[#allocation2 + $0x308] sm:$0xf0] %v687
  %726 = vst [vmem:[#allocation2 + $0x310] sm:$0xf0] %v688
  %727 = vst [vmem:[#allocation2 + $0x318] sm:$0xf0] %v689
  %728 = vst [vmem:[#allocation2 + $0x320] sm:$0xf0] %v690
  %729 = vst [vmem:[#allocation2 + $0x328] sm:$0xf0] %v691
  %730 = vst [vmem:[#allocation2 + $0x330] sm:$0xf0] %v692
  %731 = vst [vmem:[#allocation2 + $0x338] sm:$0xf0] %v693
  %732 = vst [vmem:[#allocation2 + $0x340] sm:$0xf0] %v694
  %733 = vst [vmem:[#allocation2 + $0x348] sm:$0xf0] %v695
  %734 = vst [vmem:[#allocation2 + $0x350] sm:$0xf0] %v696
  %735 = vst [vmem:[#allocation2 + $0x358] sm:$0xf0] %v697
  %736 = vst [vmem:[#allocation2 + $0x360] sm:$0xf0] %v698
  %737 = vst [vmem:[#allocation2 + $0x368] sm:$0xf0] %v699
  %738 = vst [vmem:[#allocation2 + $0x370] sm:$0xf0] %v700
  %739 = vst [vmem:[#allocation2 + $0x378] sm:$0xf0] %v701
  %740 = vst [vmem:[#allocation2 + $0x380] sm:$0xf0] %v702
  %741 = vst [vmem:[#allocation2 + $0x388] sm:$0xf0] %v703
  %v742 = vld [vmem:[%s0] sm:$0xff]
  %v743 = vld [vmem:[%s0 + $0x8] sm:$0xff]
  %v744 = vld [vmem:[%s0 + $0x10] sm:$0xff]
  %v745 = vld [vmem:[%s0 + $0x18] sm:$0xff]
  %v746 = vld [vmem:[%s0 + $0x20] sm:$0xff]
  %v747 = vld [vmem:[%s0 + $0x28] sm:$0xff]
  %v748 = vld [vmem:[%s0 + $0x30] sm:$0xff]
  %v749 = vld [vmem:[%s0 + $0x38] sm:$0xff]
  %v750 = vld [vmem:[%s0 + $0x40] sm:$0xff]
  %v751 = vld [vmem:[%s0 + $0x48] sm:$0xff]
  %v762 = vcombine.low %v742, %v742
  %v763 = vcombine.low %v743, %v743
  %v764 = vcombine.low %v744, %v744
  %v765 = vcombine.low %v745, %v745
  %v766 = vcombine.low %v746, %v746
  %v767 = vcombine.low %v747, %v747
  %v768 = vcombine.low %v748, %v748
  %v769 = vcombine.low %v749, %v749
  %v770 = vcombine.low %v750, %v750
  %v771 = vcombine.low %v751, %v751
  %772 = vrot.lane.b32.xlu0 %v762, 55
  %v773 = vpop.permute.xlu0 %772
  %774 = vrot.lane.b32.xlu0 %v742, 55
  %v775 = vpop.permute.xlu0 %774
  %776 = vrot.lane.b32.xlu0 %v763, 55
  %v777 = vpop.permute.xlu0 %776
  %778 = vrot.lane.b32.xlu0 %v743, 55
  %v779 = vpop.permute.xlu0 %778
  %780 = vrot.lane.b32.xlu0 %v764, 55
  %v781 = vpop.permute.xlu0 %780
  %782 = vrot.lane.b32.xlu0 %v744, 55
  %v783 = vpop.permute.xlu0 %782
  %784 = vrot.lane.b32.xlu0 %v765, 55
  %v785 = vpop.permute.xlu0 %784
  %786 = vrot.lane.b32.xlu0 %v745, 55
  %v787 = vpop.permute.xlu0 %786
  %788 = vrot.lane.b32.xlu0 %v766, 55
  %v789 = vpop.permute.xlu0 %788
  %790 = vrot.lane.b32.xlu0 %v746, 55
  %v791 = vpop.permute.xlu0 %790
  %792 = vrot.lane.b32.xlu0 %v767, 55
  %v793 = vpop.permute.xlu0 %792
  %794 = vrot.lane.b32.xlu0 %v747, 55
  %v795 = vpop.permute.xlu0 %794
  %796 = vrot.lane.b32.xlu0 %v768, 55
  %v797 = vpop.permute.xlu0 %796
  %798 = vrot.lane.b32.xlu0 %v748, 55
  %v799 = vpop.permute.xlu0 %798
  %800 = vrot.lane.b32.xlu0 %v769, 55
  %v801 = vpop.permute.xlu0 %800
  %802 = vrot.lane.b32.xlu0 %v749, 55
  %v803 = vpop.permute.xlu0 %802
  %804 = vrot.lane.b32.xlu0 %v770, 55
  %v805 = vpop.permute.xlu0 %804
  %806 = vrot.lane.b32.xlu0 %v750, 55
  %v807 = vpop.permute.xlu0 %806
  %808 = vrot.lane.b32.xlu0 %v771, 55
  %v809 = vpop.permute.xlu0 %808
  %810 = vrot.lane.b32.xlu0 %v751, 55
  %v811 = vpop.permute.xlu0 %810
  %vm812 = vcmask 449536
  %v813 = vsel %vm812, %v773, %v775
  %v814 = vsel %vm812, %v775, %v777
  %v815 = vsel %vm812, %v777, %v779
  %v816 = vsel %vm812, %v779, %v781
  %v817 = vsel %vm812, %v781, %v783
  %v818 = vsel %vm812, %v783, %v785
  %v819 = vsel %vm812, %v785, %v787
  %v820 = vsel %vm812, %v787, %v789
  %v821 = vsel %vm812, %v789, %v791
  %v822 = vsel %vm812, %v791, %v793
  %v823 = vsel %vm812, %v793, %v795
  %v824 = vsel %vm812, %v795, %v797
  %v825 = vsel %vm812, %v797, %v799
  %v826 = vsel %vm812, %v799, %v801
  %v827 = vsel %vm812, %v801, %v803
  %v828 = vsel %vm812, %v803, %v805
  %v829 = vsel %vm812, %v805, %v807
  %v830 = vsel %vm812, %v807, %v809
  %v831 = vsel %vm812, %v809, %v811
  %851 = vst [vmem:[#allocation2 + $0x98] sm:$0xf0] %v813
  %852 = vst [vmem:[#allocation2 + $0xa0] sm:$0xf0] %v814
  %853 = vst [vmem:[#allocation2 + $0xa8] sm:$0xf0] %v815
  %854 = vst [vmem:[#allocation2 + $0xb0] sm:$0xf0] %v816
  %855 = vst [vmem:[#allocation2 + $0xb8] sm:$0xf0] %v817
  %856 = vst [vmem:[#allocation2 + $0xc0] sm:$0xf0] %v818
  %857 = vst [vmem:[#allocation2 + $0xc8] sm:$0xf0] %v819
  %858 = vst [vmem:[#allocation2 + $0xd0] sm:$0xf0] %v820
  %859 = vst [vmem:[#allocation2 + $0xd8] sm:$0xf0] %v821
  %860 = vst [vmem:[#allocation2 + $0xe0] sm:$0xf0] %v822
  %861 = vst [vmem:[#allocation2 + $0xe8] sm:$0xf0] %v823
  %862 = vst [vmem:[#allocation2 + $0xf0] sm:$0xf0] %v824
  %863 = vst [vmem:[#allocation2 + $0xf8] sm:$0xf0] %v825
  %864 = vst [vmem:[#allocation2 + $0x100] sm:$0xf0] %v826
  %865 = vst [vmem:[#allocation2 + $0x108] sm:$0xf0] %v827
  %866 = vst [vmem:[#allocation2 + $0x110] sm:$0xf0] %v828
  %867 = vst [vmem:[#allocation2 + $0x118] sm:$0xf0] %v829
  %868 = vst [vmem:[#allocation2 + $0x120] sm:$0xf0] %v830
  %869 = vst [vmem:[#allocation2 + $0x128] sm:$0xf0] %v831
  %v870 = vld [vmem:[%s1] sm:$0xff]
  %v871 = vld [vmem:[%s1 + $0x8] sm:$0xff]
  %v872 = vld [vmem:[%s1 + $0x10] sm:$0xff]
  %v873 = vld [vmem:[%s1 + $0x18] sm:$0xff]
  %v874 = vld [vmem:[%s1 + $0x20] sm:$0xff]
  %v875 = vld [vmem:[%s1 + $0x28] sm:$0xff]
  %v876 = vld [vmem:[%s1 + $0x30] sm:$0xff]
  %v877 = vld [vmem:[%s1 + $0x38] sm:$0xff]
  %v878 = vld [vmem:[%s1 + $0x40] sm:$0xff]
  %v879 = vld [vmem:[%s1 + $0x48] sm:$0xff]
  %v890 = vcombine.high %v870, %v870
  %v891 = vcombine.high %v871, %v871
  %v892 = vcombine.high %v872, %v872
  %v893 = vcombine.high %v873, %v873
  %v894 = vcombine.high %v874, %v874
  %v895 = vcombine.high %v875, %v875
  %v896 = vcombine.high %v876, %v876
  %v897 = vcombine.high %v877, %v877
  %v898 = vcombine.high %v878, %v878
  %v899 = vcombine.high %v879, %v879
  %900 = vrot.lane.b32.xlu0 %v870, 56
  %v901 = vpop.permute.xlu0 %900
  %902 = vrot.lane.b32.xlu0 %v890, 56
  %v903 = vpop.permute.xlu0 %902
  %904 = vrot.lane.b32.xlu0 %v871, 56
  %v905 = vpop.permute.xlu0 %904
  %906 = vrot.lane.b32.xlu0 %v891, 56
  %v907 = vpop.permute.xlu0 %906
  %908 = vrot.lane.b32.xlu0 %v872, 56
  %v909 = vpop.permute.xlu0 %908
  %910 = vrot.lane.b32.xlu0 %v892, 56
  %v911 = vpop.permute.xlu0 %910
  %912 = vrot.lane.b32.xlu0 %v873, 56
  %v913 = vpop.permute.xlu0 %912
  %914 = vrot.lane.b32.xlu0 %v893, 56
  %v915 = vpop.permute.xlu0 %914
  %916 = vrot.lane.b32.xlu0 %v874, 56
  %v917 = vpop.permute.xlu0 %916
  %918 = vrot.lane.b32.xlu0 %v894, 56
  %v919 = vpop.permute.xlu0 %918
  %920 = vrot.lane.b32.xlu0 %v875, 56
  %v921 = vpop.permute.xlu0 %920
  %922 = vrot.lane.b32.xlu0 %v895, 56
  %v923 = vpop.permute.xlu0 %922
  %924 = vrot.lane.b32.xlu0 %v876, 56
  %v925 = vpop.permute.xlu0 %924
  %926 = vrot.lane.b32.xlu0 %v896, 56
  %v927 = vpop.permute.xlu0 %926
  %928 = vrot.lane.b32.xlu0 %v877, 56
  %v929 = vpop.permute.xlu0 %928
  %930 = vrot.lane.b32.xlu0 %v897, 56
  %v931 = vpop.permute.xlu0 %930
  %932 = vrot.lane.b32.xlu0 %v878, 56
  %v933 = vpop.permute.xlu0 %932
  %934 = vrot.lane.b32.xlu0 %v898, 56
  %v935 = vpop.permute.xlu0 %934
  %936 = vrot.lane.b32.xlu0 %v879, 56
  %v937 = vpop.permute.xlu0 %936
  %938 = vrot.lane.b32.xlu0 %v899, 56
  %v939 = vpop.permute.xlu0 %938
  %vm940 = vcmask 457728
  %v941 = vsel %vm940, %v901, %v903
  %v942 = vsel %vm940, %v903, %v905
  %v943 = vsel %vm940, %v905, %v907
  %v944 = vsel %vm940, %v907, %v909
  %v945 = vsel %vm940, %v909, %v911
  %v946 = vsel %vm940, %v911, %v913
  %v947 = vsel %vm940, %v913, %v915
  %v948 = vsel %vm940, %v915, %v917
  %v949 = vsel %vm940, %v917, %v919
  %v950 = vsel %vm940, %v919, %v921
  %v951 = vsel %vm940, %v921, %v923
  %v952 = vsel %vm940, %v923, %v925
  %v953 = vsel %vm940, %v925, %v927
  %v954 = vsel %vm940, %v927, %v929
  %v955 = vsel %vm940, %v929, %v931
  %v956 = vsel %vm940, %v931, %v933
  %v957 = vsel %vm940, %v933, %v935
  %v958 = vsel %vm940, %v935, %v937
  %v959 = vsel %vm940, %v937, %v939
  %979 = vst [vmem:[#allocation2 + $0x390] sm:$0xf] %v941
  %980 = vst [vmem:[#allocation2 + $0x398] sm:$0xf] %v942
  %981 = vst [vmem:[#allocation2 + $0x3a0] sm:$0xf] %v943
  %982 = vst [vmem:[#allocation2 + $0x3a8] sm:$0xf] %v944
  %983 = vst [vmem:[#allocation2 + $0x3b0] sm:$0xf] %v945
  %984 = vst [vmem:[#allocation2 + $0x3b8] sm:$0xf] %v946
  %985 = vst [vmem:[#allocation2 + $0x3c0] sm:$0xf] %v947
  %986 = vst [vmem:[#allocation2 + $0x3c8] sm:$0xf] %v948
  %987 = vst [vmem:[#allocation2 + $0x3d0] sm:$0xf] %v949
  %988 = vst [vmem:[#allocation2 + $0x3d8] sm:$0xf] %v950
  %989 = vst [vmem:[#allocation2 + $0x3e0] sm:$0xf] %v951
  %990 = vst [vmem:[#allocation2 + $0x3e8] sm:$0xf] %v952
  %991 = vst [vmem:[#allocation2 + $0x3f0] sm:$0xf] %v953
  %992 = vst [vmem:[#allocation2 + $0x3f8] sm:$0xf] %v954
  %993 = vst [vmem:[#allocation2 + $0x400] sm:$0xf] %v955
  %994 = vst [vmem:[#allocation2 + $0x408] sm:$0xf] %v956
  %995 = vst [vmem:[#allocation2 + $0x410] sm:$0xf] %v957
  %996 = vst [vmem:[#allocation2 + $0x418] sm:$0xf] %v958
  %997 = vst [vmem:[#allocation2 + $0x420] sm:$0xf] %v959
  %v998 = vld [vmem:[%s0] sm:$0xff]
  %v999 = vld [vmem:[%s0 + $0x8] sm:$0xff]
  %v1000 = vld [vmem:[%s0 + $0x10] sm:$0xff]
  %v1001 = vld [vmem:[%s0 + $0x18] sm:$0xff]
  %v1002 = vld [vmem:[%s0 + $0x20] sm:$0xff]
  %v1003 = vld [vmem:[%s0 + $0x28] sm:$0xff]
  %v1004 = vld [vmem:[%s0 + $0x30] sm:$0xff]
  %v1005 = vld [vmem:[%s0 + $0x38] sm:$0xff]
  %v1006 = vld [vmem:[%s0 + $0x40] sm:$0xff]
  %v1007 = vld [vmem:[%s0 + $0x48] sm:$0xff]
  %v1018 = vcombine.high %v998, %v998
  %v1019 = vcombine.high %v999, %v999
  %v1020 = vcombine.high %v1000, %v1000
  %v1021 = vcombine.high %v1001, %v1001
  %v1022 = vcombine.high %v1002, %v1002
  %v1023 = vcombine.high %v1003, %v1003
  %v1024 = vcombine.high %v1004, %v1004
  %v1025 = vcombine.high %v1005, %v1005
  %v1026 = vcombine.high %v1006, %v1006
  %v1027 = vcombine.high %v1007, %v1007
  %1028 = vrot.lane.b32.xlu0 %v998, 54
  %v1029 = vpop.permute.xlu0 %1028
  %1030 = vrot.lane.b32.xlu0 %v1018, 54
  %v1031 = vpop.permute.xlu0 %1030
  %1032 = vrot.lane.b32.xlu0 %v999, 54
  %v1033 = vpop.permute.xlu0 %1032
  %1034 = vrot.lane.b32.xlu0 %v1019, 54
  %v1035 = vpop.permute.xlu0 %1034
  %1036 = vrot.lane.b32.xlu0 %v1000, 54
  %v1037 = vpop.permute.xlu0 %1036
  %1038 = vrot.lane.b32.xlu0 %v1020, 54
  %v1039 = vpop.permute.xlu0 %1038
  %1040 = vrot.lane.b32.xlu0 %v1001, 54
  %v1041 = vpop.permute.xlu0 %1040
  %1042 = vrot.lane.b32.xlu0 %v1021, 54
  %v1043 = vpop.permute.xlu0 %1042
  %1044 = vrot.lane.b32.xlu0 %v1002, 54
  %v1045 = vpop.permute.xlu0 %1044
  %1046 = vrot.lane.b32.xlu0 %v1022, 54
  %v1047 = vpop.permute.xlu0 %1046
  %1048 = vrot.lane.b32.xlu0 %v1003, 54
  %v1049 = vpop.permute.xlu0 %1048
  %1050 = vrot.lane.b32.xlu0 %v1023, 54
  %v1051 = vpop.permute.xlu0 %1050
  %1052 = vrot.lane.b32.xlu0 %v1004, 54
  %v1053 = vpop.permute.xlu0 %1052
  %1054 = vrot.lane.b32.xlu0 %v1024, 54
  %v1055 = vpop.permute.xlu0 %1054
  %1056 = vrot.lane.b32.xlu0 %v1005, 54
  %v1057 = vpop.permute.xlu0 %1056
  %1058 = vrot.lane.b32.xlu0 %v1025, 54
  %v1059 = vpop.permute.xlu0 %1058
  %1060 = vrot.lane.b32.xlu0 %v1006, 54
  %v1061 = vpop.permute.xlu0 %1060
  %1062 = vrot.lane.b32.xlu0 %v1026, 54
  %v1063 = vpop.permute.xlu0 %1062
  %1064 = vrot.lane.b32.xlu0 %v1007, 54
  %v1065 = vpop.permute.xlu0 %1064
  %1066 = vrot.lane.b32.xlu0 %v1027, 54
  %v1067 = vpop.permute.xlu0 %1066
  %vm1068 = vcmask 441344
  %v1069 = vsel %vm1068, %v1029, %v1031
  %v1070 = vsel %vm1068, %v1031, %v1033
  %v1071 = vsel %vm1068, %v1033, %v1035
  %v1072 = vsel %vm1068, %v1035, %v1037
  %v1073 = vsel %vm1068, %v1037, %v1039
  %v1074 = vsel %vm1068, %v1039, %v1041
  %v1075 = vsel %vm1068, %v1041, %v1043
  %v1076 = vsel %vm1068, %v1043, %v1045
  %v1077 = vsel %vm1068, %v1045, %v1047
  %v1078 = vsel %vm1068, %v1047, %v1049
  %v1079 = vsel %vm1068, %v1049, %v1051
  %v1080 = vsel %vm1068, %v1051, %v1053
  %v1081 = vsel %vm1068, %v1053, %v1055
  %v1082 = vsel %vm1068, %v1055, %v1057
  %v1083 = vsel %vm1068, %v1057, %v1059
  %v1084 = vsel %vm1068, %v1059, %v1061
  %v1085 = vsel %vm1068, %v1061, %v1063
  %v1086 = vsel %vm1068, %v1063, %v1065
  %v1087 = vsel %vm1068, %v1065, %v1067
  %1107 = vst [vmem:[#allocation2 + $0x130] sm:$0xf] %v1069
  %1108 = vst [vmem:[#allocation2 + $0x138] sm:$0xf] %v1070
  %1109 = vst [vmem:[#allocation2 + $0x140] sm:$0xf] %v1071
  %1110 = vst [vmem:[#allocation2 + $0x148] sm:$0xf] %v1072
  %1111 = vst [vmem:[#allocation2 + $0x150] sm:$0xf] %v1073
  %1112 = vst [vmem:[#allocation2 + $0x158] sm:$0xf] %v1074
  %1113 = vst [vmem:[#allocation2 + $0x160] sm:$0xf] %v1075
  %1114 = vst [vmem:[#allocation2 + $0x168] sm:$0xf] %v1076
  %1115 = vst [vmem:[#allocation2 + $0x170] sm:$0xf] %v1077
  %1116 = vst [vmem:[#allocation2 + $0x178] sm:$0xf] %v1078
  %1117 = vst [vmem:[#allocation2 + $0x180] sm:$0xf] %v1079
  %1118 = vst [vmem:[#allocation2 + $0x188] sm:$0xf] %v1080
  %1119 = vst [vmem:[#allocation2 + $0x190] sm:$0xf] %v1081
  %1120 = vst [vmem:[#allocation2 + $0x198] sm:$0xf] %v1082
  %1121 = vst [vmem:[#allocation2 + $0x1a0] sm:$0xf] %v1083
  %1122 = vst [vmem:[#allocation2 + $0x1a8] sm:$0xf] %v1084
  %1123 = vst [vmem:[#allocation2 + $0x1b0] sm:$0xf] %v1085
  %1124 = vst [vmem:[#allocation2 + $0x1b8] sm:$0xf] %v1086
  %1125 = vst [vmem:[#allocation2 + $0x1c0] sm:$0xf] %v1087
  %v1126 = vld [vmem:[%s1] sm:$0xff]
  %v1127 = vld [vmem:[%s1 + $0x8] sm:$0xff]
  %v1128 = vld [vmem:[%s1 + $0x10] sm:$0xff]
  %v1129 = vld [vmem:[%s1 + $0x18] sm:$0xff]
  %v1130 = vld [vmem:[%s1 + $0x20] sm:$0xff]
  %v1131 = vld [vmem:[%s1 + $0x28] sm:$0xff]
  %v1132 = vld [vmem:[%s1 + $0x30] sm:$0xff]
  %v1133 = vld [vmem:[%s1 + $0x38] sm:$0xff]
  %v1134 = vld [vmem:[%s1 + $0x40] sm:$0xff]
  %v1135 = vld [vmem:[%s1 + $0x48] sm:$0xff]
  %v1146 = vcombine.low %v1126, %v1126
  %v1147 = vcombine.low %v1127, %v1127
  %v1148 = vcombine.low %v1128, %v1128
  %v1149 = vcombine.low %v1129, %v1129
  %v1150 = vcombine.low %v1130, %v1130
  %v1151 = vcombine.low %v1131, %v1131
  %v1152 = vcombine.low %v1132, %v1132
  %v1153 = vcombine.low %v1133, %v1133
  %v1154 = vcombine.low %v1134, %v1134
  %v1155 = vcombine.low %v1135, %v1135
  %1156 = vrot.lane.b32.xlu0 %v1146, 54
  %v1157 = vpop.permute.xlu0 %1156
  %1158 = vrot.lane.b32.xlu0 %v1126, 54
  %v1159 = vpop.permute.xlu0 %1158
  %1160 = vrot.lane.b32.xlu0 %v1147, 54
  %v1161 = vpop.permute.xlu0 %1160
  %1162 = vrot.lane.b32.xlu0 %v1127, 54
  %v1163 = vpop.permute.xlu0 %1162
  %1164 = vrot.lane.b32.xlu0 %v1148, 54
  %v1165 = vpop.permute.xlu0 %1164
  %1166 = vrot.lane.b32.xlu0 %v1128, 54
  %v1167 = vpop.permute.xlu0 %1166
  %1168 = vrot.lane.b32.xlu0 %v1149, 54
  %v1169 = vpop.permute.xlu0 %1168
  %1170 = vrot.lane.b32.xlu0 %v1129, 54
  %v1171 = vpop.permute.xlu0 %1170
  %1172 = vrot.lane.b32.xlu0 %v1150, 54
  %v1173 = vpop.permute.xlu0 %1172
  %1174 = vrot.lane.b32.xlu0 %v1130, 54
  %v1175 = vpop.permute.xlu0 %1174
  %1176 = vrot.lane.b32.xlu0 %v1151, 54
  %v1177 = vpop.permute.xlu0 %1176
  %1178 = vrot.lane.b32.xlu0 %v1131, 54
  %v1179 = vpop.permute.xlu0 %1178
  %1180 = vrot.lane.b32.xlu0 %v1152, 54
  %v1181 = vpop.permute.xlu0 %1180
  %1182 = vrot.lane.b32.xlu0 %v1132, 54
  %v1183 = vpop.permute.xlu0 %1182
  %1184 = vrot.lane.b32.xlu0 %v1153, 54
  %v1185 = vpop.permute.xlu0 %1184
  %1186 = vrot.lane.b32.xlu0 %v1133, 54
  %v1187 = vpop.permute.xlu0 %1186
  %1188 = vrot.lane.b32.xlu0 %v1154, 54
  %v1189 = vpop.permute.xlu0 %1188
  %1190 = vrot.lane.b32.xlu0 %v1134, 54
  %v1191 = vpop.permute.xlu0 %1190
  %1192 = vrot.lane.b32.xlu0 %v1155, 54
  %v1193 = vpop.permute.xlu0 %1192
  %1194 = vrot.lane.b32.xlu0 %v1135, 54
  %v1195 = vpop.permute.xlu0 %1194
  %v1196 = vsel %vm1068, %v1157, %v1159
  %v1197 = vsel %vm1068, %v1159, %v1161
  %v1198 = vsel %vm1068, %v1161, %v1163
  %v1199 = vsel %vm1068, %v1163, %v1165
  %v1200 = vsel %vm1068, %v1165, %v1167
  %v1201 = vsel %vm1068, %v1167, %v1169
  %v1202 = vsel %vm1068, %v1169, %v1171
  %v1203 = vsel %vm1068, %v1171, %v1173
  %v1204 = vsel %vm1068, %v1173, %v1175
  %v1205 = vsel %vm1068, %v1175, %v1177
  %v1206 = vsel %vm1068, %v1177, %v1179
  %v1207 = vsel %vm1068, %v1179, %v1181
  %v1208 = vsel %vm1068, %v1181, %v1183
  %v1209 = vsel %vm1068, %v1183, %v1185
  %v1210 = vsel %vm1068, %v1185, %v1187
  %v1211 = vsel %vm1068, %v1187, %v1189
  %v1212 = vsel %vm1068, %v1189, %v1191
  %v1213 = vsel %vm1068, %v1191, %v1193
  %v1214 = vsel %vm1068, %v1193, %v1195
  %1234 = vst [vmem:[#allocation2 + $0x390] sm:$0xf0] %v1196
  %1235 = vst [vmem:[#allocation2 + $0x398] sm:$0xf0] %v1197
  %1236 = vst [vmem:[#allocation2 + $0x3a0] sm:$0xf0] %v1198
  %1237 = vst [vmem:[#allocation2 + $0x3a8] sm:$0xf0] %v1199
  %1238 = vst [vmem:[#allocation2 + $0x3b0] sm:$0xf0] %v1200
  %1239 = vst [vmem:[#allocation2 + $0x3b8] sm:$0xf0] %v1201
  %1240 = vst [vmem:[#allocation2 + $0x3c0] sm:$0xf0] %v1202
  %1241 = vst [vmem:[#allocation2 + $0x3c8] sm:$0xf0] %v1203
  %1242 = vst [vmem:[#allocation2 + $0x3d0] sm:$0xf0] %v1204
  %1243 = vst [vmem:[#allocation2 + $0x3d8] sm:$0xf0] %v1205
  %1244 = vst [vmem:[#allocation2 + $0x3e0] sm:$0xf0] %v1206
  %1245 = vst [vmem:[#allocation2 + $0x3e8] sm:$0xf0] %v1207
  %1246 = vst [vmem:[#allocation2 + $0x3f0] sm:$0xf0] %v1208
  %1247 = vst [vmem:[#allocation2 + $0x3f8] sm:$0xf0] %v1209
  %1248 = vst [vmem:[#allocation2 + $0x400] sm:$0xf0] %v1210
  %1249 = vst [vmem:[#allocation2 + $0x408] sm:$0xf0] %v1211
  %1250 = vst [vmem:[#allocation2 + $0x410] sm:$0xf0] %v1212
  %1251 = vst [vmem:[#allocation2 + $0x418] sm:$0xf0] %v1213
  %1252 = vst [vmem:[#allocation2 + $0x420] sm:$0xf0] %v1214
  %v1253 = vld [vmem:[%s0] sm:$0xff]
  %v1254 = vld [vmem:[%s0 + $0x8] sm:$0xff]
  %v1255 = vld [vmem:[%s0 + $0x10] sm:$0xff]
  %v1256 = vld [vmem:[%s0 + $0x18] sm:$0xff]
  %v1257 = vld [vmem:[%s0 + $0x20] sm:$0xff]
  %v1258 = vld [vmem:[%s0 + $0x28] sm:$0xff]
  %v1259 = vld [vmem:[%s0 + $0x30] sm:$0xff]
  %v1260 = vld [vmem:[%s0 + $0x38] sm:$0xff]
  %v1261 = vld [vmem:[%s0 + $0x40] sm:$0xff]
  %v1262 = vld [vmem:[%s0 + $0x48] sm:$0xff]
  %v1273 = vcombine.low %v1253, %v1253
  %v1274 = vcombine.low %v1254, %v1254
  %v1275 = vcombine.low %v1255, %v1255
  %v1276 = vcombine.low %v1256, %v1256
  %v1277 = vcombine.low %v1257, %v1257
  %v1278 = vcombine.low %v1258, %v1258
  %v1279 = vcombine.low %v1259, %v1259
  %v1280 = vcombine.low %v1260, %v1260
  %v1281 = vcombine.low %v1261, %v1261
  %v1282 = vcombine.low %v1262, %v1262
  %1283 = vrot.lane.b32.xlu0 %v1273, 53
  %v1284 = vpop.permute.xlu0 %1283
  %1285 = vrot.lane.b32.xlu0 %v1253, 53
  %v1286 = vpop.permute.xlu0 %1285
  %1287 = vrot.lane.b32.xlu0 %v1274, 53
  %v1288 = vpop.permute.xlu0 %1287
  %1289 = vrot.lane.b32.xlu0 %v1254, 53
  %v1290 = vpop.permute.xlu0 %1289
  %1291 = vrot.lane.b32.xlu0 %v1275, 53
  %v1292 = vpop.permute.xlu0 %1291
  %1293 = vrot.lane.b32.xlu0 %v1255, 53
  %v1294 = vpop.permute.xlu0 %1293
  %1295 = vrot.lane.b32.xlu0 %v1276, 53
  %v1296 = vpop.permute.xlu0 %1295
  %1297 = vrot.lane.b32.xlu0 %v1256, 53
  %v1298 = vpop.permute.xlu0 %1297
  %1299 = vrot.lane.b32.xlu0 %v1277, 53
  %v1300 = vpop.permute.xlu0 %1299
  %1301 = vrot.lane.b32.xlu0 %v1257, 53
  %v1302 = vpop.permute.xlu0 %1301
  %1303 = vrot.lane.b32.xlu0 %v1278, 53
  %v1304 = vpop.permute.xlu0 %1303
  %1305 = vrot.lane.b32.xlu0 %v1258, 53
  %v1306 = vpop.permute.xlu0 %1305
  %1307 = vrot.lane.b32.xlu0 %v1279, 53
  %v1308 = vpop.permute.xlu0 %1307
  %1309 = vrot.lane.b32.xlu0 %v1259, 53
  %v1310 = vpop.permute.xlu0 %1309
  %1311 = vrot.lane.b32.xlu0 %v1280, 53
  %v1312 = vpop.permute.xlu0 %1311
  %1313 = vrot.lane.b32.xlu0 %v1260, 53
  %v1314 = vpop.permute.xlu0 %1313
  %1315 = vrot.lane.b32.xlu0 %v1281, 53
  %v1316 = vpop.permute.xlu0 %1315
  %1317 = vrot.lane.b32.xlu0 %v1261, 53
  %v1318 = vpop.permute.xlu0 %1317
  %1319 = vrot.lane.b32.xlu0 %v1282, 53
  %v1320 = vpop.permute.xlu0 %1319
  %1321 = vrot.lane.b32.xlu0 %v1262, 53
  %v1322 = vpop.permute.xlu0 %1321
  %vm1323 = vcmask 433152
  %v1324 = vsel %vm1323, %v1284, %v1286
  %v1325 = vsel %vm1323, %v1286, %v1288
  %v1326 = vsel %vm1323, %v1288, %v1290
  %v1327 = vsel %vm1323, %v1290, %v1292
  %v1328 = vsel %vm1323, %v1292, %v1294
  %v1329 = vsel %vm1323, %v1294, %v1296
  %v1330 = vsel %vm1323, %v1296, %v1298
  %v1331 = vsel %vm1323, %v1298, %v1300
  %v1332 = vsel %vm1323, %v1300, %v1302
  %v1333 = vsel %vm1323, %v1302, %v1304
  %v1334 = vsel %vm1323, %v1304, %v1306
  %v1335 = vsel %vm1323, %v1306, %v1308
  %v1336 = vsel %vm1323, %v1308, %v1310
  %v1337 = vsel %vm1323, %v1310, %v1312
  %v1338 = vsel %vm1323, %v1312, %v1314
  %v1339 = vsel %vm1323, %v1314, %v1316
  %v1340 = vsel %vm1323, %v1316, %v1318
  %v1341 = vsel %vm1323, %v1318, %v1320
  %v1342 = vsel %vm1323, %v1320, %v1322
  %1362 = vst [vmem:[#allocation2 + $0x130] sm:$0xf0] %v1324
  %1363 = vst [vmem:[#allocation2 + $0x138] sm:$0xf0] %v1325
  %1364 = vst [vmem:[#allocation2 + $0x140] sm:$0xf0] %v1326
  %1365 = vst [vmem:[#allocation2 + $0x148] sm:$0xf0] %v1327
  %1366 = vst [vmem:[#allocation2 + $0x150] sm:$0xf0] %v1328
  %1367 = vst [vmem:[#allocation2 + $0x158] sm:$0xf0] %v1329
  %1368 = vst [vmem:[#allocation2 + $0x160] sm:$0xf0] %v1330
  %1369 = vst [vmem:[#allocation2 + $0x168] sm:$0xf0] %v1331
  %1370 = vst [vmem:[#allocation2 + $0x170] sm:$0xf0] %v1332
  %1371 = vst [vmem:[#allocation2 + $0x178] sm:$0xf0] %v1333
  %1372 = vst [vmem:[#allocation2 + $0x180] sm:$0xf0] %v1334
  %1373 = vst [vmem:[#allocation2 + $0x188] sm:$0xf0] %v1335
  %1374 = vst [vmem:[#allocation2 + $0x190] sm:$0xf0] %v1336
  %1375 = vst [vmem:[#allocation2 + $0x198] sm:$0xf0] %v1337
  %1376 = vst [vmem:[#allocation2 + $0x1a0] sm:$0xf0] %v1338
  %1377 = vst [vmem:[#allocation2 + $0x1a8] sm:$0xf0] %v1339
  %1378 = vst [vmem:[#allocation2 + $0x1b0] sm:$0xf0] %v1340
  %1379 = vst [vmem:[#allocation2 + $0x1b8] sm:$0xf0] %v1341
  %1380 = vst [vmem:[#allocation2 + $0x1c0] sm:$0xf0] %v1342
  %v1381 = vld [vmem:[%s1] sm:$0xff]
  %v1382 = vld [vmem:[%s1 + $0x8] sm:$0xff]
  %v1383 = vld [vmem:[%s1 + $0x10] sm:$0xff]
  %v1384 = vld [vmem:[%s1 + $0x18] sm:$0xff]
  %v1385 = vld [vmem:[%s1 + $0x20] sm:$0xff]
  %v1386 = vld [vmem:[%s1 + $0x28] sm:$0xff]
  %v1387 = vld [vmem:[%s1 + $0x30] sm:$0xff]
  %v1388 = vld [vmem:[%s1 + $0x38] sm:$0xff]
  %v1389 = vld [vmem:[%s1 + $0x40] sm:$0xff]
  %v1390 = vld [vmem:[%s1 + $0x48] sm:$0xff]
  %v1401 = vcombine.high %v1381, %v1381
  %v1402 = vcombine.high %v1382, %v1382
  %v1403 = vcombine.high %v1383, %v1383
  %v1404 = vcombine.high %v1384, %v1384
  %v1405 = vcombine.high %v1385, %v1385
  %v1406 = vcombine.high %v1386, %v1386
  %v1407 = vcombine.high %v1387, %v1387
  %v1408 = vcombine.high %v1388, %v1388
  %v1409 = vcombine.high %v1389, %v1389
  %v1410 = vcombine.high %v1390, %v1390
  %1411 = vrot.lane.b32.xlu0 %v1381, 52
  %v1412 = vpop.permute.xlu0 %1411
  %1413 = vrot.lane.b32.xlu0 %v1401, 52
  %v1414 = vpop.permute.xlu0 %1413
  %1415 = vrot.lane.b32.xlu0 %v1382, 52
  %v1416 = vpop.permute.xlu0 %1415
  %1417 = vrot.lane.b32.xlu0 %v1402, 52
  %v1418 = vpop.permute.xlu0 %1417
  %1419 = vrot.lane.b32.xlu0 %v1383, 52
  %v1420 = vpop.permute.xlu0 %1419
  %1421 = vrot.lane.b32.xlu0 %v1403, 52
  %v1422 = vpop.permute.xlu0 %1421
  %1423 = vrot.lane.b32.xlu0 %v1384, 52
  %v1424 = vpop.permute.xlu0 %1423
  %1425 = vrot.lane.b32.xlu0 %v1404, 52
  %v1426 = vpop.permute.xlu0 %1425
  %1427 = vrot.lane.b32.xlu0 %v1385, 52
  %v1428 = vpop.permute.xlu0 %1427
  %1429 = vrot.lane.b32.xlu0 %v1405, 52
  %v1430 = vpop.permute.xlu0 %1429
  %1431 = vrot.lane.b32.xlu0 %v1386, 52
  %v1432 = vpop.permute.xlu0 %1431
  %1433 = vrot.lane.b32.xlu0 %v1406, 52
  %v1434 = vpop.permute.xlu0 %1433
  %1435 = vrot.lane.b32.xlu0 %v1387, 52
  %v1436 = vpop.permute.xlu0 %1435
  %1437 = vrot.lane.b32.xlu0 %v1407, 52
  %v1438 = vpop.permute.xlu0 %1437
  %1439 = vrot.lane.b32.xlu0 %v1388, 52
  %v1440 = vpop.permute.xlu0 %1439
  %1441 = vrot.lane.b32.xlu0 %v1408, 52
  %v1442 = vpop.permute.xlu0 %1441
  %1443 = vrot.lane.b32.xlu0 %v1389, 52
  %v1444 = vpop.permute.xlu0 %1443
  %1445 = vrot.lane.b32.xlu0 %v1409, 52
  %v1446 = vpop.permute.xlu0 %1445
  %1447 = vrot.lane.b32.xlu0 %v1390, 52
  %v1448 = vpop.permute.xlu0 %1447
  %1449 = vrot.lane.b32.xlu0 %v1410, 52
  %v1450 = vpop.permute.xlu0 %1449
  %vm1451 = vcmask 424960
  %v1452 = vsel %vm1451, %v1412, %v1414
  %v1453 = vsel %vm1451, %v1414, %v1416
  %v1454 = vsel %vm1451, %v1416, %v1418
  %v1455 = vsel %vm1451, %v1418, %v1420
  %v1456 = vsel %vm1451, %v1420, %v1422
  %v1457 = vsel %vm1451, %v1422, %v1424
  %v1458 = vsel %vm1451, %v1424, %v1426
  %v1459 = vsel %vm1451, %v1426, %v1428
  %v1460 = vsel %vm1451, %v1428, %v1430
  %v1461 = vsel %vm1451, %v1430, %v1432
  %v1462 = vsel %vm1451, %v1432, %v1434
  %v1463 = vsel %vm1451, %v1434, %v1436
  %v1464 = vsel %vm1451, %v1436, %v1438
  %v1465 = vsel %vm1451, %v1438, %v1440
  %v1466 = vsel %vm1451, %v1440, %v1442
  %v1467 = vsel %vm1451, %v1442, %v1444
  %v1468 = vsel %vm1451, %v1444, %v1446
  %v1469 = vsel %vm1451, %v1446, %v1448
  %v1470 = vsel %vm1451, %v1448, %v1450
  %1490 = vst [vmem:[#allocation2 + $0x428] sm:$0xf] %v1452
  %1491 = vst [vmem:[#allocation2 + $0x430] sm:$0xf] %v1453
  %1492 = vst [vmem:[#allocation2 + $0x438] sm:$0xf] %v1454
  %1493 = vst [vmem:[#allocation2 + $0x440] sm:$0xf] %v1455
  %1494 = vst [vmem:[#allocation2 + $0x448] sm:$0xf] %v1456
  %1495 = vst [vmem:[#allocation2 + $0x450] sm:$0xf] %v1457
  %1496 = vst [vmem:[#allocation2 + $0x458] sm:$0xf] %v1458
  %1497 = vst [vmem:[#allocation2 + $0x460] sm:$0xf] %v1459
  %1498 = vst [vmem:[#allocation2 + $0x468] sm:$0xf] %v1460
  %1499 = vst [vmem:[#allocation2 + $0x470] sm:$0xf] %v1461
  %1500 = vst [vmem:[#allocation2 + $0x478] sm:$0xf] %v1462
  %1501 = vst [vmem:[#allocation2 + $0x480] sm:$0xf] %v1463
  %1502 = vst [vmem:[#allocation2 + $0x488] sm:$0xf] %v1464
  %1503 = vst [vmem:[#allocation2 + $0x490] sm:$0xf] %v1465
  %1504 = vst [vmem:[#allocation2 + $0x498] sm:$0xf] %v1466
  %1505 = vst [vmem:[#allocation2 + $0x4a0] sm:$0xf] %v1467
  %1506 = vst [vmem:[#allocation2 + $0x4a8] sm:$0xf] %v1468
  %1507 = vst [vmem:[#allocation2 + $0x4b0] sm:$0xf] %v1469
  %1508 = vst [vmem:[#allocation2 + $0x4b8] sm:$0xf] %v1470
  %v1509 = vld [vmem:[%s0] sm:$0xff]
  %v1510 = vld [vmem:[%s0 + $0x8] sm:$0xff]
  %v1511 = vld [vmem:[%s0 + $0x10] sm:$0xff]
  %v1512 = vld [vmem:[%s0 + $0x18] sm:$0xff]
  %v1513 = vld [vmem:[%s0 + $0x20] sm:$0xff]
  %v1514 = vld [vmem:[%s0 + $0x28] sm:$0xff]
  %v1515 = vld [vmem:[%s0 + $0x30] sm:$0xff]
  %v1516 = vld [vmem:[%s0 + $0x38] sm:$0xff]
  %v1517 = vld [vmem:[%s0 + $0x40] sm:$0xff]
  %v1518 = vld [vmem:[%s0 + $0x48] sm:$0xff]
  %v1529 = vcombine.high %v1509, %v1509
  %v1530 = vcombine.high %v1510, %v1510
  %v1531 = vcombine.high %v1511, %v1511
  %v1532 = vcombine.high %v1512, %v1512
  %v1533 = vcombine.high %v1513, %v1513
  %v1534 = vcombine.high %v1514, %v1514
  %v1535 = vcombine.high %v1515, %v1515
  %v1536 = vcombine.high %v1516, %v1516
  %v1537 = vcombine.high %v1517, %v1517
  %v1538 = vcombine.high %v1518, %v1518
  %1539 = vrot.lane.b32.xlu0 %v1509, 19
  %v1540 = vpop.permute.xlu0 %1539
  %1541 = vrot.lane.b32.xlu0 %v1529, 19
  %v1542 = vpop.permute.xlu0 %1541
  %1543 = vrot.lane.b32.xlu0 %v1510, 19
  %v1544 = vpop.permute.xlu0 %1543
  %1545 = vrot.lane.b32.xlu0 %v1530, 19
  %v1546 = vpop.permute.xlu0 %1545
  %1547 = vrot.lane.b32.xlu0 %v1511, 19
  %v1548 = vpop.permute.xlu0 %1547
  %1549 = vrot.lane.b32.xlu0 %v1531, 19
  %v1550 = vpop.permute.xlu0 %1549
  %1551 = vrot.lane.b32.xlu0 %v1512, 19
  %v1552 = vpop.permute.xlu0 %1551
  %1553 = vrot.lane.b32.xlu0 %v1532, 19
  %v1554 = vpop.permute.xlu0 %1553
  %1555 = vrot.lane.b32.xlu0 %v1513, 19
  %v1556 = vpop.permute.xlu0 %1555
  %1557 = vrot.lane.b32.xlu0 %v1533, 19
  %v1558 = vpop.permute.xlu0 %1557
  %1559 = vrot.lane.b32.xlu0 %v1514, 19
  %v1560 = vpop.permute.xlu0 %1559
  %1561 = vrot.lane.b32.xlu0 %v1534, 19
  %v1562 = vpop.permute.xlu0 %1561
  %1563 = vrot.lane.b32.xlu0 %v1515, 19
  %v1564 = vpop.permute.xlu0 %1563
  %1565 = vrot.lane.b32.xlu0 %v1535, 19
  %v1566 = vpop.permute.xlu0 %1565
  %1567 = vrot.lane.b32.xlu0 %v1516, 19
  %v1568 = vpop.permute.xlu0 %1567
  %1569 = vrot.lane.b32.xlu0 %v1536, 19
  %v1570 = vpop.permute.xlu0 %1569
  %1571 = vrot.lane.b32.xlu0 %v1517, 19
  %v1572 = vpop.permute.xlu0 %1571
  %1573 = vrot.lane.b32.xlu0 %v1537, 19
  %v1574 = vpop.permute.xlu0 %1573
  %1575 = vrot.lane.b32.xlu0 %v1518, 19
  %v1576 = vpop.permute.xlu0 %1575
  %1577 = vrot.lane.b32.xlu0 %v1538, 19
  %v1578 = vpop.permute.xlu0 %1577
  %vm1579 = vcmask 154624
  %v1580 = vsel %vm1579, %v1540, %v1542
  %v1581 = vsel %vm1579, %v1542, %v1544
  %v1582 = vsel %vm1579, %v1544, %v1546
  %v1583 = vsel %vm1579, %v1546, %v1548
  %v1584 = vsel %vm1579, %v1548, %v1550
  %v1585 = vsel %vm1579, %v1550, %v1552
  %v1586 = vsel %vm1579, %v1552, %v1554
  %v1587 = vsel %vm1579, %v1554, %v1556
  %v1588 = vsel %vm1579, %v1556, %v1558
  %v1589 = vsel %vm1579, %v1558, %v1560
  %v1590 = vsel %vm1579, %v1560, %v1562
  %v1591 = vsel %vm1579, %v1562, %v1564
  %v1592 = vsel %vm1579, %v1564, %v1566
  %v1593 = vsel %vm1579, %v1566, %v1568
  %v1594 = vsel %vm1579, %v1568, %v1570
  %v1595 = vsel %vm1579, %v1570, %v1572
  %v1596 = vsel %vm1579, %v1572, %v1574
  %v1597 = vsel %vm1579, %v1574, %v1576
  %v1598 = vsel %vm1579, %v1576, %v1578
  %1618 = vst [vmem:[#allocation2 + $0x1c8] sm:$0xf] %v1580
  %1619 = vst [vmem:[#allocation2 + $0x1d0] sm:$0xf] %v1581
  %1620 = vst [vmem:[#allocation2 + $0x1d8] sm:$0xf] %v1582
  %1621 = vst [vmem:[#allocation2 + $0x1e0] sm:$0xf] %v1583
  %1622 = vst [vmem:[#allocation2 + $0x1e8] sm:$0xf] %v1584
  %1623 = vst [vmem:[#allocation2 + $0x1f0] sm:$0xf] %v1585
  %1624 = vst [vmem:[#allocation2 + $0x1f8] sm:$0xf] %v1586
  %1625 = vst [vmem:[#allocation2 + $0x200] sm:$0xf] %v1587
  %1626 = vst [vmem:[#allocation2 + $0x208] sm:$0xf] %v1588
  %1627 = vst [vmem:[#allocation2 + $0x210] sm:$0xf] %v1589
  %1628 = vst [vmem:[#allocation2 + $0x218] sm:$0xf] %v1590
  %1629 = vst [vmem:[#allocation2 + $0x220] sm:$0xf] %v1591
  %1630 = vst [vmem:[#allocation2 + $0x228] sm:$0xf] %v1592
  %1631 = vst [vmem:[#allocation2 + $0x230] sm:$0xf] %v1593
  %1632 = vst [vmem:[#allocation2 + $0x238] sm:$0xf] %v1594
  %1633 = vst [vmem:[#allocation2 + $0x240] sm:$0xf] %v1595
  %1634 = vst [vmem:[#allocation2 + $0x248] sm:$0xf] %v1596
  %1635 = vst [vmem:[#allocation2 + $0x250] sm:$0xf] %v1597
  %1636 = vst [vmem:[#allocation2 + $0x258] sm:$0xf] %v1598
  %v1637 = vld [vmem:[%s1 + $0x4] sm:$0xff]
  %v1638 = vld [vmem:[%s1 + $0xc] sm:$0xff]
  %v1639 = vld [vmem:[%s1 + $0x14] sm:$0xff]
  %v1640 = vld [vmem:[%s1 + $0x1c] sm:$0xff]
  %v1641 = vld [vmem:[%s1 + $0x24] sm:$0xff]
  %v1642 = vld [vmem:[%s1 + $0x2c] sm:$0xff]
  %v1643 = vld [vmem:[%s1 + $0x34] sm:$0xff]
  %v1644 = vld [vmem:[%s1 + $0x3c] sm:$0xff]
  %v1645 = vld [vmem:[%s1 + $0x44] sm:$0xff]
  %v1646 = vld [vmem:[%s1 + $0x4c] sm:$0xff]
  %v1657 = vcombine.low %v1637, %v1637
  %v1658 = vcombine.low %v1638, %v1638
  %v1659 = vcombine.low %v1639, %v1639
  %v1660 = vcombine.low %v1640, %v1640
  %v1661 = vcombine.low %v1641, %v1641
  %v1662 = vcombine.low %v1642, %v1642
  %v1663 = vcombine.low %v1643, %v1643
  %v1664 = vcombine.low %v1644, %v1644
  %v1665 = vcombine.low %v1645, %v1645
  %v1666 = vcombine.low %v1646, %v1646
  %1667 = vrot.lane.b32.xlu0 %v1657, 112
  %v1668 = vpop.permute.xlu0 %1667
  %1669 = vrot.lane.b32.xlu0 %v1637, 112
  %v1670 = vpop.permute.xlu0 %1669
  %1671 = vrot.lane.b32.xlu0 %v1658, 112
  %v1672 = vpop.permute.xlu0 %1671
  %1673 = vrot.lane.b32.xlu0 %v1638, 112
  %v1674 = vpop.permute.xlu0 %1673
  %1675 = vrot.lane.b32.xlu0 %v1659, 112
  %v1676 = vpop.permute.xlu0 %1675
  %1677 = vrot.lane.b32.xlu0 %v1639, 112
  %v1678 = vpop.permute.xlu0 %1677
  %1679 = vrot.lane.b32.xlu0 %v1660, 112
  %v1680 = vpop.permute.xlu0 %1679
  %1681 = vrot.lane.b32.xlu0 %v1640, 112
  %v1682 = vpop.permute.xlu0 %1681
  %1683 = vrot.lane.b32.xlu0 %v1661, 112
  %v1684 = vpop.permute.xlu0 %1683
  %1685 = vrot.lane.b32.xlu0 %v1641, 112
  %v1686 = vpop.permute.xlu0 %1685
  %1687 = vrot.lane.b32.xlu0 %v1662, 112
  %v1688 = vpop.permute.xlu0 %1687
  %1689 = vrot.lane.b32.xlu0 %v1642, 112
  %v1690 = vpop.permute.xlu0 %1689
  %1691 = vrot.lane.b32.xlu0 %v1663, 112
  %v1692 = vpop.permute.xlu0 %1691
  %1693 = vrot.lane.b32.xlu0 %v1643, 112
  %v1694 = vpop.permute.xlu0 %1693
  %1695 = vrot.lane.b32.xlu0 %v1664, 112
  %v1696 = vpop.permute.xlu0 %1695
  %1697 = vrot.lane.b32.xlu0 %v1644, 112
  %v1698 = vpop.permute.xlu0 %1697
  %1699 = vrot.lane.b32.xlu0 %v1665, 112
  %v1700 = vpop.permute.xlu0 %1699
  %1701 = vrot.lane.b32.xlu0 %v1645, 112
  %v1702 = vpop.permute.xlu0 %1701
  %1703 = vrot.lane.b32.xlu0 %v1666, 112
  %v1704 = vpop.permute.xlu0 %1703
  %1705 = vrot.lane.b32.xlu0 %v1646, 112
  %v1706 = vpop.permute.xlu0 %1705
  %vm1707 = vcmask 916480
  %v1708 = vsel %vm1707, %v1668, %v1670
  %v1709 = vsel %vm1707, %v1670, %v1672
  %v1710 = vsel %vm1707, %v1672, %v1674
  %v1711 = vsel %vm1707, %v1674, %v1676
  %v1712 = vsel %vm1707, %v1676, %v1678
  %v1713 = vsel %vm1707, %v1678, %v1680
  %v1714 = vsel %vm1707, %v1680, %v1682
  %v1715 = vsel %vm1707, %v1682, %v1684
  %v1716 = vsel %vm1707, %v1684, %v1686
  %v1717 = vsel %vm1707, %v1686, %v1688
  %v1718 = vsel %vm1707, %v1688, %v1690
  %v1719 = vsel %vm1707, %v1690, %v1692
  %v1720 = vsel %vm1707, %v1692, %v1694
  %v1721 = vsel %vm1707, %v1694, %v1696
  %v1722 = vsel %vm1707, %v1696, %v1698
  %v1723 = vsel %vm1707, %v1698, %v1700
  %v1724 = vsel %vm1707, %v1700, %v1702
  %v1725 = vsel %vm1707, %v1702, %v1704
  %v1726 = vsel %vm1707, %v1704, %v1706
  %1746 = vst [vmem:[#allocation2 + $0x428] sm:$0xf0] %v1708
  %1747 = vst [vmem:[#allocation2 + $0x430] sm:$0xf0] %v1709
  %1748 = vst [vmem:[#allocation2 + $0x438] sm:$0xf0] %v1710
  %1749 = vst [vmem:[#allocation2 + $0x440] sm:$0xf0] %v1711
  %1750 = vst [vmem:[#allocation2 + $0x448] sm:$0xf0] %v1712
  %1751 = vst [vmem:[#allocation2 + $0x450] sm:$0xf0] %v1713
  %1752 = vst [vmem:[#allocation2 + $0x458] sm:$0xf0] %v1714
  %1753 = vst [vmem:[#allocation2 + $0x460] sm:$0xf0] %v1715
  %1754 = vst [vmem:[#allocation2 + $0x468] sm:$0xf0] %v1716
  %1755 = vst [vmem:[#allocation2 + $0x470] sm:$0xf0] %v1717
  %1756 = vst [vmem:[#allocation2 + $0x478] sm:$0xf0] %v1718
  %1757 = vst [vmem:[#allocation2 + $0x480] sm:$0xf0] %v1719
  %1758 = vst [vmem:[#allocation2 + $0x488] sm:$0xf0] %v1720
  %1759 = vst [vmem:[#allocation2 + $0x490] sm:$0xf0] %v1721
  %1760 = vst [vmem:[#allocation2 + $0x498] sm:$0xf0] %v1722
  %1761 = vst [vmem:[#allocation2 + $0x4a0] sm:$0xf0] %v1723
  %1762 = vst [vmem:[#allocation2 + $0x4a8] sm:$0xf0] %v1724
  %1763 = vst [vmem:[#allocation2 + $0x4b0] sm:$0xf0] %v1725
  %1764 = vst [vmem:[#allocation2 + $0x4b8] sm:$0xf0] %v1726
  %v1765 = vld [vmem:[%s0] sm:$0xff]
  %v1766 = vld [vmem:[%s0 + $0x8] sm:$0xff]
  %v1767 = vld [vmem:[%s0 + $0x10] sm:$0xff]
  %v1768 = vld [vmem:[%s0 + $0x18] sm:$0xff]
  %v1769 = vld [vmem:[%s0 + $0x20] sm:$0xff]
  %v1770 = vld [vmem:[%s0 + $0x28] sm:$0xff]
  %v1771 = vld [vmem:[%s0 + $0x30] sm:$0xff]
  %v1772 = vld [vmem:[%s0 + $0x38] sm:$0xff]
  %v1773 = vld [vmem:[%s0 + $0x40] sm:$0xff]
  %v1774 = vld [vmem:[%s0 + $0x48] sm:$0xff]
  %v1785 = vcombine.low %v1765, %v1765
  %v1786 = vcombine.low %v1766, %v1766
  %v1787 = vcombine.low %v1767, %v1767
  %v1788 = vcombine.low %v1768, %v1768
  %v1789 = vcombine.low %v1769, %v1769
  %v1790 = vcombine.low %v1770, %v1770
  %v1791 = vcombine.low %v1771, %v1771
  %v1792 = vcombine.low %v1772, %v1772
  %v1793 = vcombine.low %v1773, %v1773
  %v1794 = vcombine.low %v1774, %v1774
  %1795 = vrot.lane.b32.xlu0 %v1785, 18
  %v1796 = vpop.permute.xlu0 %1795
  %1797 = vrot.lane.b32.xlu0 %v1765, 18
  %v1798 = vpop.permute.xlu0 %1797
  %1799 = vrot.lane.b32.xlu0 %v1786, 18
  %v1800 = vpop.permute.xlu0 %1799
  %1801 = vrot.lane.b32.xlu0 %v1766, 18
  %v1802 = vpop.permute.xlu0 %1801
  %1803 = vrot.lane.b32.xlu0 %v1787, 18
  %v1804 = vpop.permute.xlu0 %1803
  %1805 = vrot.lane.b32.xlu0 %v1767, 18
  %v1806 = vpop.permute.xlu0 %1805
  %1807 = vrot.lane.b32.xlu0 %v1788, 18
  %v1808 = vpop.permute.xlu0 %1807
  %1809 = vrot.lane.b32.xlu0 %v1768, 18
  %v1810 = vpop.permute.xlu0 %1809
  %1811 = vrot.lane.b32.xlu0 %v1789, 18
  %v1812 = vpop.permute.xlu0 %1811
  %1813 = vrot.lane.b32.xlu0 %v1769, 18
  %v1814 = vpop.permute.xlu0 %1813
  %1815 = vrot.lane.b32.xlu0 %v1790, 18
  %v1816 = vpop.permute.xlu0 %1815
  %1817 = vrot.lane.b32.xlu0 %v1770, 18
  %v1818 = vpop.permute.xlu0 %1817
  %1819 = vrot.lane.b32.xlu0 %v1791, 18
  %v1820 = vpop.permute.xlu0 %1819
  %1821 = vrot.lane.b32.xlu0 %v1771, 18
  %v1822 = vpop.permute.xlu0 %1821
  %1823 = vrot.lane.b32.xlu0 %v1792, 18
  %v1824 = vpop.permute.xlu0 %1823
  %1825 = vrot.lane.b32.xlu0 %v1772, 18
  %v1826 = vpop.permute.xlu0 %1825
  %1827 = vrot.lane.b32.xlu0 %v1793, 18
  %v1828 = vpop.permute.xlu0 %1827
  %1829 = vrot.lane.b32.xlu0 %v1773, 18
  %v1830 = vpop.permute.xlu0 %1829
  %1831 = vrot.lane.b32.xlu0 %v1794, 18
  %v1832 = vpop.permute.xlu0 %1831
  %1833 = vrot.lane.b32.xlu0 %v1774, 18
  %v1834 = vpop.permute.xlu0 %1833
  %vm1835 = vcmask 146432
  %v1836 = vsel %vm1835, %v1796, %v1798
  %v1837 = vsel %vm1835, %v1798, %v1800
  %v1838 = vsel %vm1835, %v1800, %v1802
  %v1839 = vsel %vm1835, %v1802, %v1804
  %v1840 = vsel %vm1835, %v1804, %v1806
  %v1841 = vsel %vm1835, %v1806, %v1808
  %v1842 = vsel %vm1835, %v1808, %v1810
  %v1843 = vsel %vm1835, %v1810, %v1812
  %v1844 = vsel %vm1835, %v1812, %v1814
  %v1845 = vsel %vm1835, %v1814, %v1816
  %v1846 = vsel %vm1835, %v1816, %v1818
  %v1847 = vsel %vm1835, %v1818, %v1820
  %v1848 = vsel %vm1835, %v1820, %v1822
  %v1849 = vsel %vm1835, %v1822, %v1824
  %v1850 = vsel %vm1835, %v1824, %v1826
  %v1851 = vsel %vm1835, %v1826, %v1828
  %v1852 = vsel %vm1835, %v1828, %v1830
  %v1853 = vsel %vm1835, %v1830, %v1832
  %v1854 = vsel %vm1835, %v1832, %v1834
  %1874 = vst [vmem:[#allocation2 + $0x1c8] sm:$0xf0] %v1836
  %1875 = vst [vmem:[#allocation2 + $0x1d0] sm:$0xf0] %v1837
  %1876 = vst [vmem:[#allocation2 + $0x1d8] sm:$0xf0] %v1838
  %1877 = vst [vmem:[#allocation2 + $0x1e0] sm:$0xf0] %v1839
  %1878 = vst [vmem:[#allocation2 + $0x1e8] sm:$0xf0] %v1840
  %1879 = vst [vmem:[#allocation2 + $0x1f0] sm:$0xf0] %v1841
  %1880 = vst [vmem:[#allocation2 + $0x1f8] sm:$0xf0] %v1842
  %1881 = vst [vmem:[#allocation2 + $0x200] sm:$0xf0] %v1843
  %1882 = vst [vmem:[#allocation2 + $0x208] sm:$0xf0] %v1844
  %1883 = vst [vmem:[#allocation2 + $0x210] sm:$0xf0] %v1845
  %1884 = vst [vmem:[#allocation2 + $0x218] sm:$0xf0] %v1846
  %1885 = vst [vmem:[#allocation2 + $0x220] sm:$0xf0] %v1847
  %1886 = vst [vmem:[#allocation2 + $0x228] sm:$0xf0] %v1848
  %1887 = vst [vmem:[#allocation2 + $0x230] sm:$0xf0] %v1849
  %1888 = vst [vmem:[#allocation2 + $0x238] sm:$0xf0] %v1850
  %1889 = vst [vmem:[#allocation2 + $0x240] sm:$0xf0] %v1851
  %1890 = vst [vmem:[#allocation2 + $0x248] sm:$0xf0] %v1852
  %1891 = vst [vmem:[#allocation2 + $0x250] sm:$0xf0] %v1853
  %1892 = vst [vmem:[#allocation2 + $0x258] sm:$0xf0] %v1854
  %v1893 = vld [vmem:[%s1 + $0x4] sm:$0xff]
  %v1894 = vld [vmem:[%s1 + $0xc] sm:$0xff]
  %v1895 = vld [vmem:[%s1 + $0x14] sm:$0xff]
  %v1896 = vld [vmem:[%s1 + $0x1c] sm:$0xff]
  %v1897 = vld [vmem:[%s1 + $0x24] sm:$0xff]
  %v1898 = vld [vmem:[%s1 + $0x2c] sm:$0xff]
  %v1899 = vld [vmem:[%s1 + $0x34] sm:$0xff]
  %v1900 = vld [vmem:[%s1 + $0x3c] sm:$0xff]
  %v1901 = vld [vmem:[%s1 + $0x44] sm:$0xff]
  %v1902 = vld [vmem:[%s1 + $0x4c] sm:$0xff]
  %v1913 = vcombine.high %v1893, %v1893
  %v1914 = vcombine.high %v1894, %v1894
  %v1915 = vcombine.high %v1895, %v1895
  %v1916 = vcombine.high %v1896, %v1896
  %v1917 = vcombine.high %v1897, %v1897
  %v1918 = vcombine.high %v1898, %v1898
  %v1919 = vcombine.high %v1899, %v1899
  %v1920 = vcombine.high %v1900, %v1900
  %v1921 = vcombine.high %v1901, %v1901
  %v1922 = vcombine.high %v1902, %v1902
  %1923 = vrot.lane.b32.xlu0 %v1893, 110
  %v1924 = vpop.permute.xlu0 %1923
  %1925 = vrot.lane.b32.xlu0 %v1913, 110
  %v1926 = vpop.permute.xlu0 %1925
  %1927 = vrot.lane.b32.xlu0 %v1894, 110
  %v1928 = vpop.permute.xlu0 %1927
  %1929 = vrot.lane.b32.xlu0 %v1914, 110
  %v1930 = vpop.permute.xlu0 %1929
  %1931 = vrot.lane.b32.xlu0 %v1895, 110
  %v1932 = vpop.permute.xlu0 %1931
  %1933 = vrot.lane.b32.xlu0 %v1915, 110
  %v1934 = vpop.permute.xlu0 %1933
  %1935 = vrot.lane.b32.xlu0 %v1896, 110
  %v1936 = vpop.permute.xlu0 %1935
  %1937 = vrot.lane.b32.xlu0 %v1916, 110
  %v1938 = vpop.permute.xlu0 %1937
  %1939 = vrot.lane.b32.xlu0 %v1897, 110
  %v1940 = vpop.permute.xlu0 %1939
  %1941 = vrot.lane.b32.xlu0 %v1917, 110
  %v1942 = vpop.permute.xlu0 %1941
  %1943 = vrot.lane.b32.xlu0 %v1898, 110
  %v1944 = vpop.permute.xlu0 %1943
  %1945 = vrot.lane.b32.xlu0 %v1918, 110
  %v1946 = vpop.permute.xlu0 %1945
  %1947 = vrot.lane.b32.xlu0 %v1899, 110
  %v1948 = vpop.permute.xlu0 %1947
  %1949 = vrot.lane.b32.xlu0 %v1919, 110
  %v1950 = vpop.permute.xlu0 %1949
  %1951 = vrot.lane.b32.xlu0 %v1900, 110
  %v1952 = vpop.permute.xlu0 %1951
  %1953 = vrot.lane.b32.xlu0 %v1920, 110
  %v1954 = vpop.permute.xlu0 %1953
  %1955 = vrot.lane.b32.xlu0 %v1901, 110
  %v1956 = vpop.permute.xlu0 %1955
  %1957 = vrot.lane.b32.xlu0 %v1921, 110
  %v1958 = vpop.permute.xlu0 %1957
  %1959 = vrot.lane.b32.xlu0 %v1902, 110
  %v1960 = vpop.permute.xlu0 %1959
  %1961 = vrot.lane.b32.xlu0 %v1922, 110
  %v1962 = vpop.permute.xlu0 %1961
  %vm1963 = vcmask 900096
  %v1964 = vsel %vm1963, %v1924, %v1926
  %v1965 = vsel %vm1963, %v1926, %v1928
  %v1966 = vsel %vm1963, %v1928, %v1930
  %v1967 = vsel %vm1963, %v1930, %v1932
  %v1968 = vsel %vm1963, %v1932, %v1934
  %v1969 = vsel %vm1963, %v1934, %v1936
  %v1970 = vsel %vm1963, %v1936, %v1938
  %v1971 = vsel %vm1963, %v1938, %v1940
  %v1972 = vsel %vm1963, %v1940, %v1942
  %v1973 = vsel %vm1963, %v1942, %v1944
  %v1974 = vsel %vm1963, %v1944, %v1946
  %v1975 = vsel %vm1963, %v1946, %v1948
  %v1976 = vsel %vm1963, %v1948, %v1950
  %v1977 = vsel %vm1963, %v1950, %v1952
  %v1978 = vsel %vm1963, %v1952, %v1954
  %v1979 = vsel %vm1963, %v1954, %v1956
  %v1980 = vsel %vm1963, %v1956, %v1958
  %v1981 = vsel %vm1963, %v1958, %v1960
  %v1982 = vsel %vm1963, %v1960, %v1962
  %2002 = vst [vmem:[#allocation2 + $0x4c0] sm:$0xf] %v1964
  %2003 = vst [vmem:[#allocation2 + $0x4c8] sm:$0xf] %v1965
  %2004 = vst [vmem:[#allocation2 + $0x4d0] sm:$0xf] %v1966
  %2005 = vst [vmem:[#allocation2 + $0x4d8] sm:$0xf] %v1967
  %2006 = vst [vmem:[#allocation2 + $0x4e0] sm:$0xf] %v1968
  %2007 = vst [vmem:[#allocation2 + $0x4e8] sm:$0xf] %v1969
  %2008 = vst [vmem:[#allocation2 + $0x4f0] sm:$0xf] %v1970
  %2009 = vst [vmem:[#allocation2 + $0x4f8] sm:$0xf] %v1971
  %2010 = vst [vmem:[#allocation2 + $0x500] sm:$0xf] %v1972
  %2011 = vst [vmem:[#allocation2 + $0x508] sm:$0xf] %v1973
  %2012 = vst [vmem:[#allocation2 + $0x510] sm:$0xf] %v1974
  %2013 = vst [vmem:[#allocation2 + $0x518] sm:$0xf] %v1975
  %2014 = vst [vmem:[#allocation2 + $0x520] sm:$0xf] %v1976
  %2015 = vst [vmem:[#allocation2 + $0x528] sm:$0xf] %v1977
  %2016 = vst [vmem:[#allocation2 + $0x530] sm:$0xf] %v1978
  %2017 = vst [vmem:[#allocation2 + $0x538] sm:$0xf] %v1979
  %2018 = vst [vmem:[#allocation2 + $0x540] sm:$0xf] %v1980
  %2019 = vst [vmem:[#allocation2 + $0x548] sm:$0xf] %v1981
  %2020 = vst [vmem:[#allocation2 + $0x550] sm:$0xf] %v1982
  %v2021 = vld [vmem:[%s0] sm:$0xff]
  %v2022 = vld [vmem:[%s0 + $0x8] sm:$0xff]
  %v2023 = vld [vmem:[%s0 + $0x10] sm:$0xff]
  %v2024 = vld [vmem:[%s0 + $0x18] sm:$0xff]
  %v2025 = vld [vmem:[%s0 + $0x20] sm:$0xff]
  %v2026 = vld [vmem:[%s0 + $0x28] sm:$0xff]
  %v2027 = vld [vmem:[%s0 + $0x30] sm:$0xff]
  %v2028 = vld [vmem:[%s0 + $0x38] sm:$0xff]
  %v2029 = vld [vmem:[%s0 + $0x40] sm:$0xff]
  %v2030 = vld [vmem:[%s0 + $0x48] sm:$0xff]
  %v2041 = vcombine.high %v2021, %v2021
  %v2042 = vcombine.high %v2022, %v2022
  %v2043 = vcombine.high %v2023, %v2023
  %v2044 = vcombine.high %v2024, %v2024
  %v2045 = vcombine.high %v2025, %v2025
  %v2046 = vcombine.high %v2026, %v2026
  %v2047 = vcombine.high %v2027, %v2027
  %v2048 = vcombine.high %v2028, %v2028
  %v2049 = vcombine.high %v2029, %v2029
  %v2050 = vcombine.high %v2030, %v2030
  %2051 = vrot.lane.b32.xlu0 %v2021, 17
  %v2052 = vpop.permute.xlu0 %2051
  %2053 = vrot.lane.b32.xlu0 %v2041, 17
  %v2054 = vpop.permute.xlu0 %2053
  %2055 = vrot.lane.b32.xlu0 %v2022, 17
  %v2056 = vpop.permute.xlu0 %2055
  %2057 = vrot.lane.b32.xlu0 %v2042, 17
  %v2058 = vpop.permute.xlu0 %2057
  %2059 = vrot.lane.b32.xlu0 %v2023, 17
  %v2060 = vpop.permute.xlu0 %2059
  %2061 = vrot.lane.b32.xlu0 %v2043, 17
  %v2062 = vpop.permute.xlu0 %2061
  %2063 = vrot.lane.b32.xlu0 %v2024, 17
  %v2064 = vpop.permute.xlu0 %2063
  %2065 = vrot.lane.b32.xlu0 %v2044, 17
  %v2066 = vpop.permute.xlu0 %2065
  %2067 = vrot.lane.b32.xlu0 %v2025, 17
  %v2068 = vpop.permute.xlu0 %2067
  %2069 = vrot.lane.b32.xlu0 %v2045, 17
  %v2070 = vpop.permute.xlu0 %2069
  %2071 = vrot.lane.b32.xlu0 %v2026, 17
  %v2072 = vpop.permute.xlu0 %2071
  %2073 = vrot.lane.b32.xlu0 %v2046, 17
  %v2074 = vpop.permute.xlu0 %2073
  %2075 = vrot.lane.b32.xlu0 %v2027, 17
  %v2076 = vpop.permute.xlu0 %2075
  %2077 = vrot.lane.b32.xlu0 %v2047, 17
  %v2078 = vpop.permute.xlu0 %2077
  %2079 = vrot.lane.b32.xlu0 %v2028, 17
  %v2080 = vpop.permute.xlu0 %2079
  %2081 = vrot.lane.b32.xlu0 %v2048, 17
  %v2082 = vpop.permute.xlu0 %2081
  %2083 = vrot.lane.b32.xlu0 %v2029, 17
  %v2084 = vpop.permute.xlu0 %2083
  %2085 = vrot.lane.b32.xlu0 %v2049, 17
  %v2086 = vpop.permute.xlu0 %2085
  %2087 = vrot.lane.b32.xlu0 %v2030, 17
  %v2088 = vpop.permute.xlu0 %2087
  %2089 = vrot.lane.b32.xlu0 %v2050, 17
  %v2090 = vpop.permute.xlu0 %2089
  %vm2091 = vcmask 138240
  %v2092 = vsel %vm2091, %v2052, %v2054
  %v2093 = vsel %vm2091, %v2054, %v2056
  %v2094 = vsel %vm2091, %v2056, %v2058
  %v2095 = vsel %vm2091, %v2058, %v2060
  %v2096 = vsel %vm2091, %v2060, %v2062
  %v2097 = vsel %vm2091, %v2062, %v2064
  %v2098 = vsel %vm2091, %v2064, %v2066
  %v2099 = vsel %vm2091, %v2066, %v2068
  %v2100 = vsel %vm2091, %v2068, %v2070
  %v2101 = vsel %vm2091, %v2070, %v2072
  %v2102 = vsel %vm2091, %v2072, %v2074
  %v2103 = vsel %vm2091, %v2074, %v2076
  %v2104 = vsel %vm2091, %v2076, %v2078
  %v2105 = vsel %vm2091, %v2078, %v2080
  %v2106 = vsel %vm2091, %v2080, %v2082
  %v2107 = vsel %vm2091, %v2082, %v2084
  %v2108 = vsel %vm2091, %v2084, %v2086
  %v2109 = vsel %vm2091, %v2086, %v2088
  %v2110 = vsel %vm2091, %v2088, %v2090
  %2130 = vst [vmem:[#allocation2 + $0x260] sm:$0xf] %v2092
  %2131 = vst [vmem:[#allocation2 + $0x268] sm:$0xf] %v2093
  %2132 = vst [vmem:[#allocation2 + $0x270] sm:$0xf] %v2094
  %2133 = vst [vmem:[#allocation2 + $0x278] sm:$0xf] %v2095
  %2134 = vst [vmem:[#allocation2 + $0x280] sm:$0xf] %v2096
  %2135 = vst [vmem:[#allocation2 + $0x288] sm:$0xf] %v2097
  %2136 = vst [vmem:[#allocation2 + $0x290] sm:$0xf] %v2098
  %2137 = vst [vmem:[#allocation2 + $0x298] sm:$0xf] %v2099
  %2138 = vst [vmem:[#allocation2 + $0x2a0] sm:$0xf] %v2100
  %2139 = vst [vmem:[#allocation2 + $0x2a8] sm:$0xf] %v2101
  %2140 = vst [vmem:[#allocation2 + $0x2b0] sm:$0xf] %v2102
  %2141 = vst [vmem:[#allocation2 + $0x2b8] sm:$0xf] %v2103
  %2142 = vst [vmem:[#allocation2 + $0x2c0] sm:$0xf] %v2104
  %2143 = vst [vmem:[#allocation2 + $0x2c8] sm:$0xf] %v2105
  %2144 = vst [vmem:[#allocation2 + $0x2d0] sm:$0xf] %v2106
  %2145 = vst [vmem:[#allocation2 + $0x2d8] sm:$0xf] %v2107
  %2146 = vst [vmem:[#allocation2 + $0x2e0] sm:$0xf] %v2108
  %2147 = vst [vmem:[#allocation2 + $0x2e8] sm:$0xf] %v2109
  %2148 = vst [vmem:[#allocation2 + $0x2f0] sm:$0xf] %v2110
  %v2149 = vld [vmem:[%s1 + $0x4] sm:$0xff]
  %v2150 = vld [vmem:[%s1 + $0xc] sm:$0xff]
  %v2151 = vld [vmem:[%s1 + $0x14] sm:$0xff]
  %v2152 = vld [vmem:[%s1 + $0x1c] sm:$0xff]
  %v2153 = vld [vmem:[%s1 + $0x24] sm:$0xff]
  %v2154 = vld [vmem:[%s1 + $0x2c] sm:$0xff]
  %v2155 = vld [vmem:[%s1 + $0x34] sm:$0xff]
  %v2156 = vld [vmem:[%s1 + $0x3c] sm:$0xff]
  %v2157 = vld [vmem:[%s1 + $0x44] sm:$0xff]
  %v2158 = vld [vmem:[%s1 + $0x4c] sm:$0xff]
  %v2169 = vcombine.low %v2149, %v2149
  %v2170 = vcombine.low %v2150, %v2150
  %v2171 = vcombine.low %v2151, %v2151
  %v2172 = vcombine.low %v2152, %v2152
  %v2173 = vcombine.low %v2153, %v2153
  %v2174 = vcombine.low %v2154, %v2154
  %v2175 = vcombine.low %v2155, %v2155
  %v2176 = vcombine.low %v2156, %v2156
  %v2177 = vcombine.low %v2157, %v2157
  %v2178 = vcombine.low %v2158, %v2158
  %2179 = vrot.lane.b32.xlu0 %v2169, 108
  %v2180 = vpop.permute.xlu0 %2179
  %2181 = vrot.lane.b32.xlu0 %v2149, 108
  %v2182 = vpop.permute.xlu0 %2181
  %2183 = vrot.lane.b32.xlu0 %v2170, 108
  %v2184 = vpop.permute.xlu0 %2183
  %2185 = vrot.lane.b32.xlu0 %v2150, 108
  %v2186 = vpop.permute.xlu0 %2185
  %2187 = vrot.lane.b32.xlu0 %v2171, 108
  %v2188 = vpop.permute.xlu0 %2187
  %2189 = vrot.lane.b32.xlu0 %v2151, 108
  %v2190 = vpop.permute.xlu0 %2189
  %2191 = vrot.lane.b32.xlu0 %v2172, 108
  %v2192 = vpop.permute.xlu0 %2191
  %2193 = vrot.lane.b32.xlu0 %v2152, 108
  %v2194 = vpop.permute.xlu0 %2193
  %2195 = vrot.lane.b32.xlu0 %v2173, 108
  %v2196 = vpop.permute.xlu0 %2195
  %2197 = vrot.lane.b32.xlu0 %v2153, 108
  %v2198 = vpop.permute.xlu0 %2197
  %2199 = vrot.lane.b32.xlu0 %v2174, 108
  %v2200 = vpop.permute.xlu0 %2199
  %2201 = vrot.lane.b32.xlu0 %v2154, 108
  %v2202 = vpop.permute.xlu0 %2201
  %2203 = vrot.lane.b32.xlu0 %v2175, 108
  %v2204 = vpop.permute.xlu0 %2203
  %2205 = vrot.lane.b32.xlu0 %v2155, 108
  %v2206 = vpop.permute.xlu0 %2205
  %2207 = vrot.lane.b32.xlu0 %v2176, 108
  %v2208 = vpop.permute.xlu0 %2207
  %2209 = vrot.lane.b32.xlu0 %v2156, 108
  %v2210 = vpop.permute.xlu0 %2209
  %2211 = vrot.lane.b32.xlu0 %v2177, 108
  %v2212 = vpop.permute.xlu0 %2211
  %2213 = vrot.lane.b32.xlu0 %v2157, 108
  %v2214 = vpop.permute.xlu0 %2213
  %2215 = vrot.lane.b32.xlu0 %v2178, 108
  %v2216 = vpop.permute.xlu0 %2215
  %2217 = vrot.lane.b32.xlu0 %v2158, 108
  %v2218 = vpop.permute.xlu0 %2217
  %vm2219 = vcmask 883712
  %v2220 = vsel %vm2219, %v2180, %v2182
  %v2221 = vsel %vm2219, %v2182, %v2184
  %v2222 = vsel %vm2219, %v2184, %v2186
  %v2223 = vsel %vm2219, %v2186, %v2188
  %v2224 = vsel %vm2219, %v2188, %v2190
  %v2225 = vsel %vm2219, %v2190, %v2192
  %v2226 = vsel %vm2219, %v2192, %v2194
  %v2227 = vsel %vm2219, %v2194, %v2196
  %v2228 = vsel %vm2219, %v2196, %v2198
  %v2229 = vsel %vm2219, %v2198, %v2200
  %v2230 = vsel %vm2219, %v2200, %v2202
  %v2231 = vsel %vm2219, %v2202, %v2204
  %v2232 = vsel %vm2219, %v2204, %v2206
  %v2233 = vsel %vm2219, %v2206, %v2208
  %v2234 = vsel %vm2219, %v2208, %v2210
  %v2235 = vsel %vm2219, %v2210, %v2212
  %v2236 = vsel %vm2219, %v2212, %v2214
  %v2237 = vsel %vm2219, %v2214, %v2216
  %v2238 = vsel %vm2219, %v2216, %v2218
  %2258 = vst [vmem:[#allocation2 + $0x4c0] sm:$0xf0] %v2220
  %2259 = vst [vmem:[#allocation2 + $0x4c8] sm:$0xf0] %v2221
  %2260 = vst [vmem:[#allocation2 + $0x4d0] sm:$0xf0] %v2222
  %2261 = vst [vmem:[#allocation2 + $0x4d8] sm:$0xf0] %v2223
  %2262 = vst [vmem:[#allocation2 + $0x4e0] sm:$0xf0] %v2224
  %2263 = vst [vmem:[#allocation2 + $0x4e8] sm:$0xf0] %v2225
  %2264 = vst [vmem:[#allocation2 + $0x4f0] sm:$0xf0] %v2226
  %2265 = vst [vmem:[#allocation2 + $0x4f8] sm:$0xf0] %v2227
  %2266 = vst [vmem:[#allocation2 + $0x500] sm:$0xf0] %v2228
  %2267 = vst [vmem:[#allocation2 + $0x508] sm:$0xf0] %v2229
  %2268 = vst [vmem:[#allocation2 + $0x510] sm:$0xf0] %v2230
  %2269 = vst [vmem:[#allocation2 + $0x518] sm:$0xf0] %v2231
  %2270 = vst [vmem:[#allocation2 + $0x520] sm:$0xf0] %v2232
  %2271 = vst [vmem:[#allocation2 + $0x528] sm:$0xf0] %v2233
  %2272 = vst [vmem:[#allocation2 + $0x530] sm:$0xf0] %v2234
  %2273 = vst [vmem:[#allocation2 + $0x538] sm:$0xf0] %v2235
  %2274 = vst [vmem:[#allocation2 + $0x540] sm:$0xf0] %v2236
  %2275 = vst [vmem:[#allocation2 + $0x548] sm:$0xf0] %v2237
  %2276 = vst [vmem:[#allocation2 + $0x550] sm:$0xf0] %v2238
  %v2277 = vld [vmem:[%s2] sm:$0xff]
  %v2278 = vld [vmem:[%s2 + $0x8] sm:$0xff]
  %v2279 = vld [vmem:[%s2 + $0x10] sm:$0xf]
  %v2282 = vcombine.high %v2277, %v2277
  %v2283 = vcombine.high %v2278, %v2278
  %2286 = vst [vmem:[#allocation3] sm:$0xf] %v2277
  %2287 = vst [vmem:[#allocation3 + $0x8] sm:$0xf] %v2282
  %2288 = vst [vmem:[#allocation3 + $0x10] sm:$0xf] %v2278
  %2289 = vst [vmem:[#allocation3 + $0x18] sm:$0xf] %v2283
  %2290 = vst [vmem:[#allocation3 + $0x20] sm:$0xf] %v2279
  %v2291 = vld [vmem:[%s3] sm:$0xff]
  %v2292 = vld [vmem:[%s3 + $0x8] sm:$0xff]
  %v2293 = vld [vmem:[%s3 + $0x10] sm:$0xf]
  %v2297 = vcombine.low %v2291, %v2291
  %v2298 = vcombine.low %v2292, %v2292
  %v2299 = vcombine.low %v2293, %v2293
  %2303 = vst [vmem:[#allocation3 + $0xa0] sm:$0xf0] %v2297
  %2304 = vst [vmem:[#allocation3 + $0xa8] sm:$0xf0] %v2291
  %2305 = vst [vmem:[#allocation3 + $0xb0] sm:$0xf0] %v2298
  %2306 = vst [vmem:[#allocation3 + $0xb8] sm:$0xf0] %v2292
  %2307 = vst [vmem:[#allocation3 + $0xc0] sm:$0xf0] %v2299
  %v2308 = vld [vmem:[%s2] sm:$0xff]
  %v2309 = vld [vmem:[%s2 + $0x8] sm:$0xff]
  %v2310 = vld [vmem:[%s2 + $0x10] sm:$0xff]
  %v2314 = vcombine.low %v2308, %v2308
  %v2315 = vcombine.low %v2309, %v2309
  %v2316 = vcombine.low %v2310, %v2310
  %2317 = vrot.lane.b32.xlu0 %v2314, 127
  %v2318 = vpop.permute.xlu0 %2317
  %2319 = vrot.lane.b32.xlu0 %v2308, 127
  %v2320 = vpop.permute.xlu0 %2319
  %2321 = vrot.lane.b32.xlu0 %v2315, 127
  %v2322 = vpop.permute.xlu0 %2321
  %2323 = vrot.lane.b32.xlu0 %v2309, 127
  %v2324 = vpop.permute.xlu0 %2323
  %2325 = vrot.lane.b32.xlu0 %v2316, 127
  %v2326 = vpop.permute.xlu0 %2325
  %2327 = vrot.lane.b32.xlu0 %v2310, 127
  %v2328 = vpop.permute.xlu0 %2327
  %vm2329 = vcmask 1039360
  %v2330 = vsel %vm2329, %v2318, %v2320
  %v2331 = vsel %vm2329, %v2320, %v2322
  %v2332 = vsel %vm2329, %v2322, %v2324
  %v2333 = vsel %vm2329, %v2324, %v2326
  %v2334 = vsel %vm2329, %v2326, %v2328
  %2340 = vst [vmem:[#allocation3] sm:$0xf0] %v2330
  %2341 = vst [vmem:[#allocation3 + $0x8] sm:$0xf0] %v2331
  %2342 = vst [vmem:[#allocation3 + $0x10] sm:$0xf0] %v2332
  %2343 = vst [vmem:[#allocation3 + $0x18] sm:$0xf0] %v2333
  %2344 = vst [vmem:[#allocation3 + $0x20] sm:$0xf0] %v2334
  %v2345 = vld [vmem:[%s3] sm:$0xff]
  %v2346 = vld [vmem:[%s3 + $0x8] sm:$0xff]
  %v2347 = vld [vmem:[%s3 + $0x10] sm:$0xff]
  %v2351 = vcombine.high %v2345, %v2345
  %v2352 = vcombine.high %v2346, %v2346
  %v2353 = vcombine.high %v2347, %v2347
  %2354 = vrot.lane.b32.xlu0 %v2345, 127
  %v2355 = vpop.permute.xlu0 %2354
  %2356 = vrot.lane.b32.xlu0 %v2351, 127
  %v2357 = vpop.permute.xlu0 %2356
  %2358 = vrot.lane.b32.xlu0 %v2346, 127
  %v2359 = vpop.permute.xlu0 %2358
  %2360 = vrot.lane.b32.xlu0 %v2352, 127
  %v2361 = vpop.permute.xlu0 %2360
  %2362 = vrot.lane.b32.xlu0 %v2347, 127
  %v2363 = vpop.permute.xlu0 %2362
  %2364 = vrot.lane.b32.xlu0 %v2353, 127
  %v2365 = vpop.permute.xlu0 %2364
  %v2366 = vsel %vm2329, %v2355, %v2357
  %v2367 = vsel %vm2329, %v2357, %v2359
  %v2368 = vsel %vm2329, %v2359, %v2361
  %v2369 = vsel %vm2329, %v2361, %v2363
  %v2370 = vsel %vm2329, %v2363, %v2365
  %2376 = vst [vmem:[#allocation3 + $0xc8] sm:$0xf] %v2366
  %2377 = vst [vmem:[#allocation3 + $0xd0] sm:$0xf] %v2367
  %2378 = vst [vmem:[#allocation3 + $0xd8] sm:$0xf] %v2368
  %2379 = vst [vmem:[#allocation3 + $0xe0] sm:$0xf] %v2369
  %2380 = vst [vmem:[#allocation3 + $0xe8] sm:$0xf] %v2370
  %v2381 = vld [vmem:[%s2] sm:$0xff]
  %v2382 = vld [vmem:[%s2 + $0x8] sm:$0xff]
  %v2383 = vld [vmem:[%s2 + $0x10] sm:$0xff]
  %v2387 = vcombine.high %v2381, %v2381
  %v2388 = vcombine.high %v2382, %v2382
  %v2389 = vcombine.high %v2383, %v2383
  %2390 = vrot.lane.b32.xlu0 %v2381, 126
  %v2391 = vpop.permute.xlu0 %2390
  %2392 = vrot.lane.b32.xlu0 %v2387, 126
  %v2393 = vpop.permute.xlu0 %2392
  %2394 = vrot.lane.b32.xlu0 %v2382, 126
  %v2395 = vpop.permute.xlu0 %2394
  %2396 = vrot.lane.b32.xlu0 %v2388, 126
  %v2397 = vpop.permute.xlu0 %2396
  %2398 = vrot.lane.b32.xlu0 %v2383, 126
  %v2399 = vpop.permute.xlu0 %2398
  %2400 = vrot.lane.b32.xlu0 %v2389, 126
  %v2401 = vpop.permute.xlu0 %2400
  %v2402 = vsel %vm428, %v2391, %v2393
  %v2403 = vsel %vm428, %v2393, %v2395
  %v2404 = vsel %vm428, %v2395, %v2397
  %v2405 = vsel %vm428, %v2397, %v2399
  %v2406 = vsel %vm428, %v2399, %v2401
  %2412 = vst [vmem:[#allocation3 + $0x28] sm:$0xf] %v2402
  %2413 = vst [vmem:[#allocation3 + $0x30] sm:$0xf] %v2403
  %2414 = vst [vmem:[#allocation3 + $0x38] sm:$0xf] %v2404
  %2415 = vst [vmem:[#allocation3 + $0x40] sm:$0xf] %v2405
  %2416 = vst [vmem:[#allocation3 + $0x48] sm:$0xf] %v2406
  %v2417 = vld [vmem:[%s3] sm:$0xff]
  %v2418 = vld [vmem:[%s3 + $0x8] sm:$0xff]
  %v2419 = vld [vmem:[%s3 + $0x10] sm:$0xff]
  %v2423 = vcombine.low %v2417, %v2417
  %v2424 = vcombine.low %v2418, %v2418
  %v2425 = vcombine.low %v2419, %v2419
  %2426 = vrot.lane.b32.xlu0 %v2423, 126
  %v2427 = vpop.permute.xlu0 %2426
  %2428 = vrot.lane.b32.xlu0 %v2417, 126
  %v2429 = vpop.permute.xlu0 %2428
  %2430 = vrot.lane.b32.xlu0 %v2424, 126
  %v2431 = vpop.permute.xlu0 %2430
  %2432 = vrot.lane.b32.xlu0 %v2418, 126
  %v2433 = vpop.permute.xlu0 %2432
  %2434 = vrot.lane.b32.xlu0 %v2425, 126
  %v2435 = vpop.permute.xlu0 %2434
  %2436 = vrot.lane.b32.xlu0 %v2419, 126
  %v2437 = vpop.permute.xlu0 %2436
  %v2438 = vsel %vm428, %v2427, %v2429
  %v2439 = vsel %vm428, %v2429, %v2431
  %v2440 = vsel %vm428, %v2431, %v2433
  %v2441 = vsel %vm428, %v2433, %v2435
  %v2442 = vsel %vm428, %v2435, %v2437
  %2448 = vst [vmem:[#allocation3 + $0xc8] sm:$0xf0] %v2438
  %2449 = vst [vmem:[#allocation3 + $0xd0] sm:$0xf0] %v2439
  %2450 = vst [vmem:[#allocation3 + $0xd8] sm:$0xf0] %v2440
  %2451 = vst [vmem:[#allocation3 + $0xe0] sm:$0xf0] %v2441
  %2452 = vst [vmem:[#allocation3 + $0xe8] sm:$0xf0] %v2442
  %v2453 = vld [vmem:[%s2] sm:$0xff]
  %v2454 = vld [vmem:[%s2 + $0x8] sm:$0xff]
  %v2455 = vld [vmem:[%s2 + $0x10] sm:$0xff]
  %v2459 = vcombine.low %v2453, %v2453
  %v2460 = vcombine.low %v2454, %v2454
  %v2461 = vcombine.low %v2455, %v2455
  %2462 = vrot.lane.b32.xlu0 %v2459, 110
  %v2463 = vpop.permute.xlu0 %2462
  %2464 = vrot.lane.b32.xlu0 %v2453, 110
  %v2465 = vpop.permute.xlu0 %2464
  %2466 = vrot.lane.b32.xlu0 %v2460, 110
  %v2467 = vpop.permute.xlu0 %2466
  %2468 = vrot.lane.b32.xlu0 %v2454, 110
  %v2469 = vpop.permute.xlu0 %2468
  %2470 = vrot.lane.b32.xlu0 %v2461, 110
  %v2471 = vpop.permute.xlu0 %2470
  %2472 = vrot.lane.b32.xlu0 %v2455, 110
  %v2473 = vpop.permute.xlu0 %2472
  %v2474 = vsel %vm1963, %v2463, %v2465
  %v2475 = vsel %vm1963, %v2465, %v2467
  %v2476 = vsel %vm1963, %v2467, %v2469
  %v2477 = vsel %vm1963, %v2469, %v2471
  %v2478 = vsel %vm1963, %v2471, %v2473
  %2484 = vst [vmem:[#allocation3 + $0x28] sm:$0xf0] %v2474
  %2485 = vst [vmem:[#allocation3 + $0x30] sm:$0xf0] %v2475
  %2486 = vst [vmem:[#allocation3 + $0x38] sm:$0xf0] %v2476
  %2487 = vst [vmem:[#allocation3 + $0x40] sm:$0xf0] %v2477
  %2488 = vst [vmem:[#allocation3 + $0x48] sm:$0xf0] %v2478
  %v2489 = vld [vmem:[%s3] sm:$0xff]
  %v2490 = vld [vmem:[%s3 + $0x8] sm:$0xff]
  %v2491 = vld [vmem:[%s3 + $0x10] sm:$0xff]
  %v2495 = vcombine.high %v2489, %v2489
  %v2496 = vcombine.high %v2490, %v2490
  %v2497 = vcombine.high %v2491, %v2491
  %2498 = vrot.lane.b32.xlu0 %v2489, 110
  %v2499 = vpop.permute.xlu0 %2498
  %2500 = vrot.lane.b32.xlu0 %v2495, 110
  %v2501 = vpop.permute.xlu0 %2500
  %2502 = vrot.lane.b32.xlu0 %v2490, 110
  %v2503 = vpop.permute.xlu0 %2502
  %2504 = vrot.lane.b32.xlu0 %v2496, 110
  %v2505 = vpop.permute.xlu0 %2504
  %2506 = vrot.lane.b32.xlu0 %v2491, 110
  %v2507 = vpop.permute.xlu0 %2506
  %2508 = vrot.lane.b32.xlu0 %v2497, 110
  %v2509 = vpop.permute.xlu0 %2508
  %v2510 = vsel %vm1963, %v2499, %v2501
  %v2511 = vsel %vm1963, %v2501, %v2503
  %v2512 = vsel %vm1963, %v2503, %v2505
  %v2513 = vsel %vm1963, %v2505, %v2507
  %v2514 = vsel %vm1963, %v2507, %v2509
  %2520 = vst [vmem:[#allocation3 + $0xf0] sm:$0xf] %v2510
  %2521 = vst [vmem:[#allocation3 + $0xf8] sm:$0xf] %v2511
  %2522 = vst [vmem:[#allocation3 + $0x100] sm:$0xf] %v2512
  %2523 = vst [vmem:[#allocation3 + $0x108] sm:$0xf] %v2513
  %2524 = vst [vmem:[#allocation3 + $0x110] sm:$0xf] %v2514
  %v2525 = vld [vmem:[%s2] sm:$0xff]
  %v2526 = vld [vmem:[%s2 + $0x8] sm:$0xff]
  %v2527 = vld [vmem:[%s2 + $0x10] sm:$0xff]
  %v2531 = vcombine.high %v2525, %v2525
  %v2532 = vcombine.high %v2526, %v2526
  %v2533 = vcombine.high %v2527, %v2527
  %2534 = vrot.lane.b32.xlu0 %v2525, 109
  %v2535 = vpop.permute.xlu0 %2534
  %2536 = vrot.lane.b32.xlu0 %v2531, 109
  %v2537 = vpop.permute.xlu0 %2536
  %2538 = vrot.lane.b32.xlu0 %v2526, 109
  %v2539 = vpop.permute.xlu0 %2538
  %2540 = vrot.lane.b32.xlu0 %v2532, 109
  %v2541 = vpop.permute.xlu0 %2540
  %2542 = vrot.lane.b32.xlu0 %v2527, 109
  %v2543 = vpop.permute.xlu0 %2542
  %2544 = vrot.lane.b32.xlu0 %v2533, 109
  %v2545 = vpop.permute.xlu0 %2544
  %vm2546 = vcmask 891904
  %v2547 = vsel %vm2546, %v2535, %v2537
  %v2548 = vsel %vm2546, %v2537, %v2539
  %v2549 = vsel %vm2546, %v2539, %v2541
  %v2550 = vsel %vm2546, %v2541, %v2543
  %v2551 = vsel %vm2546, %v2543, %v2545
  %2557 = vst [vmem:[#allocation3 + $0x50] sm:$0xf] %v2547
  %2558 = vst [vmem:[#allocation3 + $0x58] sm:$0xf] %v2548
  %2559 = vst [vmem:[#allocation3 + $0x60] sm:$0xf] %v2549
  %2560 = vst [vmem:[#allocation3 + $0x68] sm:$0xf] %v2550
  %2561 = vst [vmem:[#allocation3 + $0x70] sm:$0xf] %v2551
  %v2562 = vld [vmem:[%s3] sm:$0xff]
  %v2563 = vld [vmem:[%s3 + $0x8] sm:$0xff]
  %v2564 = vld [vmem:[%s3 + $0x10] sm:$0xff]
  %v2568 = vcombine.low %v2562, %v2562
  %v2569 = vcombine.low %v2563, %v2563
  %v2570 = vcombine.low %v2564, %v2564
  %2571 = vrot.lane.b32.xlu0 %v2568, 109
  %v2572 = vpop.permute.xlu0 %2571
  %2573 = vrot.lane.b32.xlu0 %v2562, 109
  %v2574 = vpop.permute.xlu0 %2573
  %2575 = vrot.lane.b32.xlu0 %v2569, 109
  %v2576 = vpop.permute.xlu0 %2575
  %2577 = vrot.lane.b32.xlu0 %v2563, 109
  %v2578 = vpop.permute.xlu0 %2577
  %2579 = vrot.lane.b32.xlu0 %v2570, 109
  %v2580 = vpop.permute.xlu0 %2579
  %2581 = vrot.lane.b32.xlu0 %v2564, 109
  %v2582 = vpop.permute.xlu0 %2581
  %v2583 = vsel %vm2546, %v2572, %v2574
  %v2584 = vsel %vm2546, %v2574, %v2576
  %v2585 = vsel %vm2546, %v2576, %v2578
  %v2586 = vsel %vm2546, %v2578, %v2580
  %v2587 = vsel %vm2546, %v2580, %v2582
  %2593 = vst [vmem:[#allocation3 + $0xf0] sm:$0xf0] %v2583
  %2594 = vst [vmem:[#allocation3 + $0xf8] sm:$0xf0] %v2584
  %2595 = vst [vmem:[#allocation3 + $0x100] sm:$0xf0] %v2585
  %2596 = vst [vmem:[#allocation3 + $0x108] sm:$0xf0] %v2586
  %2597 = vst [vmem:[#allocation3 + $0x110] sm:$0xf0] %v2587
  %v2598 = vld [vmem:[%s2] sm:$0xff]
  %v2599 = vld [vmem:[%s2 + $0x8] sm:$0xff]
  %v2600 = vld [vmem:[%s2 + $0x10] sm:$0xff]
  %v2604 = vcombine.low %v2598, %v2598
  %v2605 = vcombine.low %v2599, %v2599
  %v2606 = vcombine.low %v2600, %v2600
  %2607 = vrot.lane.b32.xlu0 %v2604, 108
  %v2608 = vpop.permute.xlu0 %2607
  %2609 = vrot.lane.b32.xlu0 %v2598, 108
  %v2610 = vpop.permute.xlu0 %2609
  %2611 = vrot.lane.b32.xlu0 %v2605, 108
  %v2612 = vpop.permute.xlu0 %2611
  %2613 = vrot.lane.b32.xlu0 %v2599, 108
  %v2614 = vpop.permute.xlu0 %2613
  %2615 = vrot.lane.b32.xlu0 %v2606, 108
  %v2616 = vpop.permute.xlu0 %2615
  %2617 = vrot.lane.b32.xlu0 %v2600, 108
  %v2618 = vpop.permute.xlu0 %2617
  %v2619 = vsel %vm2219, %v2608, %v2610
  %v2620 = vsel %vm2219, %v2610, %v2612
  %v2621 = vsel %vm2219, %v2612, %v2614
  %v2622 = vsel %vm2219, %v2614, %v2616
  %v2623 = vsel %vm2219, %v2616, %v2618
  %2629 = vst [vmem:[#allocation3 + $0x50] sm:$0xf0] %v2619
  %2630 = vst [vmem:[#allocation3 + $0x58] sm:$0xf0] %v2620
  %2631 = vst [vmem:[#allocation3 + $0x60] sm:$0xf0] %v2621
  %2632 = vst [vmem:[#allocation3 + $0x68] sm:$0xf0] %v2622
  %2633 = vst [vmem:[#allocation3 + $0x70] sm:$0xf0] %v2623
  %v2634 = vld [vmem:[%s3] sm:$0xff]
  %v2635 = vld [vmem:[%s3 + $0x8] sm:$0xff]
  %v2636 = vld [vmem:[%s3 + $0x10] sm:$0xff]
  %v2640 = vcombine.high %v2634, %v2634
  %v2641 = vcombine.high %v2635, %v2635
  %v2642 = vcombine.high %v2636, %v2636
  %2643 = vrot.lane.b32.xlu0 %v2634, 108
  %v2644 = vpop.permute.xlu0 %2643
  %2645 = vrot.lane.b32.xlu0 %v2640, 108
  %v2646 = vpop.permute.xlu0 %2645
  %2647 = vrot.lane.b32.xlu0 %v2635, 108
  %v2648 = vpop.permute.xlu0 %2647
  %2649 = vrot.lane.b32.xlu0 %v2641, 108
  %v2650 = vpop.permute.xlu0 %2649
  %2651 = vrot.lane.b32.xlu0 %v2636, 108
  %v2652 = vpop.permute.xlu0 %2651
  %2653 = vrot.lane.b32.xlu0 %v2642, 108
  %v2654 = vpop.permute.xlu0 %2653
  %v2655 = vsel %vm2219, %v2644, %v2646
  %v2656 = vsel %vm2219, %v2646, %v2648
  %v2657 = vsel %vm2219, %v2648, %v2650
  %v2658 = vsel %vm2219, %v2650, %v2652
  %v2659 = vsel %vm2219, %v2652, %v2654
  %2665 = vst [vmem:[#allocation3 + $0x118] sm:$0xf] %v2655
  %2666 = vst [vmem:[#allocation3 + $0x120] sm:$0xf] %v2656
  %2667 = vst [vmem:[#allocation3 + $0x128] sm:$0xf] %v2657
  %2668 = vst [vmem:[#allocation3 + $0x130] sm:$0xf] %v2658
  %2669 = vst [vmem:[#allocation3 + $0x138] sm:$0xf] %v2659
  %v2670 = vld [vmem:[%s2] sm:$0xff]
  %v2671 = vld [vmem:[%s2 + $0x8] sm:$0xff]
  %v2672 = vld [vmem:[%s2 + $0x10] sm:$0xff]
  %v2676 = vcombine.high %v2670, %v2670
  %v2677 = vcombine.high %v2671, %v2671
  %v2678 = vcombine.high %v2672, %v2672
  %2679 = vrot.lane.b32.xlu0 %v2670, 92
  %v2680 = vpop.permute.xlu0 %2679
  %2681 = vrot.lane.b32.xlu0 %v2676, 92
  %v2682 = vpop.permute.xlu0 %2681
  %2683 = vrot.lane.b32.xlu0 %v2671, 92
  %v2684 = vpop.permute.xlu0 %2683
  %2685 = vrot.lane.b32.xlu0 %v2677, 92
  %v2686 = vpop.permute.xlu0 %2685
  %2687 = vrot.lane.b32.xlu0 %v2672, 92
  %v2688 = vpop.permute.xlu0 %2687
  %2689 = vrot.lane.b32.xlu0 %v2678, 92
  %v2690 = vpop.permute.xlu0 %2689
  %vm2691 = vcmask 752640
  %v2692 = vsel %vm2691, %v2680, %v2682
  %v2693 = vsel %vm2691, %v2682, %v2684
  %v2694 = vsel %vm2691, %v2684, %v2686
  %v2695 = vsel %vm2691, %v2686, %v2688
  %v2696 = vsel %vm2691, %v2688, %v2690
  %2702 = vst [vmem:[#allocation3 + $0x78] sm:$0xf] %v2692
  %2703 = vst [vmem:[#allocation3 + $0x80] sm:$0xf] %v2693
  %2704 = vst [vmem:[#allocation3 + $0x88] sm:$0xf] %v2694
  %2705 = vst [vmem:[#allocation3 + $0x90] sm:$0xf] %v2695
  %2706 = vst [vmem:[#allocation3 + $0x98] sm:$0xf] %v2696
  %v2707 = vld [vmem:[%s3] sm:$0xff]
  %v2708 = vld [vmem:[%s3 + $0x8] sm:$0xff]
  %v2709 = vld [vmem:[%s3 + $0x10] sm:$0xff]
  %v2713 = vcombine.low %v2707, %v2707
  %v2714 = vcombine.low %v2708, %v2708
  %v2715 = vcombine.low %v2709, %v2709
  %2716 = vrot.lane.b32.xlu0 %v2713, 92
  %v2717 = vpop.permute.xlu0 %2716
  %2718 = vrot.lane.b32.xlu0 %v2707, 92
  %v2719 = vpop.permute.xlu0 %2718
  %2720 = vrot.lane.b32.xlu0 %v2714, 92
  %v2721 = vpop.permute.xlu0 %2720
  %2722 = vrot.lane.b32.xlu0 %v2708, 92
  %v2723 = vpop.permute.xlu0 %2722
  %2724 = vrot.lane.b32.xlu0 %v2715, 92
  %v2725 = vpop.permute.xlu0 %2724
  %2726 = vrot.lane.b32.xlu0 %v2709, 92
  %v2727 = vpop.permute.xlu0 %2726
  %v2728 = vsel %vm2691, %v2717, %v2719
  %v2729 = vsel %vm2691, %v2719, %v2721
  %v2730 = vsel %vm2691, %v2721, %v2723
  %v2731 = vsel %vm2691, %v2723, %v2725
  %v2732 = vsel %vm2691, %v2725, %v2727
  %2738 = vst [vmem:[#allocation3 + $0x118] sm:$0xf0] %v2728
  %2739 = vst [vmem:[#allocation3 + $0x120] sm:$0xf0] %v2729
  %2740 = vst [vmem:[#allocation3 + $0x128] sm:$0xf0] %v2730
  %2741 = vst [vmem:[#allocation3 + $0x130] sm:$0xf0] %v2731
  %2742 = vst [vmem:[#allocation3 + $0x138] sm:$0xf0] %v2732
  %v2743 = vld [vmem:[%s2] sm:$0xff]
  %v2744 = vld [vmem:[%s2 + $0x8] sm:$0xff]
  %v2745 = vld [vmem:[%s2 + $0x10] sm:$0xff]
  %v2749 = vcombine.low %v2743, %v2743
  %v2750 = vcombine.low %v2744, %v2744
  %v2751 = vcombine.low %v2745, %v2745
  %2752 = vrot.lane.b32.xlu0 %v2749, 91
  %v2753 = vpop.permute.xlu0 %2752
  %2754 = vrot.lane.b32.xlu0 %v2743, 91
  %v2755 = vpop.permute.xlu0 %2754
  %2756 = vrot.lane.b32.xlu0 %v2750, 91
  %v2757 = vpop.permute.xlu0 %2756
  %2758 = vrot.lane.b32.xlu0 %v2744, 91
  %v2759 = vpop.permute.xlu0 %2758
  %2760 = vrot.lane.b32.xlu0 %v2751, 91
  %v2761 = vpop.permute.xlu0 %2760
  %2762 = vrot.lane.b32.xlu0 %v2745, 91
  %v2763 = vpop.permute.xlu0 %2762
  %v2764 = vsel %vm113, %v2753, %v2755
  %v2765 = vsel %vm113, %v2755, %v2757
  %v2766 = vsel %vm113, %v2757, %v2759
  %v2767 = vsel %vm113, %v2759, %v2761
  %v2768 = vsel %vm113, %v2761, %v2763
  %2774 = vst [vmem:[#allocation3 + $0x78] sm:$0xf0] %v2764
  %2775 = vst [vmem:[#allocation3 + $0x80] sm:$0xf0] %v2765
  %2776 = vst [vmem:[#allocation3 + $0x88] sm:$0xf0] %v2766
  %2777 = vst [vmem:[#allocation3 + $0x90] sm:$0xf0] %v2767
  %2778 = vst [vmem:[#allocation3 + $0x98] sm:$0xf0] %v2768
  %v2779 = vld [vmem:[%s3] sm:$0xff]
  %v2780 = vld [vmem:[%s3 + $0x8] sm:$0xff]
  %v2781 = vld [vmem:[%s3 + $0x10] sm:$0xff]
  %v2785 = vcombine.high %v2779, %v2779
  %v2786 = vcombine.high %v2780, %v2780
  %v2787 = vcombine.high %v2781, %v2781
  %2788 = vrot.lane.b32.xlu0 %v2779, 91
  %v2789 = vpop.permute.xlu0 %2788
  %2790 = vrot.lane.b32.xlu0 %v2785, 91
  %v2791 = vpop.permute.xlu0 %2790
  %2792 = vrot.lane.b32.xlu0 %v2780, 91
  %v2793 = vpop.permute.xlu0 %2792
  %2794 = vrot.lane.b32.xlu0 %v2786, 91
  %v2795 = vpop.permute.xlu0 %2794
  %2796 = vrot.lane.b32.xlu0 %v2781, 91
  %v2797 = vpop.permute.xlu0 %2796
  %2798 = vrot.lane.b32.xlu0 %v2787, 91
  %v2799 = vpop.permute.xlu0 %2798
  %v2800 = vsel %vm113, %v2789, %v2791
  %v2801 = vsel %vm113, %v2791, %v2793
  %v2802 = vsel %vm113, %v2793, %v2795
  %v2803 = vsel %vm113, %v2795, %v2797
  %v2804 = vsel %vm113, %v2797, %v2799
  %2810 = vst [vmem:[#allocation3 + $0x140] sm:$0xf] %v2800
  %2811 = vst [vmem:[#allocation3 + $0x148] sm:$0xf] %v2801
  %2812 = vst [vmem:[#allocation3 + $0x150] sm:$0xf] %v2802
  %2813 = vst [vmem:[#allocation3 + $0x158] sm:$0xf] %v2803
  %2814 = vst [vmem:[#allocation3 + $0x160] sm:$0xf] %v2804
  %v2815 = vld [vmem:[%s2] sm:$0xff]
  %v2816 = vld [vmem:[%s2 + $0x8] sm:$0xff]
  %v2817 = vld [vmem:[%s2 + $0x10] sm:$0xff]
  %v2821 = vcombine.high %v2815, %v2815
  %v2822 = vcombine.high %v2816, %v2816
  %v2823 = vcombine.high %v2817, %v2817
  %2824 = vrot.lane.b32.xlu0 %v2815, 90
  %v2825 = vpop.permute.xlu0 %2824
  %2826 = vrot.lane.b32.xlu0 %v2821, 90
  %v2827 = vpop.permute.xlu0 %2826
  %2828 = vrot.lane.b32.xlu0 %v2816, 90
  %v2829 = vpop.permute.xlu0 %2828
  %2830 = vrot.lane.b32.xlu0 %v2822, 90
  %v2831 = vpop.permute.xlu0 %2830
  %2832 = vrot.lane.b32.xlu0 %v2817, 90
  %v2833 = vpop.permute.xlu0 %2832
  %2834 = vrot.lane.b32.xlu0 %v2823, 90
  %v2835 = vpop.permute.xlu0 %2834
  %v2836 = vsel %vm300, %v2825, %v2827
  %v2837 = vsel %vm300, %v2827, %v2829
  %v2838 = vsel %vm300, %v2829, %v2831
  %v2839 = vsel %vm300, %v2831, %v2833
  %v2840 = vsel %vm300, %v2833, %v2835
  %2846 = vst [vmem:[#allocation3 + $0xa0] sm:$0xf] %v2836
  %2847 = vst [vmem:[#allocation3 + $0xa8] sm:$0xf] %v2837
  %2848 = vst [vmem:[#allocation3 + $0xb0] sm:$0xf] %v2838
  %2849 = vst [vmem:[#allocation3 + $0xb8] sm:$0xf] %v2839
  %2850 = vst [vmem:[#allocation3 + $0xc0] sm:$0xf] %v2840
  %v2851 = vld [vmem:[%s3] sm:$0xff]
  %v2852 = vld [vmem:[%s3 + $0x8] sm:$0xff]
  %v2853 = vld [vmem:[%s3 + $0x10] sm:$0xff]
  %v2857 = vcombine.low %v2851, %v2851
  %v2858 = vcombine.low %v2852, %v2852
  %v2859 = vcombine.low %v2853, %v2853
  %2860 = vrot.lane.b32.xlu0 %v2857, 90
  %v2861 = vpop.permute.xlu0 %2860
  %2862 = vrot.lane.b32.xlu0 %v2851, 90
  %v2863 = vpop.permute.xlu0 %2862
  %2864 = vrot.lane.b32.xlu0 %v2858, 90
  %v2865 = vpop.permute.xlu0 %2864
  %2866 = vrot.lane.b32.xlu0 %v2852, 90
  %v2867 = vpop.permute.xlu0 %2866
  %2868 = vrot.lane.b32.xlu0 %v2859, 90
  %v2869 = vpop.permute.xlu0 %2868
  %2870 = vrot.lane.b32.xlu0 %v2853, 90
  %v2871 = vpop.permute.xlu0 %2870
  %v2872 = vsel %vm300, %v2861, %v2863
  %v2873 = vsel %vm300, %v2863, %v2865
  %v2874 = vsel %vm300, %v2865, %v2867
  %v2875 = vsel %vm300, %v2867, %v2869
  %v2876 = vsel %vm300, %v2869, %v2871
  %2882 = vst [vmem:[#allocation3 + $0x140] sm:$0xf0] %v2872
  %2883 = vst [vmem:[#allocation3 + $0x148] sm:$0xf0] %v2873
  %2884 = vst [vmem:[#allocation3 + $0x150] sm:$0xf0] %v2874
  %2885 = vst [vmem:[#allocation3 + $0x158] sm:$0xf0] %v2875
  %2886 = vst [vmem:[#allocation3 + $0x160] sm:$0xf0] %v2876
  %v2887 = vld [vmem:[%s4] sm:$0xf]
  %v2888 = vld [vmem:[#allocation2] sm:$0xff]
  %v2889 = vld [vmem:[#allocation2 + $0x8] sm:$0xff]
  %v2890 = vld [vmem:[#allocation2 + $0x10] sm:$0xff]
  %v2891 = vld [vmem:[#allocation2 + $0x18] sm:$0xff]
  %v2892 = vld [vmem:[#allocation2 + $0x20] sm:$0xff]
  %v2893 = vld [vmem:[#allocation2 + $0x28] sm:$0xff]
  %v2894 = vld [vmem:[#allocation2 + $0x30] sm:$0xff]
  %v2895 = vld [vmem:[#allocation2 + $0x38] sm:$0xff]
  %v2896 = vld [vmem:[#allocation2 + $0x40] sm:$0xff]
  %v2897 = vld [vmem:[#allocation2 + $0x48] sm:$0xff]
  %v2898 = vld [vmem:[#allocation2 + $0x50] sm:$0xff]
  %v2899 = vld [vmem:[#allocation2 + $0x58] sm:$0xff]
  %v2900 = vld [vmem:[#allocation2 + $0x60] sm:$0xff]
  %v2901 = vld [vmem:[#allocation2 + $0x68] sm:$0xff]
  %v2902 = vld [vmem:[#allocation2 + $0x70] sm:$0xff]
  %v2903 = vld [vmem:[#allocation2 + $0x78] sm:$0xff]
  %v2904 = vld [vmem:[#allocation2 + $0x80] sm:$0xff]
  %v2905 = vld [vmem:[#allocation2 + $0x88] sm:$0xff]
  %v2906 = vld [vmem:[#allocation2 + $0x90] sm:$0xff]
  %v2907 = vld [vmem:[#allocation2 + $0x98] sm:$0xff]
  %v2908 = vld [vmem:[#allocation2 + $0xa0] sm:$0xff]
  %v2909 = vld [vmem:[#allocation2 + $0xa8] sm:$0xff]
  %v2910 = vld [vmem:[#allocation2 + $0xb0] sm:$0xff]
  %v2911 = vld [vmem:[#allocation2 + $0xb8] sm:$0xff]
  %v2912 = vld [vmem:[#allocation2 + $0xc0] sm:$0xff]
  %v2913 = vld [vmem:[#allocation2 + $0xc8] sm:$0xff]
  %v2914 = vld [vmem:[#allocation2 + $0xd0] sm:$0xff]
  %v2915 = vld [vmem:[#allocation2 + $0xd8] sm:$0xff]
  %v2916 = vld [vmem:[#allocation2 + $0xe0] sm:$0xff]
  %v2917 = vld [vmem:[#allocation2 + $0xe8] sm:$0xff]
  %v2918 = vld [vmem:[#allocation2 + $0xf0] sm:$0xff]
  %v2919 = vld [vmem:[#allocation2 + $0xf8] sm:$0xff]
  %v2920 = vld [vmem:[#allocation2 + $0x100] sm:$0xff]
  %v2921 = vld [vmem:[#allocation2 + $0x108] sm:$0xff]
  %v2922 = vld [vmem:[#allocation2 + $0x110] sm:$0xff]
  %v2923 = vld [vmem:[#allocation2 + $0x118] sm:$0xff]
  %v2924 = vld [vmem:[#allocation2 + $0x120] sm:$0xff]
  %v2925 = vld [vmem:[#allocation2 + $0x128] sm:$0xff]
  %v2926 = vld [vmem:[#allocation2 + $0x130] sm:$0xff]
  %v2927 = vld [vmem:[#allocation2 + $0x138] sm:$0xff]
  %v2928 = vld [vmem:[#allocation2 + $0x140] sm:$0xff]
  %v2929 = vld [vmem:[#allocation2 + $0x148] sm:$0xff]
  %v2930 = vld [vmem:[#allocation2 + $0x150] sm:$0xff]
  %v2931 = vld [vmem:[#allocation2 + $0x158] sm:$0xff]
  %v2932 = vld [vmem:[#allocation2 + $0x160] sm:$0xff]
  %v2933 = vld [vmem:[#allocation2 + $0x168] sm:$0xff]
  %v2934 = vld [vmem:[#allocation2 + $0x170] sm:$0xff]
  %v2935 = vld [vmem:[#allocation2 + $0x178] sm:$0xff]
  %v2936 = vld [vmem:[#allocation2 + $0x180] sm:$0xff]
  %v2937 = vld [vmem:[#allocation2 + $0x188] sm:$0xff]
  %v2938 = vld [vmem:[#allocation2 + $0x190] sm:$0xff]
  %v2939 = vld [vmem:[#allocation2 + $0x198] sm:$0xff]
  %v2940 = vld [vmem:[#allocation2 + $0x1a0] sm:$0xff]
  %v2941 = vld [vmem:[#allocation2 + $0x1a8] sm:$0xff]
  %v2942 = vld [vmem:[#allocation2 + $0x1b0] sm:$0xff]
  %v2943 = vld [vmem:[#allocation2 + $0x1b8] sm:$0xff]
  %v2944 = vld [vmem:[#allocation2 + $0x1c0] sm:$0xff]
  %v2945 = vld [vmem:[#allocation2 + $0x1c8] sm:$0xff]
  %v2946 = vld [vmem:[#allocation2 + $0x1d0] sm:$0xff]
  %v2947 = vld [vmem:[#allocation2 + $0x1d8] sm:$0xff]
  %v2948 = vld [vmem:[#allocation2 + $0x1e0] sm:$0xff]
  %v2949 = vld [vmem:[#allocation2 + $0x1e8] sm:$0xff]
  %v2950 = vld [vmem:[#allocation2 + $0x1f0] sm:$0xff]
  %v2951 = vld [vmem:[#allocation2 + $0x1f8] sm:$0xff]
  %v2952 = vld [vmem:[#allocation2 + $0x200] sm:$0xff]
  %v2953 = vld [vmem:[#allocation2 + $0x208] sm:$0xff]
  %v2954 = vld [vmem:[#allocation2 + $0x210] sm:$0xff]
  %v2955 = vld [vmem:[#allocation2 + $0x218] sm:$0xff]
  %v2956 = vld [vmem:[#allocation2 + $0x220] sm:$0xff]
  %v2957 = vld [vmem:[#allocation2 + $0x228] sm:$0xff]
  %v2958 = vld [vmem:[#allocation2 + $0x230] sm:$0xff]
  %v2959 = vld [vmem:[#allocation2 + $0x238] sm:$0xff]
  %v2960 = vld [vmem:[#allocation2 + $0x240] sm:$0xff]
  %v2961 = vld [vmem:[#allocation2 + $0x248] sm:$0xff]
  %v2962 = vld [vmem:[#allocation2 + $0x250] sm:$0xff]
  %v2963 = vld [vmem:[#allocation2 + $0x258] sm:$0xff]
  %v2964 = vld [vmem:[#allocation2 + $0x260] sm:$0xff]
  %v2965 = vld [vmem:[#allocation2 + $0x268] sm:$0xff]
  %v2966 = vld [vmem:[#allocation2 + $0x270] sm:$0xff]
  %v2967 = vld [vmem:[#allocation2 + $0x278] sm:$0xff]
  %v2968 = vld [vmem:[#allocation2 + $0x280] sm:$0xff]
  %v2969 = vld [vmem:[#allocation2 + $0x288] sm:$0xff]
  %v2970 = vld [vmem:[#allocation2 + $0x290] sm:$0xff]
  %v2971 = vld [vmem:[#allocation2 + $0x298] sm:$0xff]
  %v2972 = vld [vmem:[#allocation2 + $0x2a0] sm:$0xff]
  %v2973 = vld [vmem:[#allocation2 + $0x2a8] sm:$0xff]
  %v2974 = vld [vmem:[#allocation2 + $0x2b0] sm:$0xff]
  %v2975 = vld [vmem:[#allocation2 + $0x2b8] sm:$0xff]
  %v2976 = vld [vmem:[#allocation2 + $0x2c0] sm:$0xff]
  %v2977 = vld [vmem:[#allocation2 + $0x2c8] sm:$0xff]
  %v2978 = vld [vmem:[#allocation2 + $0x2d0] sm:$0xff]
  %v2979 = vld [vmem:[#allocation2 + $0x2d8] sm:$0xff]
  %v2980 = vld [vmem:[#allocation2 + $0x2e0] sm:$0xff]
  %v2981 = vld [vmem:[#allocation2 + $0x2e8] sm:$0xff]
  %v2982 = vld [vmem:[#allocation2 + $0x2f0] sm:$0xff]
  %v2983 = vld [vmem:[#allocation2 + $0x2f8] sm:$0xff]
  %v2984 = vld [vmem:[#allocation2 + $0x300] sm:$0xff]
  %v2985 = vld [vmem:[#allocation2 + $0x308] sm:$0xff]
  %v2986 = vld [vmem:[#allocation2 + $0x310] sm:$0xff]
  %v2987 = vld [vmem:[#allocation2 + $0x318] sm:$0xff]
  %v2988 = vld [vmem:[#allocation2 + $0x320] sm:$0xff]
  %v2989 = vld [vmem:[#allocation2 + $0x328] sm:$0xff]
  %v2990 = vld [vmem:[#allocation2 + $0x330] sm:$0xff]
  %v2991 = vld [vmem:[#allocation2 + $0x338] sm:$0xff]
  %v2992 = vld [vmem:[#allocation2 + $0x340] sm:$0xff]
  %v2993 = vld [vmem:[#allocation2 + $0x348] sm:$0xff]
  %v2994 = vld [vmem:[#allocation2 + $0x350] sm:$0xff]
  %v2995 = vld [vmem:[#allocation2 + $0x358] sm:$0xff]
  %v2996 = vld [vmem:[#allocation2 + $0x360] sm:$0xff]
  %v2997 = vld [vmem:[#allocation2 + $0x368] sm:$0xff]
  %v2998 = vld [vmem:[#allocation2 + $0x370] sm:$0xff]
  %v2999 = vld [vmem:[#allocation2 + $0x378] sm:$0xff]
  %v3000 = vld [vmem:[#allocation2 + $0x380] sm:$0xff]
  %v3001 = vld [vmem:[#allocation2 + $0x388] sm:$0xff]
  %v3002 = vld [vmem:[#allocation2 + $0x390] sm:$0xff]
  %v3003 = vld [vmem:[#allocation2 + $0x398] sm:$0xff]
  %v3004 = vld [vmem:[#allocation2 + $0x3a0] sm:$0xff]
  %v3005 = vld [vmem:[#allocation2 + $0x3a8] sm:$0xff]
  %v3006 = vld [vmem:[#allocation2 + $0x3b0] sm:$0xff]
  %v3007 = vld [vmem:[#allocation2 + $0x3b8] sm:$0xff]
  %v3008 = vld [vmem:[#allocation2 + $0x3c0] sm:$0xff]
  %v3009 = vld [vmem:[#allocation2 + $0x3c8] sm:$0xff]
  %v3010 = vld [vmem:[#allocation2 + $0x3d0] sm:$0xff]
  %v3011 = vld [vmem:[#allocation2 + $0x3d8] sm:$0xff]
  %v3012 = vld [vmem:[#allocation2 + $0x3e0] sm:$0xff]
  %v3013 = vld [vmem:[#allocation2 + $0x3e8] sm:$0xff]
  %v3014 = vld [vmem:[#allocation2 + $0x3f0] sm:$0xff]
  %v3015 = vld [vmem:[#allocation2 + $0x3f8] sm:$0xff]
  %v3016 = vld [vmem:[#allocation2 + $0x400] sm:$0xff]
  %v3017 = vld [vmem:[#allocation2 + $0x408] sm:$0xff]
  %v3018 = vld [vmem:[#allocation2 + $0x410] sm:$0xff]
  %v3019 = vld [vmem:[#allocation2 + $0x418] sm:$0xff]
  %v3020 = vld [vmem:[#allocation2 + $0x420] sm:$0xff]
  %v3021 = vld [vmem:[#allocation2 + $0x428] sm:$0xff]
  %v3022 = vld [vmem:[#allocation2 + $0x430] sm:$0xff]
  %v3023 = vld [vmem:[#allocation2 + $0x438] sm:$0xff]
  %v3024 = vld [vmem:[#allocation2 + $0x440] sm:$0xff]
  %v3025 = vld [vmem:[#allocation2 + $0x448] sm:$0xff]
  %v3026 = vld [vmem:[#allocation2 + $0x450] sm:$0xff]
  %v3027 = vld [vmem:[#allocation2 + $0x458] sm:$0xff]
  %v3028 = vld [vmem:[#allocation2 + $0x460] sm:$0xff]
  %v3029 = vld [vmem:[#allocation2 + $0x468] sm:$0xff]
  %v3030 = vld [vmem:[#allocation2 + $0x470] sm:$0xff]
  %v3031 = vld [vmem:[#allocation2 + $0x478] sm:$0xff]
  %v3032 = vld [vmem:[#allocation2 + $0x480] sm:$0xff]
  %v3033 = vld [vmem:[#allocation2 + $0x488] sm:$0xff]
  %v3034 = vld [vmem:[#allocation2 + $0x490] sm:$0xff]
  %v3035 = vld [vmem:[#allocation2 + $0x498] sm:$0xff]
  %v3036 = vld [vmem:[#allocation2 + $0x4a0] sm:$0xff]
  %v3037 = vld [vmem:[#allocation2 + $0x4a8] sm:$0xff]
  %v3038 = vld [vmem:[#allocation2 + $0x4b0] sm:$0xff]
  %v3039 = vld [vmem:[#allocation2 + $0x4b8] sm:$0xff]
  %v3040 = vld [vmem:[#allocation2 + $0x4c0] sm:$0xff]
  %v3041 = vld [vmem:[#allocation2 + $0x4c8] sm:$0xff]
  %v3042 = vld [vmem:[#allocation2 + $0x4d0] sm:$0xff]
  %v3043 = vld [vmem:[#allocation2 + $0x4d8] sm:$0xff]
  %v3044 = vld [vmem:[#allocation2 + $0x4e0] sm:$0xff]
  %v3045 = vld [vmem:[#allocation2 + $0x4e8] sm:$0xff]
  %v3046 = vld [vmem:[#allocation2 + $0x4f0] sm:$0xff]
  %v3047 = vld [vmem:[#allocation2 + $0x4f8] sm:$0xff]
  %v3048 = vld [vmem:[#allocation2 + $0x500] sm:$0xff]
  %v3049 = vld [vmem:[#allocation2 + $0x508] sm:$0xff]
  %v3050 = vld [vmem:[#allocation2 + $0x510] sm:$0xff]
  %v3051 = vld [vmem:[#allocation2 + $0x518] sm:$0xff]
  %v3052 = vld [vmem:[#allocation2 + $0x520] sm:$0xff]
  %v3053 = vld [vmem:[#allocation2 + $0x528] sm:$0xff]
  %v3054 = vld [vmem:[#allocation2 + $0x530] sm:$0xff]
  %v3055 = vld [vmem:[#allocation2 + $0x538] sm:$0xff]
  %v3056 = vld [vmem:[#allocation2 + $0x540] sm:$0xff]
  %v3057 = vld [vmem:[#allocation2 + $0x548] sm:$0xff]
  %v3058 = vld [vmem:[#allocation2 + $0x550] sm:$0xff]
  %vm3059 = vcmask 588800
  %v3061 = vsel %vm3059, %v2887, 0
  %3063 = vmatprep.subr.mxu0 %v2889
  %3064 = vmatpush1.msra.mxu0 %v2888
  %3065 = vmatprep.subr.mxu0 %v2908
  %3066 = vmatpush1.msra.mxu0 %v2907
  %3067 = vmatprep.subr.mxu0 %v2927
  %3068 = vmatpush1.msra.mxu0 %v2926
  %3069 = vmatprep.subr.mxu0 %v2946
  %3070 = vmatpush1.msra.mxu0 %v2945
  %3071 = vmatprep.subr.mxu0 %v2965
  %3072 = vmatpush1.msra.mxu0 %v2964
  %3073 = vmatprep.subr.mxu0 %v2984
  %3074 = vmatpush1.msra.mxu0 %v2983
  %3075 = vmatprep.subr.mxu0 %v3003
  %3076 = vmatpush1.msra.mxu0 %v3002
  %3077 = vmatprep.subr.mxu0 %v3022
  %3078 = vmatpush1.msra.mxu0 %v3021
  %3079 = vmatprep.subr.mxu0 %v3041
  %3080 = vmatpush1.msra.mxu0 %v3040
  %3081 = vmatprep.subr.mxu0 0.0
  %3082 = vmatpush1.msra.mxu0 0.0
  %3083 = vmatprep.subr.mxu0 0.0
  %3084 = vmatpush1.msra.mxu0 0.0
  %3085 = vmatprep.subr.mxu0 0.0
  %3086 = vmatpush1.msra.mxu0 0.0
  %3087 = vmatprep.subr.mxu0 0.0
  %3088 = vmatpush1.msra.mxu0 0.0
  %3089 = vmatprep.subr.mxu0 0.0
  %3090 = vmatpush1.msra.mxu0 0.0
  %3091 = vmatprep.subr.mxu0 0.0
  %3092 = vmatpush1.msra.mxu0 0.0
  %3093 = vmatprep.subr.mxu0 0.0
  %3094 = vmatpush1.msra.mxu0 0.0
  %3095 = vmatprep.subr.mxu0 0.0
  %3096 = vmatpush1.msra.mxu0 0.0
  %3097 = vmatprep.subr.mxu0 0.0
  %3098 = vmatpush1.msra.mxu0 0.0
  %3099 = vmatprep.subr.mxu0 0.0
  %3100 = vmatpush1.msra.mxu0 0.0
  %3101 = vmatprep.subr.mxu0 0.0
  %3102 = vmatpush1.msra.mxu0 0.0
  %3103 = vmatprep.subr.mxu0 0.0
  %3104 = vmatpush1.msra.mxu0 0.0
  %3105 = vmatprep.subr.mxu0 0.0
  %3106 = vmatpush1.msra.mxu0 0.0
  %3107 = vmatprep.subr.mxu0 0.0
  %3108 = vmatpush1.msra.mxu0 0.0
  %3109 = vmatprep.subr.mxu0 0.0
  %3110 = vmatpush1.msra.mxu0 0.0
  %3111 = vmatprep.subr.mxu0 0.0
  %3112 = vmatpush1.msra.mxu0 0.0
  %3113 = vmatprep.subr.mxu0 0.0
  %3114 = vmatpush1.msra.mxu0 0.0
  %3115 = vmatprep.subr.mxu0 0.0
  %3116 = vmatpush1.msra.mxu0 0.0
  %3117 = vmatprep.subr.mxu0 0.0
  %3118 = vmatpush1.msra.mxu0 0.0
  %3119 = vmatprep.subr.mxu0 0.0
  %3120 = vmatpush1.msra.mxu0 0.0
  %3121 = vmatprep.subr.mxu0 0.0
  %3122 = vmatpush1.msra.mxu0 0.0
  %3123 = vmatprep.subr.mxu0 0.0
  %3124 = vmatpush1.msra.mxu0 0.0
  %3125 = vmatprep.subr.mxu0 0.0
  %3126 = vmatpush1.msra.mxu0 0.0
  %3127 = vmatprep.mubr.f32.mxu0 0.0
  %3128 = vmatmul.mubr.f32.gmra.mrb[0].mxu0 %v3061
  %v3129 = vpop.f32.mrb[0].mxu0
  %v3130 = vadd.f32 0.0, %v3129
  %v3131 = vpop.f32.mrb[0].mxu0
  %v3132 = vadd.f32 0.0, %v3131
  %3133 = vdwg.mxu0
  %3134 = vmatprep.subr.mxu0 %v2891
  %3135 = vmatpush1.msra.mxu0 %v2890
  %3136 = vmatprep.subr.mxu0 %v2910
  %3137 = vmatpush1.msra.mxu0 %v2909
  %3138 = vmatprep.subr.mxu0 %v2929
  %3139 = vmatpush1.msra.mxu0 %v2928
  %3140 = vmatprep.subr.mxu0 %v2948
  %3141 = vmatpush1.msra.mxu0 %v2947
  %3142 = vmatprep.subr.mxu0 %v2967
  %3143 = vmatpush1.msra.mxu0 %v2966
  %3144 = vmatprep.subr.mxu0 %v2986
  %3145 = vmatpush1.msra.mxu0 %v2985
  %3146 = vmatprep.subr.mxu0 %v3005
  %3147 = vmatpush1.msra.mxu0 %v3004
  %3148 = vmatprep.subr.mxu0 %v3024
  %3149 = vmatpush1.msra.mxu0 %v3023
  %3150 = vmatprep.subr.mxu0 %v3043
  %3151 = vmatpush1.msra.mxu0 %v3042
  %3152 = vmatprep.subr.mxu0 0.0
  %3153 = vmatpush1.msra.mxu0 0.0
  %3154 = vmatprep.subr.mxu0 0.0
  %3155 = vmatpush1.msra.mxu0 0.0
  %3156 = vmatprep.subr.mxu0 0.0
  %3157 = vmatpush1.msra.mxu0 0.0
  %3158 = vmatprep.subr.mxu0 0.0
  %3159 = vmatpush1.msra.mxu0 0.0
  %3160 = vmatprep.subr.mxu0 0.0
  %3161 = vmatpush1.msra.mxu0 0.0
  %3162 = vmatprep.subr.mxu0 0.0
  %3163 = vmatpush1.msra.mxu0 0.0
  %3164 = vmatprep.subr.mxu0 0.0
  %3165 = vmatpush1.msra.mxu0 0.0
  %3166 = vmatprep.subr.mxu0 0.0
  %3167 = vmatpush1.msra.mxu0 0.0
  %3168 = vmatprep.subr.mxu0 0.0
  %3169 = vmatpush1.msra.mxu0 0.0
  %3170 = vmatprep.subr.mxu0 0.0
  %3171 = vmatpush1.msra.mxu0 0.0
  %3172 = vmatprep.subr.mxu0 0.0
  %3173 = vmatpush1.msra.mxu0 0.0
  %3174 = vmatprep.subr.mxu0 0.0
  %3175 = vmatpush1.msra.mxu0 0.0
  %3176 = vmatprep.subr.mxu0 0.0
  %3177 = vmatpush1.msra.mxu0 0.0
  %3178 = vmatprep.subr.mxu0 0.0
  %3179 = vmatpush1.msra.mxu0 0.0
  %3180 = vmatprep.subr.mxu0 0.0
  %3181 = vmatpush1.msra.mxu0 0.0
  %3182 = vmatprep.subr.mxu0 0.0
  %3183 = vmatpush1.msra.mxu0 0.0
  %3184 = vmatprep.subr.mxu0 0.0
  %3185 = vmatpush1.msra.mxu0 0.0
  %3186 = vmatprep.subr.mxu0 0.0
  %3187 = vmatpush1.msra.mxu0 0.0
  %3188 = vmatprep.subr.mxu0 0.0
  %3189 = vmatpush1.msra.mxu0 0.0
  %3190 = vmatprep.subr.mxu0 0.0
  %3191 = vmatpush1.msra.mxu0 0.0
  %3192 = vmatprep.subr.mxu0 0.0
  %3193 = vmatpush1.msra.mxu0 0.0
  %3194 = vmatprep.subr.mxu0 0.0
  %3195 = vmatpush1.msra.mxu0 0.0
  %3196 = vmatprep.subr.mxu0 0.0
  %3197 = vmatpush1.msra.mxu0 0.0
  %3198 = vmatprep.mubr.f32.mxu0 0.0
  %3199 = vmatmul.mubr.f32.gmra.mrb[0].mxu0 %v3061
  %v3200 = vpop.f32.mrb[0].mxu0
  %v3201 = vadd.f32 0.0, %v3200
  %v3202 = vpop.f32.mrb[0].mxu0
  %v3203 = vadd.f32 0.0, %v3202
  %3204 = vdwg.mxu0
  %3205 = vmatprep.subr.mxu0 %v2893
  %3206 = vmatpush1.msra.mxu0 %v2892
  %3207 = vmatprep.subr.mxu0 %v2912
  %3208 = vmatpush1.msra.mxu0 %v2911
  %3209 = vmatprep.subr.mxu0 %v2931
  %3210 = vmatpush1.msra.mxu0 %v2930
  %3211 = vmatprep.subr.mxu0 %v2950
  %3212 = vmatpush1.msra.mxu0 %v2949
  %3213 = vmatprep.subr.mxu0 %v2969
  %3214 = vmatpush1.msra.mxu0 %v2968
  %3215 = vmatprep.subr.mxu0 %v2988
  %3216 = vmatpush1.msra.mxu0 %v2987
  %3217 = vmatprep.subr.mxu0 %v3007
  %3218 = vmatpush1.msra.mxu0 %v3006
  %3219 = vmatprep.subr.mxu0 %v3026
  %3220 = vmatpush1.msra.mxu0 %v3025
  %3221 = vmatprep.subr.mxu0 %v3045
  %3222 = vmatpush1.msra.mxu0 %v3044
  %3223 = vmatprep.subr.mxu0 0.0
  %3224 = vmatpush1.msra.mxu0 0.0
  %3225 = vmatprep.subr.mxu0 0.0
  %3226 = vmatpush1.msra.mxu0 0.0
  %3227 = vmatprep.subr.mxu0 0.0
  %3228 = vmatpush1.msra.mxu0 0.0
  %3229 = vmatprep.subr.mxu0 0.0
  %3230 = vmatpush1.msra.mxu0 0.0
  %3231 = vmatprep.subr.mxu0 0.0
  %3232 = vmatpush1.msra.mxu0 0.0
  %3233 = vmatprep.subr.mxu0 0.0
  %3234 = vmatpush1.msra.mxu0 0.0
  %3235 = vmatprep.subr.mxu0 0.0
  %3236 = vmatpush1.msra.mxu0 0.0
  %3237 = vmatprep.subr.mxu0 0.0
  %3238 = vmatpush1.msra.mxu0 0.0
  %3239 = vmatprep.subr.mxu0 0.0
  %3240 = vmatpush1.msra.mxu0 0.0
  %3241 = vmatprep.subr.mxu0 0.0
  %3242 = vmatpush1.msra.mxu0 0.0
  %3243 = vmatprep.subr.mxu0 0.0
  %3244 = vmatpush1.msra.mxu0 0.0
  %3245 = vmatprep.subr.mxu0 0.0
  %3246 = vmatpush1.msra.mxu0 0.0
  %3247 = vmatprep.subr.mxu0 0.0
  %3248 = vmatpush1.msra.mxu0 0.0
  %3249 = vmatprep.subr.mxu0 0.0
  %3250 = vmatpush1.msra.mxu0 0.0
  %3251 = vmatprep.subr.mxu0 0.0
  %3252 = vmatpush1.msra.mxu0 0.0
  %3253 = vmatprep.subr.mxu0 0.0
  %3254 = vmatpush1.msra.mxu0 0.0
  %3255 = vmatprep.subr.mxu0 0.0
  %3256 = vmatpush1.msra.mxu0 0.0
  %3257 = vmatprep.subr.mxu0 0.0
  %3258 = vmatpush1.msra.mxu0 0.0
  %3259 = vmatprep.subr.mxu0 0.0
  %3260 = vmatpush1.msra.mxu0 0.0
  %3261 = vmatprep.subr.mxu0 0.0
  %3262 = vmatpush1.msra.mxu0 0.0
  %3263 = vmatprep.subr.mxu0 0.0
  %3264 = vmatpush1.msra.mxu0 0.0
  %3265 = vmatprep.subr.mxu0 0.0
  %3266 = vmatpush1.msra.mxu0 0.0
  %3267 = vmatprep.subr.mxu0 0.0
  %3268 = vmatpush1.msra.mxu0 0.0
  %3269 = vmatprep.mubr.f32.mxu0 0.0
  %3270 = vmatmul.mubr.f32.gmra.mrb[0].mxu0 %v3061
  %v3271 = vpop.f32.mrb[0].mxu0
  %v3272 = vadd.f32 0.0, %v3271
  %v3273 = vpop.f32.mrb[0].mxu0
  %v3274 = vadd.f32 0.0, %v3273
  %3275 = vdwg.mxu0
  %3276 = vmatprep.subr.mxu0 %v2895
  %3277 = vmatpush1.msra.mxu0 %v2894
  %3278 = vmatprep.subr.mxu0 %v2914
  %3279 = vmatpush1.msra.mxu0 %v2913
  %3280 = vmatprep.subr.mxu0 %v2933
  %3281 = vmatpush1.msra.mxu0 %v2932
  %3282 = vmatprep.subr.mxu0 %v2952
  %3283 = vmatpush1.msra.mxu0 %v2951
  %3284 = vmatprep.subr.mxu0 %v2971
  %3285 = vmatpush1.msra.mxu0 %v2970
  %3286 = vmatprep.subr.mxu0 %v2990
  %3287 = vmatpush1.msra.mxu0 %v2989
  %3288 = vmatprep.subr.mxu0 %v3009
  %3289 = vmatpush1.msra.mxu0 %v3008
  %3290 = vmatprep.subr.mxu0 %v3028
  %3291 = vmatpush1.msra.mxu0 %v3027
  %3292 = vmatprep.subr.mxu0 %v3047
  %3293 = vmatpush1.msra.mxu0 %v3046
  %3294 = vmatprep.subr.mxu0 0.0
  %3295 = vmatpush1.msra.mxu0 0.0
  %3296 = vmatprep.subr.mxu0 0.0
  %3297 = vmatpush1.msra.mxu0 0.0
  %3298 = vmatprep.subr.mxu0 0.0
  %3299 = vmatpush1.msra.mxu0 0.0
  %3300 = vmatprep.subr.mxu0 0.0
  %3301 = vmatpush1.msra.mxu0 0.0
  %3302 = vmatprep.subr.mxu0 0.0
  %3303 = vmatpush1.msra.mxu0 0.0
  %3304 = vmatprep.subr.mxu0 0.0
  %3305 = vmatpush1.msra.mxu0 0.0
  %3306 = vmatprep.subr.mxu0 0.0
  %3307 = vmatpush1.msra.mxu0 0.0
  %3308 = vmatprep.subr.mxu0 0.0
  %3309 = vmatpush1.msra.mxu0 0.0
  %3310 = vmatprep.subr.mxu0 0.0
  %3311 = vmatpush1.msra.mxu0 0.0
  %3312 = vmatprep.subr.mxu0 0.0
  %3313 = vmatpush1.msra.mxu0 0.0
  %3314 = vmatprep.subr.mxu0 0.0
  %3315 = vmatpush1.msra.mxu0 0.0
  %3316 = vmatprep.subr.mxu0 0.0
  %3317 = vmatpush1.msra.mxu0 0.0
  %3318 = vmatprep.subr.mxu0 0.0
  %3319 = vmatpush1.msra.mxu0 0.0
  %3320 = vmatprep.subr.mxu0 0.0
  %3321 = vmatpush1.msra.mxu0 0.0
  %3322 = vmatprep.subr.mxu0 0.0
  %3323 = vmatpush1.msra.mxu0 0.0
  %3324 = vmatprep.subr.mxu0 0.0
  %3325 = vmatpush1.msra.mxu0 0.0
  %3326 = vmatprep.subr.mxu0 0.0
  %3327 = vmatpush1.msra.mxu0 0.0
  %3328 = vmatprep.subr.mxu0 0.0
  %3329 = vmatpush1.msra.mxu0 0.0
  %3330 = vmatprep.subr.mxu0 0.0
  %3331 = vmatpush1.msra.mxu0 0.0
  %3332 = vmatprep.subr.mxu0 0.0
  %3333 = vmatpush1.msra.mxu0 0.0
  %3334 = vmatprep.subr.mxu0 0.0
  %3335 = vmatpush1.msra.mxu0 0.0
  %3336 = vmatprep.subr.mxu0 0.0
  %3337 = vmatpush1.msra.mxu0 0.0
  %3338 = vmatprep.subr.mxu0 0.0
  %3339 = vmatpush1.msra.mxu0 0.0
  %3340 = vmatprep.mubr.f32.mxu0 0.0
  %3341 = vmatmul.mubr.f32.gmra.mrb[0].mxu0 %v3061
  %v3342 = vpop.f32.mrb[0].mxu0
  %v3343 = vadd.f32 0.0, %v3342
  %v3344 = vpop.f32.mrb[0].mxu0
  %v3345 = vadd.f32 0.0, %v3344
  %3346 = vdwg.mxu0
  %3347 = vmatprep.subr.mxu0 %v2897
  %3348 = vmatpush1.msra.mxu0 %v2896
  %3349 = vmatprep.subr.mxu0 %v2916
  %3350 = vmatpush1.msra.mxu0 %v2915
  %3351 = vmatprep.subr.mxu0 %v2935
  %3352 = vmatpush1.msra.mxu0 %v2934
  %3353 = vmatprep.subr.mxu0 %v2954
  %3354 = vmatpush1.msra.mxu0 %v2953
  %3355 = vmatprep.subr.mxu0 %v2973
  %3356 = vmatpush1.msra.mxu0 %v2972
  %3357 = vmatprep.subr.mxu0 %v2992
  %3358 = vmatpush1.msra.mxu0 %v2991
  %3359 = vmatprep.subr.mxu0 %v3011
  %3360 = vmatpush1.msra.mxu0 %v3010
  %3361 = vmatprep.subr.mxu0 %v3030
  %3362 = vmatpush1.msra.mxu0 %v3029
  %3363 = vmatprep.subr.mxu0 %v3049
  %3364 = vmatpush1.msra.mxu0 %v3048
  %3365 = vmatprep.subr.mxu0 0.0
  %3366 = vmatpush1.msra.mxu0 0.0
  %3367 = vmatprep.subr.mxu0 0.0
  %3368 = vmatpush1.msra.mxu0 0.0
  %3369 = vmatprep.subr.mxu0 0.0
  %3370 = vmatpush1.msra.mxu0 0.0
  %3371 = vmatprep.subr.mxu0 0.0
  %3372 = vmatpush1.msra.mxu0 0.0
  %3373 = vmatprep.subr.mxu0 0.0
  %3374 = vmatpush1.msra.mxu0 0.0
  %3375 = vmatprep.subr.mxu0 0.0
  %3376 = vmatpush1.msra.mxu0 0.0
  %3377 = vmatprep.subr.mxu0 0.0
  %3378 = vmatpush1.msra.mxu0 0.0
  %3379 = vmatprep.subr.mxu0 0.0
  %3380 = vmatpush1.msra.mxu0 0.0
  %3381 = vmatprep.subr.mxu0 0.0
  %3382 = vmatpush1.msra.mxu0 0.0
  %3383 = vmatprep.subr.mxu0 0.0
  %3384 = vmatpush1.msra.mxu0 0.0
  %3385 = vmatprep.subr.mxu0 0.0
  %3386 = vmatpush1.msra.mxu0 0.0
  %3387 = vmatprep.subr.mxu0 0.0
  %3388 = vmatpush1.msra.mxu0 0.0
  %3389 = vmatprep.subr.mxu0 0.0
  %3390 = vmatpush1.msra.mxu0 0.0
  %3391 = vmatprep.subr.mxu0 0.0
  %3392 = vmatpush1.msra.mxu0 0.0
  %3393 = vmatprep.subr.mxu0 0.0
  %3394 = vmatpush1.msra.mxu0 0.0
  %3395 = vmatprep.subr.mxu0 0.0
  %3396 = vmatpush1.msra.mxu0 0.0
  %3397 = vmatprep.subr.mxu0 0.0
  %3398 = vmatpush1.msra.mxu0 0.0
  %3399 = vmatprep.subr.mxu0 0.0
  %3400 = vmatpush1.msra.mxu0 0.0
  %3401 = vmatprep.subr.mxu0 0.0
  %3402 = vmatpush1.msra.mxu0 0.0
  %3403 = vmatprep.subr.mxu0 0.0
  %3404 = vmatpush1.msra.mxu0 0.0
  %3405 = vmatprep.subr.mxu0 0.0
  %3406 = vmatpush1.msra.mxu0 0.0
  %3407 = vmatprep.subr.mxu0 0.0
  %3408 = vmatpush1.msra.mxu0 0.0
  %3409 = vmatprep.subr.mxu0 0.0
  %3410 = vmatpush1.msra.mxu0 0.0
  %3411 = vmatprep.mubr.f32.mxu0 0.0
  %3412 = vmatmul.mubr.f32.gmra.mrb[0].mxu0 %v3061
  %v3413 = vpop.f32.mrb[0].mxu0
  %v3414 = vadd.f32 0.0, %v3413
  %v3415 = vpop.f32.mrb[0].mxu0
  %v3416 = vadd.f32 0.0, %v3415
  %3417 = vdwg.mxu0
  %3418 = vmatprep.subr.mxu0 %v2899
  %3419 = vmatpush1.msra.mxu0 %v2898
  %3420 = vmatprep.subr.mxu0 %v2918
  %3421 = vmatpush1.msra.mxu0 %v2917
  %3422 = vmatprep.subr.mxu0 %v2937
  %3423 = vmatpush1.msra.mxu0 %v2936
  %3424 = vmatprep.subr.mxu0 %v2956
  %3425 = vmatpush1.msra.mxu0 %v2955
  %3426 = vmatprep.subr.mxu0 %v2975
  %3427 = vmatpush1.msra.mxu0 %v2974
  %3428 = vmatprep.subr.mxu0 %v2994
  %3429 = vmatpush1.msra.mxu0 %v2993
  %3430 = vmatprep.subr.mxu0 %v3013
  %3431 = vmatpush1.msra.mxu0 %v3012
  %3432 = vmatprep.subr.mxu0 %v3032
  %3433 = vmatpush1.msra.mxu0 %v3031
  %3434 = vmatprep.subr.mxu0 %v3051
  %3435 = vmatpush1.msra.mxu0 %v3050
  %3436 = vmatprep.subr.mxu0 0.0
  %3437 = vmatpush1.msra.mxu0 0.0
  %3438 = vmatprep.subr.mxu0 0.0
  %3439 = vmatpush1.msra.mxu0 0.0
  %3440 = vmatprep.subr.mxu0 0.0
  %3441 = vmatpush1.msra.mxu0 0.0
  %3442 = vmatprep.subr.mxu0 0.0
  %3443 = vmatpush1.msra.mxu0 0.0
  %3444 = vmatprep.subr.mxu0 0.0
  %3445 = vmatpush1.msra.mxu0 0.0
  %3446 = vmatprep.subr.mxu0 0.0
  %3447 = vmatpush1.msra.mxu0 0.0
  %3448 = vmatprep.subr.mxu0 0.0
  %3449 = vmatpush1.msra.mxu0 0.0
  %3450 = vmatprep.subr.mxu0 0.0
  %3451 = vmatpush1.msra.mxu0 0.0
  %3452 = vmatprep.subr.mxu0 0.0
  %3453 = vmatpush1.msra.mxu0 0.0
  %3454 = vmatprep.subr.mxu0 0.0
  %3455 = vmatpush1.msra.mxu0 0.0
  %3456 = vmatprep.subr.mxu0 0.0
  %3457 = vmatpush1.msra.mxu0 0.0
  %3458 = vmatprep.subr.mxu0 0.0
  %3459 = vmatpush1.msra.mxu0 0.0
  %3460 = vmatprep.subr.mxu0 0.0
  %3461 = vmatpush1.msra.mxu0 0.0
  %3462 = vmatprep.subr.mxu0 0.0
  %3463 = vmatpush1.msra.mxu0 0.0
  %3464 = vmatprep.subr.mxu0 0.0
  %3465 = vmatpush1.msra.mxu0 0.0
  %3466 = vmatprep.subr.mxu0 0.0
  %3467 = vmatpush1.msra.mxu0 0.0
  %3468 = vmatprep.subr.mxu0 0.0
  %3469 = vmatpush1.msra.mxu0 0.0
  %3470 = vmatprep.subr.mxu0 0.0
  %3471 = vmatpush1.msra.mxu0 0.0
  %3472 = vmatprep.subr.mxu0 0.0
  %3473 = vmatpush1.msra.mxu0 0.0
  %3474 = vmatprep.subr.mxu0 0.0
  %3475 = vmatpush1.msra.mxu0 0.0
  %3476 = vmatprep.subr.mxu0 0.0
  %3477 = vmatpush1.msra.mxu0 0.0
  %3478 = vmatprep.subr.mxu0 0.0
  %3479 = vmatpush1.msra.mxu0 0.0
  %3480 = vmatprep.subr.mxu0 0.0
  %3481 = vmatpush1.msra.mxu0 0.0
  %3482 = vmatprep.mubr.f32.mxu0 0.0
  %3483 = vmatmul.mubr.f32.gmra.mrb[0].mxu0 %v3061
  %v3484 = vpop.f32.mrb[0].mxu0
  %v3485 = vadd.f32 0.0, %v3484
  %v3486 = vpop.f32.mrb[0].mxu0
  %v3487 = vadd.f32 0.0, %v3486
  %3488 = vdwg.mxu0
  %3489 = vmatprep.subr.mxu0 %v2901
  %3490 = vmatpush1.msra.mxu0 %v2900
  %3491 = vmatprep.subr.mxu0 %v2920
  %3492 = vmatpush1.msra.mxu0 %v2919
  %3493 = vmatprep.subr.mxu0 %v2939
  %3494 = vmatpush1.msra.mxu0 %v2938
  %3495 = vmatprep.subr.mxu0 %v2958
  %3496 = vmatpush1.msra.mxu0 %v2957
  %3497 = vmatprep.subr.mxu0 %v2977
  %3498 = vmatpush1.msra.mxu0 %v2976
  %3499 = vmatprep.subr.mxu0 %v2996
  %3500 = vmatpush1.msra.mxu0 %v2995
  %3501 = vmatprep.subr.mxu0 %v3015
  %3502 = vmatpush1.msra.mxu0 %v3014
  %3503 = vmatprep.subr.mxu0 %v3034
  %3504 = vmatpush1.msra.mxu0 %v3033
  %3505 = vmatprep.subr.mxu0 %v3053
  %3506 = vmatpush1.msra.mxu0 %v3052
  %3507 = vmatprep.subr.mxu0 0.0
  %3508 = vmatpush1.msra.mxu0 0.0
  %3509 = vmatprep.subr.mxu0 0.0
  %3510 = vmatpush1.msra.mxu0 0.0
  %3511 = vmatprep.subr.mxu0 0.0
  %3512 = vmatpush1.msra.mxu0 0.0
  %3513 = vmatprep.subr.mxu0 0.0
  %3514 = vmatpush1.msra.mxu0 0.0
  %3515 = vmatprep.subr.mxu0 0.0
  %3516 = vmatpush1.msra.mxu0 0.0
  %3517 = vmatprep.subr.mxu0 0.0
  %3518 = vmatpush1.msra.mxu0 0.0
  %3519 = vmatprep.subr.mxu0 0.0
  %3520 = vmatpush1.msra.mxu0 0.0
  %3521 = vmatprep.subr.mxu0 0.0
  %3522 = vmatpush1.msra.mxu0 0.0
  %3523 = vmatprep.subr.mxu0 0.0
  %3524 = vmatpush1.msra.mxu0 0.0
  %3525 = vmatprep.subr.mxu0 0.0
  %3526 = vmatpush1.msra.mxu0 0.0
  %3527 = vmatprep.subr.mxu0 0.0
  %3528 = vmatpush1.msra.mxu0 0.0
  %3529 = vmatprep.subr.mxu0 0.0
  %3530 = vmatpush1.msra.mxu0 0.0
  %3531 = vmatprep.subr.mxu0 0.0
  %3532 = vmatpush1.msra.mxu0 0.0
  %3533 = vmatprep.subr.mxu0 0.0
  %3534 = vmatpush1.msra.mxu0 0.0
  %3535 = vmatprep.subr.mxu0 0.0
  %3536 = vmatpush1.msra.mxu0 0.0
  %3537 = vmatprep.subr.mxu0 0.0
  %3538 = vmatpush1.msra.mxu0 0.0
  %3539 = vmatprep.subr.mxu0 0.0
  %3540 = vmatpush1.msra.mxu0 0.0
  %3541 = vmatprep.subr.mxu0 0.0
  %3542 = vmatpush1.msra.mxu0 0.0
  %3543 = vmatprep.subr.mxu0 0.0
  %3544 = vmatpush1.msra.mxu0 0.0
  %3545 = vmatprep.subr.mxu0 0.0
  %3546 = vmatpush1.msra.mxu0 0.0
  %3547 = vmatprep.subr.mxu0 0.0
  %3548 = vmatpush1.msra.mxu0 0.0
  %3549 = vmatprep.subr.mxu0 0.0
  %3550 = vmatpush1.msra.mxu0 0.0
  %3551 = vmatprep.subr.mxu0 0.0
  %3552 = vmatpush1.msra.mxu0 0.0
  %3553 = vmatprep.mubr.f32.mxu0 0.0
  %3554 = vmatmul.mubr.f32.gmra.mrb[0].mxu0 %v3061
  %v3555 = vpop.f32.mrb[0].mxu0
  %v3556 = vadd.f32 0.0, %v3555
  %v3557 = vpop.f32.mrb[0].mxu0
  %v3558 = vadd.f32 0.0, %v3557
  %3559 = vdwg.mxu0
  %3560 = vmatprep.subr.mxu0 %v2903
  %3561 = vmatpush1.msra.mxu0 %v2902
  %3562 = vmatprep.subr.mxu0 %v2922
  %3563 = vmatpush1.msra.mxu0 %v2921
  %3564 = vmatprep.subr.mxu0 %v2941
  %3565 = vmatpush1.msra.mxu0 %v2940
  %3566 = vmatprep.subr.mxu0 %v2960
  %3567 = vmatpush1.msra.mxu0 %v2959
  %3568 = vmatprep.subr.mxu0 %v2979
  %3569 = vmatpush1.msra.mxu0 %v2978
  %3570 = vmatprep.subr.mxu0 %v2998
  %3571 = vmatpush1.msra.mxu0 %v2997
  %3572 = vmatprep.subr.mxu0 %v3017
  %3573 = vmatpush1.msra.mxu0 %v3016
  %3574 = vmatprep.subr.mxu0 %v3036
  %3575 = vmatpush1.msra.mxu0 %v3035
  %3576 = vmatprep.subr.mxu0 %v3055
  %3577 = vmatpush1.msra.mxu0 %v3054
  %3578 = vmatprep.subr.mxu0 0.0
  %3579 = vmatpush1.msra.mxu0 0.0
  %3580 = vmatprep.subr.mxu0 0.0
  %3581 = vmatpush1.msra.mxu0 0.0
  %3582 = vmatprep.subr.mxu0 0.0
  %3583 = vmatpush1.msra.mxu0 0.0
  %3584 = vmatprep.subr.mxu0 0.0
  %3585 = vmatpush1.msra.mxu0 0.0
  %3586 = vmatprep.subr.mxu0 0.0
  %3587 = vmatpush1.msra.mxu0 0.0
  %3588 = vmatprep.subr.mxu0 0.0
  %3589 = vmatpush1.msra.mxu0 0.0
  %3590 = vmatprep.subr.mxu0 0.0
  %3591 = vmatpush1.msra.mxu0 0.0
  %3592 = vmatprep.subr.mxu0 0.0
  %3593 = vmatpush1.msra.mxu0 0.0
  %3594 = vmatprep.subr.mxu0 0.0
  %3595 = vmatpush1.msra.mxu0 0.0
  %3596 = vmatprep.subr.mxu0 0.0
  %3597 = vmatpush1.msra.mxu0 0.0
  %3598 = vmatprep.subr.mxu0 0.0
  %3599 = vmatpush1.msra.mxu0 0.0
  %3600 = vmatprep.subr.mxu0 0.0
  %3601 = vmatpush1.msra.mxu0 0.0
  %3602 = vmatprep.subr.mxu0 0.0
  %3603 = vmatpush1.msra.mxu0 0.0
  %3604 = vmatprep.subr.mxu0 0.0
  %3605 = vmatpush1.msra.mxu0 0.0
  %3606 = vmatprep.subr.mxu0 0.0
  %3607 = vmatpush1.msra.mxu0 0.0
  %3608 = vmatprep.subr.mxu0 0.0
  %3609 = vmatpush1.msra.mxu0 0.0
  %3610 = vmatprep.subr.mxu0 0.0
  %3611 = vmatpush1.msra.mxu0 0.0
  %3612 = vmatprep.subr.mxu0 0.0
  %3613 = vmatpush1.msra.mxu0 0.0
  %3614 = vmatprep.subr.mxu0 0.0
  %3615 = vmatpush1.msra.mxu0 0.0
  %3616 = vmatprep.subr.mxu0 0.0
  %3617 = vmatpush1.msra.mxu0 0.0
  %3618 = vmatprep.subr.mxu0 0.0
  %3619 = vmatpush1.msra.mxu0 0.0
  %3620 = vmatprep.subr.mxu0 0.0
  %3621 = vmatpush1.msra.mxu0 0.0
  %3622 = vmatprep.subr.mxu0 0.0
  %3623 = vmatpush1.msra.mxu0 0.0
  %3624 = vmatprep.mubr.f32.mxu0 0.0
  %3625 = vmatmul.mubr.f32.gmra.mrb[0].mxu0 %v3061
  %v3626 = vpop.f32.mrb[0].mxu0
  %v3627 = vadd.f32 0.0, %v3626
  %v3628 = vpop.f32.mrb[0].mxu0
  %v3629 = vadd.f32 0.0, %v3628
  %3630 = vdwg.mxu0
  %3631 = vmatprep.subr.mxu0 %v2905
  %3632 = vmatpush1.msra.mxu0 %v2904
  %3633 = vmatprep.subr.mxu0 %v2924
  %3634 = vmatpush1.msra.mxu0 %v2923
  %3635 = vmatprep.subr.mxu0 %v2943
  %3636 = vmatpush1.msra.mxu0 %v2942
  %3637 = vmatprep.subr.mxu0 %v2962
  %3638 = vmatpush1.msra.mxu0 %v2961
  %3639 = vmatprep.subr.mxu0 %v2981
  %3640 = vmatpush1.msra.mxu0 %v2980
  %3641 = vmatprep.subr.mxu0 %v3000
  %3642 = vmatpush1.msra.mxu0 %v2999
  %3643 = vmatprep.subr.mxu0 %v3019
  %3644 = vmatpush1.msra.mxu0 %v3018
  %3645 = vmatprep.subr.mxu0 %v3038
  %3646 = vmatpush1.msra.mxu0 %v3037
  %3647 = vmatprep.subr.mxu0 %v3057
  %3648 = vmatpush1.msra.mxu0 %v3056
  %3649 = vmatprep.subr.mxu0 0.0
  %3650 = vmatpush1.msra.mxu0 0.0
  %3651 = vmatprep.subr.mxu0 0.0
  %3652 = vmatpush1.msra.mxu0 0.0
  %3653 = vmatprep.subr.mxu0 0.0
  %3654 = vmatpush1.msra.mxu0 0.0
  %3655 = vmatprep.subr.mxu0 0.0
  %3656 = vmatpush1.msra.mxu0 0.0
  %3657 = vmatprep.subr.mxu0 0.0
  %3658 = vmatpush1.msra.mxu0 0.0
  %3659 = vmatprep.subr.mxu0 0.0
  %3660 = vmatpush1.msra.mxu0 0.0
  %3661 = vmatprep.subr.mxu0 0.0
  %3662 = vmatpush1.msra.mxu0 0.0
  %3663 = vmatprep.subr.mxu0 0.0
  %3664 = vmatpush1.msra.mxu0 0.0
  %3665 = vmatprep.subr.mxu0 0.0
  %3666 = vmatpush1.msra.mxu0 0.0
  %3667 = vmatprep.subr.mxu0 0.0
  %3668 = vmatpush1.msra.mxu0 0.0
  %3669 = vmatprep.subr.mxu0 0.0
  %3670 = vmatpush1.msra.mxu0 0.0
  %3671 = vmatprep.subr.mxu0 0.0
  %3672 = vmatpush1.msra.mxu0 0.0
  %3673 = vmatprep.subr.mxu0 0.0
  %3674 = vmatpush1.msra.mxu0 0.0
  %3675 = vmatprep.subr.mxu0 0.0
  %3676 = vmatpush1.msra.mxu0 0.0
  %3677 = vmatprep.subr.mxu0 0.0
  %3678 = vmatpush1.msra.mxu0 0.0
  %3679 = vmatprep.subr.mxu0 0.0
  %3680 = vmatpush1.msra.mxu0 0.0
  %3681 = vmatprep.subr.mxu0 0.0
  %3682 = vmatpush1.msra.mxu0 0.0
  %3683 = vmatprep.subr.mxu0 0.0
  %3684 = vmatpush1.msra.mxu0 0.0
  %3685 = vmatprep.subr.mxu0 0.0
  %3686 = vmatpush1.msra.mxu0 0.0
  %3687 = vmatprep.subr.mxu0 0.0
  %3688 = vmatpush1.msra.mxu0 0.0
  %3689 = vmatprep.subr.mxu0 0.0
  %3690 = vmatpush1.msra.mxu0 0.0
  %3691 = vmatprep.subr.mxu0 0.0
  %3692 = vmatpush1.msra.mxu0 0.0
  %3693 = vmatprep.subr.mxu0 0.0
  %3694 = vmatpush1.msra.mxu0 0.0
  %3695 = vmatprep.mubr.f32.mxu0 0.0
  %3696 = vmatmul.mubr.f32.gmra.mrb[0].mxu0 %v3061
  %v3697 = vpop.f32.mrb[0].mxu0
  %v3698 = vadd.f32 0.0, %v3697
  %v3699 = vpop.f32.mrb[0].mxu0
  %v3700 = vadd.f32 0.0, %v3699
  %3701 = vdwg.mxu0
  %3702 = vmatprep.subr.mxu0 0.0
  %3703 = vmatpush1.msra.mxu0 %v2906
  %3704 = vmatprep.subr.mxu0 0.0
  %3705 = vmatpush1.msra.mxu0 %v2925
  %3706 = vmatprep.subr.mxu0 0.0
  %3707 = vmatpush1.msra.mxu0 %v2944
  %3708 = vmatprep.subr.mxu0 0.0
  %3709 = vmatpush1.msra.mxu0 %v2963
  %3710 = vmatprep.subr.mxu0 0.0
  %3711 = vmatpush1.msra.mxu0 %v2982
  %3712 = vmatprep.subr.mxu0 0.0
  %3713 = vmatpush1.msra.mxu0 %v3001
  %3714 = vmatprep.subr.mxu0 0.0
  %3715 = vmatpush1.msra.mxu0 %v3020
  %3716 = vmatprep.subr.mxu0 0.0
  %3717 = vmatpush1.msra.mxu0 %v3039
  %3718 = vmatprep.subr.mxu0 0.0
  %3719 = vmatpush1.msra.mxu0 %v3058
  %3720 = vmatprep.subr.mxu0 0.0
  %3721 = vmatpush1.msra.mxu0 0.0
  %3722 = vmatprep.subr.mxu0 0.0
  %3723 = vmatpush1.msra.mxu0 0.0
  %3724 = vmatprep.subr.mxu0 0.0
  %3725 = vmatpush1.msra.mxu0 0.0
  %3726 = vmatprep.subr.mxu0 0.0
  %3727 = vmatpush1.msra.mxu0 0.0
  %3728 = vmatprep.subr.mxu0 0.0
  %3729 = vmatpush1.msra.mxu0 0.0
  %3730 = vmatprep.subr.mxu0 0.0
  %3731 = vmatpush1.msra.mxu0 0.0
  %3732 = vmatprep.subr.mxu0 0.0
  %3733 = vmatpush1.msra.mxu0 0.0
  %3734 = vmatprep.subr.mxu0 0.0
  %3735 = vmatpush1.msra.mxu0 0.0
  %3736 = vmatprep.subr.mxu0 0.0
  %3737 = vmatpush1.msra.mxu0 0.0
  %3738 = vmatprep.subr.mxu0 0.0
  %3739 = vmatpush1.msra.mxu0 0.0
  %3740 = vmatprep.subr.mxu0 0.0
  %3741 = vmatpush1.msra.mxu0 0.0
  %3742 = vmatprep.subr.mxu0 0.0
  %3743 = vmatpush1.msra.mxu0 0.0
  %3744 = vmatprep.subr.mxu0 0.0
  %3745 = vmatpush1.msra.mxu0 0.0
  %3746 = vmatprep.subr.mxu0 0.0
  %3747 = vmatpush1.msra.mxu0 0.0
  %3748 = vmatprep.subr.mxu0 0.0
  %3749 = vmatpush1.msra.mxu0 0.0
  %3750 = vmatprep.subr.mxu0 0.0
  %3751 = vmatpush1.msra.mxu0 0.0
  %3752 = vmatprep.subr.mxu0 0.0
  %3753 = vmatpush1.msra.mxu0 0.0
  %3754 = vmatprep.subr.mxu0 0.0
  %3755 = vmatpush1.msra.mxu0 0.0
  %3756 = vmatprep.subr.mxu0 0.0
  %3757 = vmatpush1.msra.mxu0 0.0
  %3758 = vmatprep.subr.mxu0 0.0
  %3759 = vmatpush1.msra.mxu0 0.0
  %3760 = vmatprep.subr.mxu0 0.0
  %3761 = vmatpush1.msra.mxu0 0.0
  %3762 = vmatprep.subr.mxu0 0.0
  %3763 = vmatpush1.msra.mxu0 0.0
  %3764 = vmatprep.subr.mxu0 0.0
  %3765 = vmatpush1.msra.mxu0 0.0
  %3766 = vmatprep.mubr.f32.mxu0 0.0
  %3767 = vmatmul.mubr.f32.gmra.mrb[0].mxu0 %v3061
  %v3768 = vpop.f32.mrb[0].mxu0
  %v3769 = vadd.f32 0.0, %v3768
  %v3770 = vpop.f32.mrb[0].mxu0
  %3771 = vdwg.mxu0
  %v3772 = vld [vmem:[%s5] sm:$0xf]
  %v3773 = vld [vmem:[#allocation3] sm:$0xff]
  %v3774 = vld [vmem:[#allocation3 + $0x8] sm:$0xff]
  %v3775 = vld [vmem:[#allocation3 + $0x10] sm:$0xff]
  %v3776 = vld [vmem:[#allocation3 + $0x18] sm:$0xff]
  %v3777 = vld [vmem:[#allocation3 + $0x20] sm:$0xff]
  %v3778 = vld [vmem:[#allocation3 + $0x28] sm:$0xff]
  %v3779 = vld [vmem:[#allocation3 + $0x30] sm:$0xff]
  %v3780 = vld [vmem:[#allocation3 + $0x38] sm:$0xff]
  %v3781 = vld [vmem:[#allocation3 + $0x40] sm:$0xff]
  %v3782 = vld [vmem:[#allocation3 + $0x48] sm:$0xff]
  %v3783 = vld [vmem:[#allocation3 + $0x50] sm:$0xff]
  %v3784 = vld [vmem:[#allocation3 + $0x58] sm:$0xff]
  %v3785 = vld [vmem:[#allocation3 + $0x60] sm:$0xff]
  %v3786 = vld [vmem:[#allocation3 + $0x68] sm:$0xff]
  %v3787 = vld [vmem:[#allocation3 + $0x70] sm:$0xff]
  %v3788 = vld [vmem:[#allocation3 + $0x78] sm:$0xff]
  %v3789 = vld [vmem:[#allocation3 + $0x80] sm:$0xff]
  %v3790 = vld [vmem:[#allocation3 + $0x88] sm:$0xff]
  %v3791 = vld [vmem:[#allocation3 + $0x90] sm:$0xff]
  %v3792 = vld [vmem:[#allocation3 + $0x98] sm:$0xff]
  %v3793 = vld [vmem:[#allocation3 + $0xa0] sm:$0xff]
  %v3794 = vld [vmem:[#allocation3 + $0xa8] sm:$0xff]
  %v3795 = vld [vmem:[#allocation3 + $0xb0] sm:$0xff]
  %v3796 = vld [vmem:[#allocation3 + $0xb8] sm:$0xff]
  %v3797 = vld [vmem:[#allocation3 + $0xc0] sm:$0xff]
  %v3798 = vld [vmem:[#allocation3 + $0xc8] sm:$0xff]
  %v3799 = vld [vmem:[#allocation3 + $0xd0] sm:$0xff]
  %v3800 = vld [vmem:[#allocation3 + $0xd8] sm:$0xff]
  %v3801 = vld [vmem:[#allocation3 + $0xe0] sm:$0xff]
  %v3802 = vld [vmem:[#allocation3 + $0xe8] sm:$0xff]
  %v3803 = vld [vmem:[#allocation3 + $0xf0] sm:$0xff]
  %v3804 = vld [vmem:[#allocation3 + $0xf8] sm:$0xff]
  %v3805 = vld [vmem:[#allocation3 + $0x100] sm:$0xff]
  %v3806 = vld [vmem:[#allocation3 + $0x108] sm:$0xff]
  %v3807 = vld [vmem:[#allocation3 + $0x110] sm:$0xff]
  %v3808 = vld [vmem:[#allocation3 + $0x118] sm:$0xff]
  %v3809 = vld [vmem:[#allocation3 + $0x120] sm:$0xff]
  %v3810 = vld [vmem:[#allocation3 + $0x128] sm:$0xff]
  %v3811 = vld [vmem:[#allocation3 + $0x130] sm:$0xff]
  %v3812 = vld [vmem:[#allocation3 + $0x138] sm:$0xff]
  %v3813 = vld [vmem:[#allocation3 + $0x140] sm:$0xff]
  %v3814 = vld [vmem:[#allocation3 + $0x148] sm:$0xff]
  %v3815 = vld [vmem:[#allocation3 + $0x150] sm:$0xff]
  %v3816 = vld [vmem:[#allocation3 + $0x158] sm:$0xff]
  %v3817 = vld [vmem:[#allocation3 + $0x160] sm:$0xff]
  %v3819 = vsel %vm3059, %v3772, 0
  %3821 = vmatprep.subr.mxu0 %v3774
  %3822 = vmatpush1.msra.mxu0 %v3773
  %3823 = vmatprep.subr.mxu0 %v3779
  %3824 = vmatpush1.msra.mxu0 %v3778
  %3825 = vmatprep.subr.mxu0 %v3784
  %3826 = vmatpush1.msra.mxu0 %v3783
  %3827 = vmatprep.subr.mxu0 %v3789
  %3828 = vmatpush1.msra.mxu0 %v3788
  %3829 = vmatprep.subr.mxu0 %v3794
  %3830 = vmatpush1.msra.mxu0 %v3793
  %3831 = vmatprep.subr.mxu0 %v3799
  %3832 = vmatpush1.msra.mxu0 %v3798
  %3833 = vmatprep.subr.mxu0 %v3804
  %3834 = vmatpush1.msra.mxu0 %v3803
  %3835 = vmatprep.subr.mxu0 %v3809
  %3836 = vmatpush1.msra.mxu0 %v3808
  %3837 = vmatprep.subr.mxu0 %v3814
  %3838 = vmatpush1.msra.mxu0 %v3813
  %3839 = vmatprep.subr.mxu0 0.0
  %3840 = vmatpush1.msra.mxu0 0.0
  %3841 = vmatprep.subr.mxu0 0.0
  %3842 = vmatpush1.msra.mxu0 0.0
  %3843 = vmatprep.subr.mxu0 0.0
  %3844 = vmatpush1.msra.mxu0 0.0
  %3845 = vmatprep.subr.mxu0 0.0
  %3846 = vmatpush1.msra.mxu0 0.0
  %3847 = vmatprep.subr.mxu0 0.0
  %3848 = vmatpush1.msra.mxu0 0.0
  %3849 = vmatprep.subr.mxu0 0.0
  %3850 = vmatpush1.msra.mxu0 0.0
  %3851 = vmatprep.subr.mxu0 0.0
  %3852 = vmatpush1.msra.mxu0 0.0
  %3853 = vmatprep.subr.mxu0 0.0
  %3854 = vmatpush1.msra.mxu0 0.0
  %3855 = vmatprep.subr.mxu0 0.0
  %3856 = vmatpush1.msra.mxu0 0.0
  %3857 = vmatprep.subr.mxu0 0.0
  %3858 = vmatpush1.msra.mxu0 0.0
  %3859 = vmatprep.subr.mxu0 0.0
  %3860 = vmatpush1.msra.mxu0 0.0
  %3861 = vmatprep.subr.mxu0 0.0
  %3862 = vmatpush1.msra.mxu0 0.0
  %3863 = vmatprep.subr.mxu0 0.0
  %3864 = vmatpush1.msra.mxu0 0.0
  %3865 = vmatprep.subr.mxu0 0.0
  %3866 = vmatpush1.msra.mxu0 0.0
  %3867 = vmatprep.subr.mxu0 0.0
  %3868 = vmatpush1.msra.mxu0 0.0
  %3869 = vmatprep.subr.mxu0 0.0
  %3870 = vmatpush1.msra.mxu0 0.0
  %3871 = vmatprep.subr.mxu0 0.0
  %3872 = vmatpush1.msra.mxu0 0.0
  %3873 = vmatprep.subr.mxu0 0.0
  %3874 = vmatpush1.msra.mxu0 0.0
  %3875 = vmatprep.subr.mxu0 0.0
  %3876 = vmatpush1.msra.mxu0 0.0
  %3877 = vmatprep.subr.mxu0 0.0
  %3878 = vmatpush1.msra.mxu0 0.0
  %3879 = vmatprep.subr.mxu0 0.0
  %3880 = vmatpush1.msra.mxu0 0.0
  %3881 = vmatprep.subr.mxu0 0.0
  %3882 = vmatpush1.msra.mxu0 0.0
  %3883 = vmatprep.subr.mxu0 0.0
  %3884 = vmatpush1.msra.mxu0 0.0
  %3885 = vmatprep.mubr.f32.mxu0 0.0
  %3886 = vmatmul.mubr.f32.gmra.mrb[0].mxu0 %v3819
  %v3887 = vpop.f32.mrb[0].mxu0
  %v3888 = vadd.f32 0.0, %v3887
  %v3889 = vpop.f32.mrb[0].mxu0
  %v3890 = vadd.f32 0.0, %v3889
  %3891 = vdwg.mxu0
  %3892 = vmatprep.subr.mxu0 %v3776
  %3893 = vmatpush1.msra.mxu0 %v3775
  %3894 = vmatprep.subr.mxu0 %v3781
  %3895 = vmatpush1.msra.mxu0 %v3780
  %3896 = vmatprep.subr.mxu0 %v3786
  %3897 = vmatpush1.msra.mxu0 %v3785
  %3898 = vmatprep.subr.mxu0 %v3791
  %3899 = vmatpush1.msra.mxu0 %v3790
  %3900 = vmatprep.subr.mxu0 %v3796
  %3901 = vmatpush1.msra.mxu0 %v3795
  %3902 = vmatprep.subr.mxu0 %v3801
  %3903 = vmatpush1.msra.mxu0 %v3800
  %3904 = vmatprep.subr.mxu0 %v3806
  %3905 = vmatpush1.msra.mxu0 %v3805
  %3906 = vmatprep.subr.mxu0 %v3811
  %3907 = vmatpush1.msra.mxu0 %v3810
  %3908 = vmatprep.subr.mxu0 %v3816
  %3909 = vmatpush1.msra.mxu0 %v3815
  %3910 = vmatprep.subr.mxu0 0.0
  %3911 = vmatpush1.msra.mxu0 0.0
  %3912 = vmatprep.subr.mxu0 0.0
  %3913 = vmatpush1.msra.mxu0 0.0
  %3914 = vmatprep.subr.mxu0 0.0
  %3915 = vmatpush1.msra.mxu0 0.0
  %3916 = vmatprep.subr.mxu0 0.0
  %3917 = vmatpush1.msra.mxu0 0.0
  %3918 = vmatprep.subr.mxu0 0.0
  %3919 = vmatpush1.msra.mxu0 0.0
  %3920 = vmatprep.subr.mxu0 0.0
  %3921 = vmatpush1.msra.mxu0 0.0
  %3922 = vmatprep.subr.mxu0 0.0
  %3923 = vmatpush1.msra.mxu0 0.0
  %3924 = vmatprep.subr.mxu0 0.0
  %3925 = vmatpush1.msra.mxu0 0.0
  %3926 = vmatprep.subr.mxu0 0.0
  %3927 = vmatpush1.msra.mxu0 0.0
  %3928 = vmatprep.subr.mxu0 0.0
  %3929 = vmatpush1.msra.mxu0 0.0
  %3930 = vmatprep.subr.mxu0 0.0
  %3931 = vmatpush1.msra.mxu0 0.0
  %3932 = vmatprep.subr.mxu0 0.0
  %3933 = vmatpush1.msra.mxu0 0.0
  %3934 = vmatprep.subr.mxu0 0.0
  %3935 = vmatpush1.msra.mxu0 0.0
  %3936 = vmatprep.subr.mxu0 0.0
  %3937 = vmatpush1.msra.mxu0 0.0
  %3938 = vmatprep.subr.mxu0 0.0
  %3939 = vmatpush1.msra.mxu0 0.0
  %3940 = vmatprep.subr.mxu0 0.0
  %3941 = vmatpush1.msra.mxu0 0.0
  %3942 = vmatprep.subr.mxu0 0.0
  %3943 = vmatpush1.msra.mxu0 0.0
  %3944 = vmatprep.subr.mxu0 0.0
  %3945 = vmatpush1.msra.mxu0 0.0
  %3946 = vmatprep.subr.mxu0 0.0
  %3947 = vmatpush1.msra.mxu0 0.0
  %3948 = vmatprep.subr.mxu0 0.0
  %3949 = vmatpush1.msra.mxu0 0.0
  %3950 = vmatprep.subr.mxu0 0.0
  %3951 = vmatpush1.msra.mxu0 0.0
  %3952 = vmatprep.subr.mxu0 0.0
  %3953 = vmatpush1.msra.mxu0 0.0
  %3954 = vmatprep.subr.mxu0 0.0
  %3955 = vmatpush1.msra.mxu0 0.0
  %3956 = vmatprep.mubr.f32.mxu0 0.0
  %3957 = vmatmul.mubr.f32.gmra.mrb[0].mxu0 %v3819
  %v3958 = vpop.f32.mrb[0].mxu0
  %v3959 = vadd.f32 0.0, %v3958
  %v3960 = vpop.f32.mrb[0].mxu0
  %v3961 = vadd.f32 0.0, %v3960
  %3962 = vdwg.mxu0
  %3963 = vmatprep.subr.mxu0 0.0
  %3964 = vmatpush1.msra.mxu0 %v3777
  %3965 = vmatprep.subr.mxu0 0.0
  %3966 = vmatpush1.msra.mxu0 %v3782
  %3967 = vmatprep.subr.mxu0 0.0
  %3968 = vmatpush1.msra.mxu0 %v3787
  %3969 = vmatprep.subr.mxu0 0.0
  %3970 = vmatpush1.msra.mxu0 %v3792
  %3971 = vmatprep.subr.mxu0 0.0
  %3972 = vmatpush1.msra.mxu0 %v3797
  %3973 = vmatprep.subr.mxu0 0.0
  %3974 = vmatpush1.msra.mxu0 %v3802
  %3975 = vmatprep.subr.mxu0 0.0
  %3976 = vmatpush1.msra.mxu0 %v3807
  %3977 = vmatprep.subr.mxu0 0.0
  %3978 = vmatpush1.msra.mxu0 %v3812
  %3979 = vmatprep.subr.mxu0 0.0
  %3980 = vmatpush1.msra.mxu0 %v3817
  %3981 = vmatprep.subr.mxu0 0.0
  %3982 = vmatpush1.msra.mxu0 0.0
  %3983 = vmatprep.subr.mxu0 0.0
  %3984 = vmatpush1.msra.mxu0 0.0
  %3985 = vmatprep.subr.mxu0 0.0
  %3986 = vmatpush1.msra.mxu0 0.0
  %3987 = vmatprep.subr.mxu0 0.0
  %3988 = vmatpush1.msra.mxu0 0.0
  %3989 = vmatprep.subr.mxu0 0.0
  %3990 = vmatpush1.msra.mxu0 0.0
  %3991 = vmatprep.subr.mxu0 0.0
  %3992 = vmatpush1.msra.mxu0 0.0
  %3993 = vmatprep.subr.mxu0 0.0
  %3994 = vmatpush1.msra.mxu0 0.0
  %3995 = vmatprep.subr.mxu0 0.0
  %3996 = vmatpush1.msra.mxu0 0.0
  %3997 = vmatprep.subr.mxu0 0.0
  %3998 = vmatpush1.msra.mxu0 0.0
  %3999 = vmatprep.subr.mxu0 0.0
  %4000 = vmatpush1.msra.mxu0 0.0
  %4001 = vmatprep.subr.mxu0 0.0
  %4002 = vmatpush1.msra.mxu0 0.0
  %4003 = vmatprep.subr.mxu0 0.0
  %4004 = vmatpush1.msra.mxu0 0.0
  %4005 = vmatprep.subr.mxu0 0.0
  %4006 = vmatpush1.msra.mxu0 0.0
  %4007 = vmatprep.subr.mxu0 0.0
  %4008 = vmatpush1.msra.mxu0 0.0
  %4009 = vmatprep.subr.mxu0 0.0
  %4010 = vmatpush1.msra.mxu0 0.0
  %4011 = vmatprep.subr.mxu0 0.0
  %4012 = vmatpush1.msra.mxu0 0.0
  %4013 = vmatprep.subr.mxu0 0.0
  %4014 = vmatpush1.msra.mxu0 0.0
  %4015 = vmatprep.subr.mxu0 0.0
  %4016 = vmatpush1.msra.mxu0 0.0
  %4017 = vmatprep.subr.mxu0 0.0
  %4018 = vmatpush1.msra.mxu0 0.0
  %4019 = vmatprep.subr.mxu0 0.0
  %4020 = vmatpush1.msra.mxu0 0.0
  %4021 = vmatprep.subr.mxu0 0.0
  %4022 = vmatpush1.msra.mxu0 0.0
  %4023 = vmatprep.subr.mxu0 0.0
  %4024 = vmatpush1.msra.mxu0 0.0
  %4025 = vmatprep.subr.mxu0 0.0
  %4026 = vmatpush1.msra.mxu0 0.0
  %4027 = vmatprep.mubr.f32.mxu0 0.0
  %4028 = vmatmul.mubr.f32.gmra.mrb[0].mxu0 %v3819
  %v4029 = vpop.f32.mrb[0].mxu0
  %v4030 = vadd.f32 0.0, %v4029
  %v4031 = vpop.f32.mrb[0].mxu0
  %4032 = vdwg.mxu0
  %v4033 = vld [vmem:[%s10] sm:$0xff]
  %v4034 = vld [vmem:[%s10 + $0x8] sm:$0xff]
  %v4035 = vld [vmem:[%s10 + $0x10] sm:$0x7]
  %v4036 = vld [vmem:[%s6] sm:$0xf]
  %v4037 = vld [vmem:[%s7] sm:$0xf]
  %v4041 = vlaneseq
  %v4042 = vshrl.u32 %v4041, 7
  %v4043 = vsub.s32 0, %v4042
  %v4044 = vrot.slane %v4033, %v4043
  %v4045 = vlaneseq
  %v4046 = vshrl.u32 %v4045, 7
  %v4047 = vsub.s32 1, %v4046
  %v4048 = vrot.slane %v4033, %v4047
  %v4049 = vlaneseq
  %v4050 = vshrl.u32 %v4049, 7
  %v4051 = vsub.s32 2, %v4050
  %v4052 = vrot.slane %v4033, %v4051
  %v4053 = vlaneseq
  %v4054 = vshrl.u32 %v4053, 7
  %v4055 = vsub.s32 3, %v4054
  %v4056 = vrot.slane %v4033, %v4055
  %v4057 = vlaneseq
  %v4058 = vshrl.u32 %v4057, 7
  %v4059 = vsub.s32 4, %v4058
  %v4060 = vrot.slane %v4033, %v4059
  %v4061 = vlaneseq
  %v4062 = vshrl.u32 %v4061, 7
  %v4063 = vsub.s32 5, %v4062
  %v4064 = vrot.slane %v4033, %v4063
  %v4065 = vlaneseq
  %v4066 = vshrl.u32 %v4065, 7
  %v4067 = vsub.s32 6, %v4066
  %v4068 = vrot.slane %v4033, %v4067
  %v4069 = vlaneseq
  %v4070 = vshrl.u32 %v4069, 7
  %v4071 = vsub.s32 7, %v4070
  %v4072 = vrot.slane %v4033, %v4071
  %v4073 = vlaneseq
  %v4074 = vshrl.u32 %v4073, 7
  %v4075 = vsub.s32 0, %v4074
  %v4076 = vrot.slane %v4034, %v4075
  %v4077 = vlaneseq
  %v4078 = vshrl.u32 %v4077, 7
  %v4079 = vsub.s32 1, %v4078
  %v4080 = vrot.slane %v4034, %v4079
  %v4081 = vlaneseq
  %v4082 = vshrl.u32 %v4081, 7
  %v4083 = vsub.s32 2, %v4082
  %v4084 = vrot.slane %v4034, %v4083
  %v4085 = vlaneseq
  %v4086 = vshrl.u32 %v4085, 7
  %v4087 = vsub.s32 3, %v4086
  %v4088 = vrot.slane %v4034, %v4087
  %v4089 = vlaneseq
  %v4090 = vshrl.u32 %v4089, 7
  %v4091 = vsub.s32 4, %v4090
  %v4092 = vrot.slane %v4034, %v4091
  %v4093 = vlaneseq
  %v4094 = vshrl.u32 %v4093, 7
  %v4095 = vsub.s32 5, %v4094
  %v4096 = vrot.slane %v4034, %v4095
  %v4097 = vlaneseq
  %v4098 = vshrl.u32 %v4097, 7
  %v4099 = vsub.s32 6, %v4098
  %v4100 = vrot.slane %v4034, %v4099
  %v4101 = vlaneseq
  %v4102 = vshrl.u32 %v4101, 7
  %v4103 = vsub.s32 7, %v4102
  %v4104 = vrot.slane %v4034, %v4103
  %v4105 = vlaneseq
  %v4106 = vshrl.u32 %v4105, 7
  %v4107 = vsub.s32 0, %v4106
  %v4108 = vrot.slane %v4035, %v4107
  %v4109 = vlaneseq
  %v4110 = vshrl.u32 %v4109, 7
  %v4111 = vsub.s32 1, %v4110
  %v4112 = vrot.slane %v4035, %v4111
  %v4113 = vlaneseq
  %v4114 = vshrl.u32 %v4113, 7
  %v4115 = vsub.s32 2, %v4114
  %v4116 = vrot.slane %v4035, %v4115
  %v4136 = vmul.f32 %v3130, %v4044
  %v4137 = vmul.f32 %v3132, %v4048
  %v4138 = vmul.f32 %v3201, %v4052
  %v4139 = vmul.f32 %v3203, %v4056
  %v4140 = vmul.f32 %v3272, %v4060
  %v4141 = vmul.f32 %v3274, %v4064
  %v4142 = vmul.f32 %v3343, %v4068
  %v4143 = vmul.f32 %v3345, %v4072
  %v4144 = vmul.f32 %v3414, %v4076
  %v4145 = vmul.f32 %v3416, %v4080
  %v4146 = vmul.f32 %v3485, %v4084
  %v4147 = vmul.f32 %v3487, %v4088
  %v4148 = vmul.f32 %v3556, %v4092
  %v4149 = vmul.f32 %v3558, %v4096
  %v4150 = vmul.f32 %v3627, %v4100
  %v4151 = vmul.f32 %v3629, %v4104
  %v4152 = vmul.f32 %v3698, %v4108
  %v4153 = vmul.f32 %v3700, %v4112
  %v4154 = vmul.f32 %v3769, %v4116
  %vm4155 = vcmask 1043456
  %v4156 = vsel %vm4155, %v4136, 0.0
  %v4157 = vsel %vm4155, %v4137, 0.0
  %v4158 = vadd.f32 %v4156, %v4157
  %v4159 = vsel %vm4155, %v4138, 0.0
  %v4160 = vadd.f32 %v4158, %v4159
  %v4161 = vsel %vm4155, %v4139, 0.0
  %v4162 = vadd.f32 %v4160, %v4161
  %v4163 = vsel %vm4155, %v4140, 0.0
  %v4164 = vadd.f32 %v4162, %v4163
  %v4165 = vsel %vm4155, %v4141, 0.0
  %v4166 = vadd.f32 %v4164, %v4165
  %v4167 = vsel %vm4155, %v4142, 0.0
  %v4168 = vadd.f32 %v4166, %v4167
  %v4169 = vsel %vm4155, %v4143, 0.0
  %v4170 = vadd.f32 %v4168, %v4169
  %v4171 = vsel %vm4155, %v4144, 0.0
  %v4172 = vadd.f32 %v4170, %v4171
  %v4173 = vsel %vm4155, %v4145, 0.0
  %v4174 = vadd.f32 %v4172, %v4173
  %v4175 = vsel %vm4155, %v4146, 0.0
  %v4176 = vadd.f32 %v4174, %v4175
  %v4177 = vsel %vm4155, %v4147, 0.0
  %v4178 = vadd.f32 %v4176, %v4177
  %v4179 = vsel %vm4155, %v4148, 0.0
  %v4180 = vadd.f32 %v4178, %v4179
  %v4181 = vsel %vm4155, %v4149, 0.0
  %v4182 = vadd.f32 %v4180, %v4181
  %v4183 = vsel %vm4155, %v4150, 0.0
  %v4184 = vadd.f32 %v4182, %v4183
  %v4185 = vsel %vm4155, %v4151, 0.0
  %v4186 = vadd.f32 %v4184, %v4185
  %v4187 = vsel %vm4155, %v4152, 0.0
  %v4188 = vadd.f32 %v4186, %v4187
  %v4189 = vsel %vm4155, %v4153, 0.0
  %v4190 = vadd.f32 %v4188, %v4189
  %v4191 = vsel %vm4155, %v4154, 0.0
  %v4192 = vadd.f32 %v4190, %v4191
  %4193 = vadd.xlane.f32.xlu0 %v4192
  %v4194 = vpop.xlane.xlu0 %4193
  %v4195 = vrcp.pop 2048.0
  %v4196 = vmul.f32 %v4194, %v4195
  %v4197 = vsub.f32 %v3130, %v4196
  %v4198 = vsub.f32 %v3132, %v4196
  %v4199 = vsub.f32 %v3201, %v4196
  %v4200 = vsub.f32 %v3203, %v4196
  %v4201 = vsub.f32 %v3272, %v4196
  %v4202 = vsub.f32 %v3274, %v4196
  %v4203 = vsub.f32 %v3343, %v4196
  %v4204 = vsub.f32 %v3345, %v4196
  %v4205 = vsub.f32 %v3414, %v4196
  %v4206 = vsub.f32 %v3416, %v4196
  %v4207 = vsub.f32 %v3485, %v4196
  %v4208 = vsub.f32 %v3487, %v4196
  %v4209 = vsub.f32 %v3556, %v4196
  %v4210 = vsub.f32 %v3558, %v4196
  %v4211 = vsub.f32 %v3627, %v4196
  %v4212 = vsub.f32 %v3629, %v4196
  %v4213 = vsub.f32 %v3698, %v4196
  %v4214 = vsub.f32 %v3700, %v4196
  %v4215 = vsub.f32 %v3769, %v4196
  %v4216 = vmul.f32 %v4197, %v4044
  %v4217 = vmul.f32 %v4198, %v4048
  %v4218 = vmul.f32 %v4199, %v4052
  %v4219 = vmul.f32 %v4200, %v4056
  %v4220 = vmul.f32 %v4201, %v4060
  %v4221 = vmul.f32 %v4202, %v4064
  %v4222 = vmul.f32 %v4203, %v4068
  %v4223 = vmul.f32 %v4204, %v4072
  %v4224 = vmul.f32 %v4205, %v4076
  %v4225 = vmul.f32 %v4206, %v4080
  %v4226 = vmul.f32 %v4207, %v4084
  %v4227 = vmul.f32 %v4208, %v4088
  %v4228 = vmul.f32 %v4209, %v4092
  %v4229 = vmul.f32 %v4210, %v4096
  %v4230 = vmul.f32 %v4211, %v4100
  %v4231 = vmul.f32 %v4212, %v4104
  %v4232 = vmul.f32 %v4213, %v4108
  %v4233 = vmul.f32 %v4214, %v4112
  %v4234 = vmul.f32 %v4215, %v4116
  %v4235 = vmul.f32 %v4216, %v4216
  %v4236 = vmul.f32 %v4217, %v4217
  %v4237 = vmul.f32 %v4218, %v4218
  %v4238 = vmul.f32 %v4219, %v4219
  %v4239 = vmul.f32 %v4220, %v4220
  %v4240 = vmul.f32 %v4221, %v4221
  %v4241 = vmul.f32 %v4222, %v4222
  %v4242 = vmul.f32 %v4223, %v4223
  %v4243 = vmul.f32 %v4224, %v4224
  %v4244 = vmul.f32 %v4225, %v4225
  %v4245 = vmul.f32 %v4226, %v4226
  %v4246 = vmul.f32 %v4227, %v4227
  %v4247 = vmul.f32 %v4228, %v4228
  %v4248 = vmul.f32 %v4229, %v4229
  %v4249 = vmul.f32 %v4230, %v4230
  %v4250 = vmul.f32 %v4231, %v4231
  %v4251 = vmul.f32 %v4232, %v4232
  %v4252 = vmul.f32 %v4233, %v4233
  %v4253 = vmul.f32 %v4234, %v4234
  %v4254 = vsel %vm4155, %v4235, 0.0
  %v4255 = vsel %vm4155, %v4236, 0.0
  %v4256 = vadd.f32 %v4254, %v4255
  %v4257 = vsel %vm4155, %v4237, 0.0
  %v4258 = vadd.f32 %v4256, %v4257
  %v4259 = vsel %vm4155, %v4238, 0.0
  %v4260 = vadd.f32 %v4258, %v4259
  %v4261 = vsel %vm4155, %v4239, 0.0
  %v4262 = vadd.f32 %v4260, %v4261
  %v4263 = vsel %vm4155, %v4240, 0.0
  %v4264 = vadd.f32 %v4262, %v4263
  %v4265 = vsel %vm4155, %v4241, 0.0
  %v4266 = vadd.f32 %v4264, %v4265
  %v4267 = vsel %vm4155, %v4242, 0.0
  %v4268 = vadd.f32 %v4266, %v4267
  %v4269 = vsel %vm4155, %v4243, 0.0
  %v4270 = vadd.f32 %v4268, %v4269
  %v4271 = vsel %vm4155, %v4244, 0.0
  %v4272 = vadd.f32 %v4270, %v4271
  %v4273 = vsel %vm4155, %v4245, 0.0
  %v4274 = vadd.f32 %v4272, %v4273
  %v4275 = vsel %vm4155, %v4246, 0.0
  %v4276 = vadd.f32 %v4274, %v4275
  %v4277 = vsel %vm4155, %v4247, 0.0
  %v4278 = vadd.f32 %v4276, %v4277
  %v4279 = vsel %vm4155, %v4248, 0.0
  %v4280 = vadd.f32 %v4278, %v4279
  %v4281 = vsel %vm4155, %v4249, 0.0
  %v4282 = vadd.f32 %v4280, %v4281
  %v4283 = vsel %vm4155, %v4250, 0.0
  %v4284 = vadd.f32 %v4282, %v4283
  %v4285 = vsel %vm4155, %v4251, 0.0
  %v4286 = vadd.f32 %v4284, %v4285
  %v4287 = vsel %vm4155, %v4252, 0.0
  %v4288 = vadd.f32 %v4286, %v4287
  %v4289 = vsel %vm4155, %v4253, 0.0
  %v4290 = vadd.f32 %v4288, %v4289
  %4291 = vadd.xlane.f32.xlu0 %v4290
  %v4292 = vpop.xlane.xlu0 %4291
  %v4293 = vmul.f32 %v4292, %v4195
  %v4294 = vadd.f32 %v4293, 1e-05
  %v4295 = vrsqrt.pop %v4294
  %v4296 = vmul.f32 %v4036, %v4295
  %v4297 = vmul.f32 %v4196, %v4296
  %v4298 = vsub.f32 %v4037, %v4297
  %4300 = vset.pattern.permute.xlu0 0
  %4301 = vperm.xlu0 %4300, %v4296
  %v4302 = vpop.permute.xlu0 %4301
  %v4304 = vmul.f32 %v3130, %v4302
  %v4305 = vmul.f32 %v3132, %v4302
  %v4306 = vmul.f32 %v3201, %v4302
  %v4307 = vmul.f32 %v3203, %v4302
  %v4308 = vmul.f32 %v3272, %v4302
  %v4309 = vmul.f32 %v3274, %v4302
  %v4310 = vmul.f32 %v3343, %v4302
  %v4311 = vmul.f32 %v3345, %v4302
  %v4312 = vmul.f32 %v3414, %v4302
  %v4313 = vmul.f32 %v3416, %v4302
  %v4314 = vmul.f32 %v3485, %v4302
  %v4315 = vmul.f32 %v3487, %v4302
  %v4316 = vmul.f32 %v3556, %v4302
  %v4317 = vmul.f32 %v3558, %v4302
  %v4318 = vmul.f32 %v3627, %v4302
  %v4319 = vmul.f32 %v3629, %v4302
  %v4320 = vmul.f32 %v3698, %v4302
  %v4321 = vmul.f32 %v3700, %v4302
  %v4322 = vmul.f32 %v3769, %v4302
  %4324 = vset.pattern.permute.xlu0 0
  %4325 = vperm.xlu0 %4324, %v4298
  %v4326 = vpop.permute.xlu0 %4325
  %v4328 = vadd.f32 %v4304, %v4326
  %v4329 = vadd.f32 %v4305, %v4326
  %v4330 = vadd.f32 %v4306, %v4326
  %v4331 = vadd.f32 %v4307, %v4326
  %v4332 = vadd.f32 %v4308, %v4326
  %v4333 = vadd.f32 %v4309, %v4326
  %v4334 = vadd.f32 %v4310, %v4326
  %v4335 = vadd.f32 %v4311, %v4326
  %v4336 = vadd.f32 %v4312, %v4326
  %v4337 = vadd.f32 %v4313, %v4326
  %v4338 = vadd.f32 %v4314, %v4326
  %v4339 = vadd.f32 %v4315, %v4326
  %v4340 = vadd.f32 %v4316, %v4326
  %v4341 = vadd.f32 %v4317, %v4326
  %v4342 = vadd.f32 %v4318, %v4326
  %v4343 = vadd.f32 %v4319, %v4326
  %v4344 = vadd.f32 %v4320, %v4326
  %v4345 = vadd.f32 %v4321, %v4326
  %v4346 = vadd.f32 %v4322, %v4326
  %v4347 = vmax.f32 %v4328, 0.0
  %v4348 = vmax.f32 %v4329, 0.0
  %v4349 = vmax.f32 %v4330, 0.0
  %v4350 = vmax.f32 %v4331, 0.0
  %v4351 = vmax.f32 %v4332, 0.0
  %v4352 = vmax.f32 %v4333, 0.0
  %v4353 = vmax.f32 %v4334, 0.0
  %v4354 = vmax.f32 %v4335, 0.0
  %v4355 = vmax.f32 %v4336, 0.0
  %v4356 = vmax.f32 %v4337, 0.0
  %v4357 = vmax.f32 %v4338, 0.0
  %v4358 = vmax.f32 %v4339, 0.0
  %v4359 = vmax.f32 %v4340, 0.0
  %v4360 = vmax.f32 %v4341, 0.0
  %v4361 = vmax.f32 %v4342, 0.0
  %v4362 = vmax.f32 %v4343, 0.0
  %v4363 = vmax.f32 %v4344, 0.0
  %v4364 = vmax.f32 %v4345, 0.0
  %v4365 = vmax.f32 %v4346, 0.0
  %v4384 = vcombine.low %v4347, %v4348
  %v4385 = vcombine.low %v4349, %v4350
  %v4386 = vcombine.low %v4351, %v4352
  %v4387 = vcombine.low %v4353, %v4354
  %v4388 = vcombine.low %v4355, %v4356
  %v4389 = vcombine.low %v4357, %v4358
  %v4390 = vcombine.low %v4359, %v4360
  %v4391 = vcombine.low %v4361, %v4362
  %v4392 = vcombine.low %v4363, %v4364
  %4402 = vst [vmem:[%s12] sm:$0xff] %v4384
  %4403 = vst [vmem:[%s12 + $0x8] sm:$0xff] %v4385
  %4404 = vst [vmem:[%s12 + $0x10] sm:$0xff] %v4386
  %4405 = vst [vmem:[%s12 + $0x18] sm:$0xff] %v4387
  %4406 = vst [vmem:[%s12 + $0x20] sm:$0xff] %v4388
  %4407 = vst [vmem:[%s12 + $0x28] sm:$0xff] %v4389
  %4408 = vst [vmem:[%s12 + $0x30] sm:$0xff] %v4390
  %4409 = vst [vmem:[%s12 + $0x38] sm:$0xff] %v4391
  %4410 = vst [vmem:[%s12 + $0x40] sm:$0xff] %v4392
  %4411 = vst [vmem:[%s12 + $0x48] sm:$0xf] %v4365
  %v4412 = vld [vmem:[%s11] sm:$0x1f]
  %v4413 = vld [vmem:[%s8] sm:$0xf]
  %v4414 = vld [vmem:[%s9] sm:$0xf]
  %v4416 = vlaneseq
  %v4417 = vshrl.u32 %v4416, 7
  %v4418 = vsub.s32 0, %v4417
  %v4419 = vrot.slane %v4412, %v4418
  %v4420 = vlaneseq
  %v4421 = vshrl.u32 %v4420, 7
  %v4422 = vsub.s32 1, %v4421
  %v4423 = vrot.slane %v4412, %v4422
  %v4424 = vlaneseq
  %v4425 = vshrl.u32 %v4424, 7
  %v4426 = vsub.s32 2, %v4425
  %v4427 = vrot.slane %v4412, %v4426
  %v4428 = vlaneseq
  %v4429 = vshrl.u32 %v4428, 7
  %v4430 = vsub.s32 3, %v4429
  %v4431 = vrot.slane %v4412, %v4430
  %v4432 = vlaneseq
  %v4433 = vshrl.u32 %v4432, 7
  %v4434 = vsub.s32 4, %v4433
  %v4435 = vrot.slane %v4412, %v4434
  %v4441 = vmul.f32 %v3888, %v4419
  %v4442 = vmul.f32 %v3890, %v4423
  %v4443 = vmul.f32 %v3959, %v4427
  %v4444 = vmul.f32 %v3961, %v4431
  %v4445 = vmul.f32 %v4030, %v4435
  %v4446 = vsel %vm4155, %v4441, 0.0
  %v4447 = vsel %vm4155, %v4442, 0.0
  %v4448 = vadd.f32 %v4446, %v4447
  %v4449 = vsel %vm4155, %v4443, 0.0
  %v4450 = vadd.f32 %v4448, %v4449
  %v4451 = vsel %vm4155, %v4444, 0.0
  %v4452 = vadd.f32 %v4450, %v4451
  %v4453 = vsel %vm4155, %v4445, 0.0
  %v4454 = vadd.f32 %v4452, %v4453
  %4455 = vadd.xlane.f32.xlu0 %v4454
  %v4456 = vpop.xlane.xlu0 %4455
  %v4457 = vrcp.pop 512.0
  %v4458 = vmul.f32 %v4456, %v4457
  %v4459 = vsub.f32 %v3888, %v4458
  %v4460 = vsub.f32 %v3890, %v4458
  %v4461 = vsub.f32 %v3959, %v4458
  %v4462 = vsub.f32 %v3961, %v4458
  %v4463 = vsub.f32 %v4030, %v4458
  %v4464 = vmul.f32 %v4459, %v4419
  %v4465 = vmul.f32 %v4460, %v4423
  %v4466 = vmul.f32 %v4461, %v4427
  %v4467 = vmul.f32 %v4462, %v4431
  %v4468 = vmul.f32 %v4463, %v4435
  %v4469 = vmul.f32 %v4464, %v4464
  %v4470 = vmul.f32 %v4465, %v4465
  %v4471 = vmul.f32 %v4466, %v4466
  %v4472 = vmul.f32 %v4467, %v4467
  %v4473 = vmul.f32 %v4468, %v4468
  %v4474 = vsel %vm4155, %v4469, 0.0
  %v4475 = vsel %vm4155, %v4470, 0.0
  %v4476 = vadd.f32 %v4474, %v4475
  %v4477 = vsel %vm4155, %v4471, 0.0
  %v4478 = vadd.f32 %v4476, %v4477
  %v4479 = vsel %vm4155, %v4472, 0.0
  %v4480 = vadd.f32 %v4478, %v4479
  %v4481 = vsel %vm4155, %v4473, 0.0
  %v4482 = vadd.f32 %v4480, %v4481
  %4483 = vadd.xlane.f32.xlu0 %v4482
  %v4484 = vpop.xlane.xlu0 %4483
  %v4485 = vmul.f32 %v4484, %v4457
  %v4486 = vadd.f32 %v4485, 1e-05
  %v4487 = vrsqrt.pop %v4486
  %v4488 = vmul.f32 %v4413, %v4487
  %v4489 = vmul.f32 %v4458, %v4488
  %v4490 = vsub.f32 %v4414, %v4489
  %4492 = vset.pattern.permute.xlu0 0
  %4493 = vperm.xlu0 %4492, %v4488
  %v4494 = vpop.permute.xlu0 %4493
  %v4496 = vmul.f32 %v3888, %v4494
  %v4497 = vmul.f32 %v3890, %v4494
  %v4498 = vmul.f32 %v3959, %v4494
  %v4499 = vmul.f32 %v3961, %v4494
  %v4500 = vmul.f32 %v4030, %v4494
  %4502 = vset.pattern.permute.xlu0 0
  %4503 = vperm.xlu0 %4502, %v4490
  %v4504 = vpop.permute.xlu0 %4503
  %v4506 = vadd.f32 %v4496, %v4504
  %v4507 = vadd.f32 %v4497, %v4504
  %v4508 = vadd.f32 %v4498, %v4504
  %v4509 = vadd.f32 %v4499, %v4504
  %v4510 = vadd.f32 %v4500, %v4504
  %v4511 = vmax.f32 %v4506, 0.0
  %v4512 = vmax.f32 %v4507, 0.0
  %v4513 = vmax.f32 %v4508, 0.0
  %v4514 = vmax.f32 %v4509, 0.0
  %v4515 = vmax.f32 %v4510, 0.0
  %v4520 = vcombine.low %v4511, %v4512
  %v4521 = vcombine.low %v4513, %v4514
  %4524 = vst [vmem:[%s13] sm:$0xff] %v4520
  %4525 = vst [vmem:[%s13 + $0x8] sm:$0xff] %v4521
  %4526 = vst [vmem:[%s13 + $0x10] sm:$0xf] %v4515
  // Predicated region
  $region50: #{decode_forward.1} parent=0 // pred_check
    _
  $region51: #{decode_forward.1} parent=0 // pred_check_branch
    %4528 = sbr.rel (0) target = $region53
  $region52: #{decode_forward.1} parent=0 // pred_region
    _
  $region53: #{decode_forward.1} parent=0 // pred_fallthru
    _
  // Predicated region
  $region54: #{decode_forward.1} parent=0 // pred_check
    _
  $region55: #{decode_forward.1} parent=0 // pred_check_branch
    %4530 = sbr.rel (0) target = $region57
  $region56: #{decode_forward.1} parent=0 // pred_region
    _
  $region57: #{decode_forward.1} parent=0 // pred_fallthru
    _
  // Predicated region
  $region58: #{decode_forward.1} parent=0 // pred_check
    _
  $region59: #{decode_forward.1} parent=0 // pred_check_branch
    %4532 = sbr.rel (0) target = $region61
  $region60: #{decode_forward.1} parent=0 // pred_region
    _
  $region61: #{decode_forward.1} parent=0 // pred_fallthru
    _
  // Predicated region
  $region62: #{decode_forward.1} parent=0 // pred_check
    _
  $region63: #{decode_forward.1} parent=0 // pred_check_branch
    %4534 = sbr.rel (0) target = $region65
  $region64: #{decode_forward.1} parent=0 // pred_region
    _
  $region65: #{decode_forward.1} parent=0 // pred_fallthru
    _

</llo_original>
